<compile_context>
chip_gen: v7x
topology: tpu7x:2x2x1
jax: 0.10.0
libtpu: 0.0.40
codegen_flags: <defaults>
</compile_context>

<pallas_src>
import functools
import math

import jax
import jax.numpy as jnp
from jax.experimental import pallas as pl
from jax.experimental.pallas import tpu as pltpu

NUM_LAYERS = 3


def _make_lstm_kernel(num_layers, seq_len, batch, hidden):
    H, T, B, L = hidden, seq_len, batch, num_layers

    def kernel(*refs):
        # refs = [x_flat, (w_ih, w_hh, b) * L, wfc_row, bfc] inputs, [out] output
        x_ref = refs[0]
        wfc_ref = refs[1 + 3 * L]          # (1, H)
        bfc_ref = refs[2 + 3 * L]          # (1, 1)
        out_ref = refs[3 + 3 * L]          # (B, 1)

        # Load weights once; gate columns are pre-permuted to (i, f, o, g).
        wih = [refs[1 + 3 * l][...] for l in range(L)]   # (D_in, 4H)
        whh = [refs[2 + 3 * l][...] for l in range(L)]   # (H, 4H)
        bias = [refs[3 + 3 * l][...] for l in range(L)]  # (1, 4H)

        # Hoisted full-sequence layer-0 input projection + bias: one batched
        # MXU matmul off the serial path, kept as a value (vregs, no scratch).
        zx0 = jnp.dot(x_ref[...], wih[0],
                      preferred_element_type=jnp.float32) + bias[0]   # (T*B, 4H)

        def cell(z, c):
            # Full 128-lane sigmoid slab (g lanes are free filler; avoids a
            # sub-vreg lane slice feeding the EUP), one 32-lane tanh.
            s = jax.nn.sigmoid(z)
            g = jnp.tanh(z[:, 3 * H:4 * H])
            c_new = s[:, H:2 * H] * c + s[:, 0:H] * g
            h_new = s[:, 2 * H:3 * H] * jnp.tanh(c_new)
            return h_new, c_new

        h = [jnp.zeros((B, H), jnp.float32) for _ in range(L)]
        c = [jnp.zeros((B, H), jnp.float32) for _ in range(L)]

        # Wavefront over anti-diagonals: diagonal d advances layer l at time
        # t = d - l. All reads come from the PREVIOUS diagonal's snapshot, so
        # the <=L cell updates within a diagonal are mutually independent and
        # overlap in the MXU/EUP; critical path = T + L - 1 steps.
        for d in range(T + L - 1):
            h_prev = list(h)
            c_prev = list(c)
            for l in range(L):
                t = d - l
                if not (0 <= t < T):
                    continue
                if l == 0:
                    z = zx0[t * B:(t + 1) * B, :] + jnp.dot(
                        h_prev[0], whh[0], preferred_element_type=jnp.float32)
                else:
                    # Per-step input + recurrent projection, all from vregs
                    # (no inter-layer VMEM buffer).
                    z = (jnp.dot(h_prev[l - 1], wih[l],
                                 preferred_element_type=jnp.float32)
                         + jnp.dot(h_prev[l], whh[l],
                                   preferred_element_type=jnp.float32)
                         + bias[l])
                h[l], c[l] = cell(z, c_prev[l])

        # fc on the last timestep of the top layer: broadcast-mul + lane
        # reduce (avoids a 1-column MXU matmul / masked MXU drain).
        out_ref[...] = (
            jnp.sum(h[L - 1] * wfc_ref[...], axis=-1, keepdims=True)
            + bfc_ref[...])

    return kernel


def pack_params_for_kernel(flat_params, hidden):
    """Repack PyTorch-order params for the kernel. Call ONCE at weight-load
    time (not inside the jitted forward).

    - gate columns i,f,g,o  ->  i,f,o,g  (contiguous sigmoid slab)
    - w_fc (H,1) -> row form (1,H) for the VPU reduce
    """
    H = hidden
    perm = jnp.concatenate([
        jnp.arange(0, 2 * H),        # i, f
        jnp.arange(3 * H, 4 * H),    # o
        jnp.arange(2 * H, 3 * H),    # g
    ])
    packed = []
    for l in range(NUM_LAYERS):
        w_ih, w_hh, b = (flat_params[3 * l], flat_params[3 * l + 1],
                         flat_params[3 * l + 2])
        packed += [w_ih[:, perm], w_hh[:, perm], b[:, perm]]
    w_fc, b_fc = flat_params[-2], flat_params[-1]
    packed += [w_fc.T, b_fc]         # (1, H), (1, 1)
    return jax.tree_util.tree_map(jax.block_until_ready, packed)


@functools.partial(jax.jit, static_argnames=("hidden",))
def lstm_model_forward(x, packed_params, hidden):
    """x: (B, T, D) float32, batch-first (PyTorch convention).
    packed_params: output of pack_params_for_kernel (packed once, offline)."""
    B, T, D = x.shape
    H = hidden

    # Time-major, flattened over (T, B): row t*B + b is (time t, batch b).
    x_flat = jnp.transpose(x, (1, 0, 2)).reshape(T * B, D)

    kernel = _make_lstm_kernel(NUM_LAYERS, T, B, H)
    n_inputs = 1 + len(packed_params)

    vmem_spec = pl.BlockSpec(memory_space=pltpu.MemorySpace.VMEM)
    out = pl.pallas_call(
        kernel,
        out_shape=jax.ShapeDtypeStruct((B, 1), jnp.float32),
        in_specs=[vmem_spec] * n_inputs,
        out_specs=vmem_spec,
    )(x_flat, *packed_params)
    return out


def init_params(key, input_size, hidden):
    """Deterministic PyTorch-style init: U(-1/sqrt(H), 1/sqrt(H)).

    Stored in PyTorch gate order (i, f, g, o); W_ih as (D_in, 4H), W_hh as
    (H, 4H), bias = b_ih + b_hh as (1, 4H), fc as (H, 1) + (1, 1).
    """
    H = hidden
    bound = 1.0 / math.sqrt(H)
    flat = []
    d_in = input_size
    for _ in range(NUM_LAYERS):
        key, k1, k2, k3, k4 = jax.random.split(key, 5)
        w_ih = jax.random.uniform(k1, (d_in, 4 * H), jnp.float32, -bound, bound)
        w_hh = jax.random.uniform(k2, (H, 4 * H), jnp.float32, -bound, bound)
        b_ih = jax.random.uniform(k3, (4 * H,), jnp.float32, -bound, bound)
        b_hh = jax.random.uniform(k4, (4 * H,), jnp.float32, -bound, bound)
        flat += [w_ih, w_hh, (b_ih + b_hh).reshape(1, 4 * H)]
        d_in = H
    key, k5, k6 = jax.random.split(key, 3)
    w_fc = jax.random.uniform(k5, (H, 1), jnp.float32, -bound, bound)
    b_fc = jax.random.uniform(k6, (1, 1), jnp.float32, -bound, bound)
    flat += [w_fc, b_fc]
    return flat


def reference_forward(x, flat_params, hidden):
    """Pure-JAX reference (PyTorch gate order / eval-mode semantics)."""
    H = hidden
    B, T, D = x.shape
    layer_in = x
    for l in range(NUM_LAYERS):
        w_ih, w_hh, b = (flat_params[3 * l], flat_params[3 * l + 1],
                         flat_params[3 * l + 2])
        h = jnp.zeros((B, H), jnp.float32)
        c = jnp.zeros((B, H), jnp.float32)
        outs = []
        for t in range(T):
            z = layer_in[:, t, :] @ w_ih + h @ w_hh + b
            i_g = jax.nn.sigmoid(z[:, 0:H])
            f_g = jax.nn.sigmoid(z[:, H:2 * H])
            g_g = jnp.tanh(z[:, 2 * H:3 * H])
            o_g = jax.nn.sigmoid(z[:, 3 * H:4 * H])
            c = f_g * c + i_g * g_g
            h = o_g * jnp.tanh(c)
            outs.append(h)
        layer_in = jnp.stack(outs, axis=1)
    w_fc, b_fc = flat_params[-2], flat_params[-1]
    return layer_in[:, -1, :] @ w_fc + b_fc


if __name__ == "__main__":
    # batch >= 8 so the 8-sublane granule is fully used (B=2 wastes 75%).
    B, T, D, H = 8, 8, 16, 32  # batch, seq_len, input_size, hidden_size

    key = jax.random.PRNGKey(0)
    key, xk = jax.random.split(key)
    x = jax.random.normal(xk, (B, T, D), jnp.float32)
    params = init_params(key, D, H)

    # Pack once, outside the jitted per-call path (weight-load time).
    packed = pack_params_for_kernel(params, H)

    out = lstm_model_forward(x, packed, H)
    out = jax.block_until_ready(out)
    assert out.shape == (B, 1), out.shape

    ref = reference_forward(x, params, H)
    assert jnp.allclose(out, ref, rtol=1e-3, atol=1e-3), (out, ref)

    print("KERNEL_OK")
</pallas_src>

<mosaic_0001>
module attributes {stable_mosaic.version = 11 : i64} {
  func.func @kernel(%arg0: memref<64x16xf32, #tpu.memory_space<vmem>>, %arg1: memref<16x128xf32, #tpu.memory_space<vmem>>, %arg2: memref<32x128xf32, #tpu.memory_space<vmem>>, %arg3: memref<1x128xf32, #tpu.memory_space<vmem>>, %arg4: memref<32x128xf32, #tpu.memory_space<vmem>>, %arg5: memref<32x128xf32, #tpu.memory_space<vmem>>, %arg6: memref<1x128xf32, #tpu.memory_space<vmem>>, %arg7: memref<32x128xf32, #tpu.memory_space<vmem>>, %arg8: memref<32x128xf32, #tpu.memory_space<vmem>>, %arg9: memref<1x128xf32, #tpu.memory_space<vmem>>, %arg10: memref<1x32xf32, #tpu.memory_space<vmem>>, %arg11: memref<1x1xf32, #tpu.memory_space<vmem>>, %arg12: memref<8x1xf32, #tpu.memory_space<vmem>>) attributes {dimension_semantics = [], scalar_prefetch = 0 : i64, scratch_operands = 0 : i64, tpu.core_type = #tpu.core_type<tc>} {
    %c0 = arith.constant 0 : index
    %c0_0 = arith.constant 0 : index
    %0 = vector.load %arg1[%c0, %c0_0] : memref<16x128xf32, #tpu.memory_space<vmem>>, vector<16x128xf32>
    %c0_1 = arith.constant 0 : index
    %c0_2 = arith.constant 0 : index
    %1 = vector.load %arg4[%c0_1, %c0_2] : memref<32x128xf32, #tpu.memory_space<vmem>>, vector<32x128xf32>
    %c0_3 = arith.constant 0 : index
    %c0_4 = arith.constant 0 : index
    %2 = vector.load %arg7[%c0_3, %c0_4] : memref<32x128xf32, #tpu.memory_space<vmem>>, vector<32x128xf32>
    %c0_5 = arith.constant 0 : index
    %c0_6 = arith.constant 0 : index
    %3 = vector.load %arg2[%c0_5, %c0_6] : memref<32x128xf32, #tpu.memory_space<vmem>>, vector<32x128xf32>
    %c0_7 = arith.constant 0 : index
    %c0_8 = arith.constant 0 : index
    %4 = vector.load %arg5[%c0_7, %c0_8] : memref<32x128xf32, #tpu.memory_space<vmem>>, vector<32x128xf32>
    %c0_9 = arith.constant 0 : index
    %c0_10 = arith.constant 0 : index
    %5 = vector.load %arg8[%c0_9, %c0_10] : memref<32x128xf32, #tpu.memory_space<vmem>>, vector<32x128xf32>
    %c0_11 = arith.constant 0 : index
    %c0_12 = arith.constant 0 : index
    %6 = vector.load %arg3[%c0_11, %c0_12] : memref<1x128xf32, #tpu.memory_space<vmem>>, vector<1x128xf32>
    %c0_13 = arith.constant 0 : index
    %c0_14 = arith.constant 0 : index
    %7 = vector.load %arg6[%c0_13, %c0_14] : memref<1x128xf32, #tpu.memory_space<vmem>>, vector<1x128xf32>
    %c0_15 = arith.constant 0 : index
    %c0_16 = arith.constant 0 : index
    %8 = vector.load %arg9[%c0_15, %c0_16] : memref<1x128xf32, #tpu.memory_space<vmem>>, vector<1x128xf32>
    %c0_17 = arith.constant 0 : index
    %c0_18 = arith.constant 0 : index
    %9 = vector.load %arg0[%c0_17, %c0_18] : memref<64x16xf32, #tpu.memory_space<vmem>>, vector<64x16xf32>
    %cst = arith.constant dense<0.000000e+00> : vector<64x128xf32>
    %10 = tpu.matmul %9, %0, %cst {dimension_numbers = #tpu.dot_dimension_numbers<[1], [0], [0], [1], [0, 0, 1, 1], [], []>} : vector<64x16xf32>, vector<16x128xf32>, vector<64x128xf32> -> vector<64x128xf32>
    %11 = vector.broadcast %6 : vector<1x128xf32> to vector<64x128xf32>
    %12 = arith.addf %10, %11 : vector<64x128xf32>
    %cst_19 = arith.constant 0.000000e+00 : f32
    %13 = vector.broadcast %cst_19 : f32 to vector<8x32xf32>
    %cst_20 = arith.constant 0.000000e+00 : f32
    %14 = vector.broadcast %cst_20 : f32 to vector<8x32xf32>
    %cst_21 = arith.constant 0.000000e+00 : f32
    %15 = vector.broadcast %cst_21 : f32 to vector<8x32xf32>
    %cst_22 = arith.constant 0.000000e+00 : f32
    %16 = vector.broadcast %cst_22 : f32 to vector<8x32xf32>
    %cst_23 = arith.constant 0.000000e+00 : f32
    %17 = vector.broadcast %cst_23 : f32 to vector<8x32xf32>
    %cst_24 = arith.constant 0.000000e+00 : f32
    %18 = vector.broadcast %cst_24 : f32 to vector<8x32xf32>
    %19 = vector.extract_strided_slice %12 {offsets = [0, 0], sizes = [8, 128], strides = [1, 1]} : vector<64x128xf32> to vector<8x128xf32>
    %cst_25 = arith.constant dense<0.000000e+00> : vector<8x128xf32>
    %20 = tpu.matmul %13, %3, %cst_25 {dimension_numbers = #tpu.dot_dimension_numbers<[1], [0], [0], [1], [0, 0, 1, 1], [], []>} : vector<8x32xf32>, vector<32x128xf32>, vector<8x128xf32> -> vector<8x128xf32>
    %21 = arith.addf %19, %20 : vector<8x128xf32>
    %22 = arith.negf %21 : vector<8x128xf32>
    %23 = math.exp %22 : vector<8x128xf32>
    %cst_26 = arith.constant 1.000000e+00 : f32
    %24 = vector.broadcast %cst_26 : f32 to vector<8x128xf32>
    %25 = arith.addf %24, %23 : vector<8x128xf32>
    %26 = arith.divf %24, %25 : vector<8x128xf32>
    %27 = vector.extract_strided_slice %21 {offsets = [0, 96], sizes = [8, 32], strides = [1, 1]} : vector<8x128xf32> to vector<8x32xf32>
    %28 = math.tanh %27 : vector<8x32xf32>
    %29 = vector.extract_strided_slice %26 {offsets = [0, 32], sizes = [8, 32], strides = [1, 1]} : vector<8x128xf32> to vector<8x32xf32>
    %30 = arith.mulf %29, %16 : vector<8x32xf32>
    %31 = vector.extract_strided_slice %26 {offsets = [0, 0], sizes = [8, 32], strides = [1, 1]} : vector<8x128xf32> to vector<8x32xf32>
    %32 = arith.mulf %31, %28 : vector<8x32xf32>
    %33 = arith.addf %30, %32 : vector<8x32xf32>
    %34 = vector.extract_strided_slice %26 {offsets = [0, 64], sizes = [8, 32], strides = [1, 1]} : vector<8x128xf32> to vector<8x32xf32>
    %35 = math.tanh %33 : vector<8x32xf32>
    %36 = arith.mulf %34, %35 : vector<8x32xf32>
    %37 = vector.extract_strided_slice %12 {offsets = [8, 0], sizes = [8, 128], strides = [1, 1]} : vector<64x128xf32> to vector<8x128xf32>
    %cst_27 = arith.constant dense<0.000000e+00> : vector<8x128xf32>
    %38 = tpu.matmul %36, %3, %cst_27 {dimension_numbers = #tpu.dot_dimension_numbers<[1], [0], [0], [1], [0, 0, 1, 1], [], []>} : vector<8x32xf32>, vector<32x128xf32>, vector<8x128xf32> -> vector<8x128xf32>
    %39 = arith.addf %37, %38 : vector<8x128xf32>
    %40 = arith.negf %39 : vector<8x128xf32>
    %41 = math.exp %40 : vector<8x128xf32>
    %cst_28 = arith.constant 1.000000e+00 : f32
    %42 = vector.broadcast %cst_28 : f32 to vector<8x128xf32>
    %43 = arith.addf %42, %41 : vector<8x128xf32>
    %44 = arith.divf %42, %43 : vector<8x128xf32>
    %45 = vector.extract_strided_slice %39 {offsets = [0, 96], sizes = [8, 32], strides = [1, 1]} : vector<8x128xf32> to vector<8x32xf32>
    %46 = math.tanh %45 : vector<8x32xf32>
    %47 = vector.extract_strided_slice %44 {offsets = [0, 32], sizes = [8, 32], strides = [1, 1]} : vector<8x128xf32> to vector<8x32xf32>
    %48 = arith.mulf %47, %33 : vector<8x32xf32>
    %49 = vector.extract_strided_slice %44 {offsets = [0, 0], sizes = [8, 32], strides = [1, 1]} : vector<8x128xf32> to vector<8x32xf32>
    %50 = arith.mulf %49, %46 : vector<8x32xf32>
    %51 = arith.addf %48, %50 : vector<8x32xf32>
    %52 = vector.extract_strided_slice %44 {offsets = [0, 64], sizes = [8, 32], strides = [1, 1]} : vector<8x128xf32> to vector<8x32xf32>
    %53 = math.tanh %51 : vector<8x32xf32>
    %54 = arith.mulf %52, %53 : vector<8x32xf32>
    %cst_29 = arith.constant dense<0.000000e+00> : vector<8x128xf32>
    %55 = tpu.matmul %36, %1, %cst_29 {dimension_numbers = #tpu.dot_dimension_numbers<[1], [0], [0], [1], [0, 0, 1, 1], [], []>} : vector<8x32xf32>, vector<32x128xf32>, vector<8x128xf32> -> vector<8x128xf32>
    %cst_30 = arith.constant dense<0.000000e+00> : vector<8x128xf32>
    %56 = tpu.matmul %14, %4, %cst_30 {dimension_numbers = #tpu.dot_dimension_numbers<[1], [0], [0], [1], [0, 0, 1, 1], [], []>} : vector<8x32xf32>, vector<32x128xf32>, vector<8x128xf32> -> vector<8x128xf32>
    %57 = arith.addf %55, %56 : vector<8x128xf32>
    %58 = vector.broadcast %7 : vector<1x128xf32> to vector<8x128xf32>
    %59 = arith.addf %57, %58 : vector<8x128xf32>
    %60 = arith.negf %59 : vector<8x128xf32>
    %61 = math.exp %60 : vector<8x128xf32>
    %cst_31 = arith.constant 1.000000e+00 : f32
    %62 = vector.broadcast %cst_31 : f32 to vector<8x128xf32>
    %63 = arith.addf %62, %61 : vector<8x128xf32>
    %64 = arith.divf %62, %63 : vector<8x128xf32>
    %65 = vector.extract_strided_slice %59 {offsets = [0, 96], sizes = [8, 32], strides = [1, 1]} : vector<8x128xf32> to vector<8x32xf32>
    %66 = math.tanh %65 : vector<8x32xf32>
    %67 = vector.extract_strided_slice %64 {offsets = [0, 32], sizes = [8, 32], strides = [1, 1]} : vector<8x128xf32> to vector<8x32xf32>
    %68 = arith.mulf %67, %17 : vector<8x32xf32>
    %69 = vector.extract_strided_slice %64 {offsets = [0, 0], sizes = [8, 32], strides = [1, 1]} : vector<8x128xf32> to vector<8x32xf32>
    %70 = arith.mulf %69, %66 : vector<8x32xf32>
    %71 = arith.addf %68, %70 : vector<8x32xf32>
    %72 = vector.extract_strided_slice %64 {offsets = [0, 64], sizes = [8, 32], strides = [1, 1]} : vector<8x128xf32> to vector<8x32xf32>
    %73 = math.tanh %71 : vector<8x32xf32>
    %74 = arith.mulf %72, %73 : vector<8x32xf32>
    %75 = vector.extract_strided_slice %12 {offsets = [16, 0], sizes = [8, 128], strides = [1, 1]} : vector<64x128xf32> to vector<8x128xf32>
    %cst_32 = arith.constant dense<0.000000e+00> : vector<8x128xf32>
    %76 = tpu.matmul %54, %3, %cst_32 {dimension_numbers = #tpu.dot_dimension_numbers<[1], [0], [0], [1], [0, 0, 1, 1], [], []>} : vector<8x32xf32>, vector<32x128xf32>, vector<8x128xf32> -> vector<8x128xf32>
    %77 = arith.addf %75, %76 : vector<8x128xf32>
    %78 = arith.negf %77 : vector<8x128xf32>
    %79 = math.exp %78 : vector<8x128xf32>
    %cst_33 = arith.constant 1.000000e+00 : f32
    %80 = vector.broadcast %cst_33 : f32 to vector<8x128xf32>
    %81 = arith.addf %80, %79 : vector<8x128xf32>
    %82 = arith.divf %80, %81 : vector<8x128xf32>
    %83 = vector.extract_strided_slice %77 {offsets = [0, 96], sizes = [8, 32], strides = [1, 1]} : vector<8x128xf32> to vector<8x32xf32>
    %84 = math.tanh %83 : vector<8x32xf32>
    %85 = vector.extract_strided_slice %82 {offsets = [0, 32], sizes = [8, 32], strides = [1, 1]} : vector<8x128xf32> to vector<8x32xf32>
    %86 = arith.mulf %85, %51 : vector<8x32xf32>
    %87 = vector.extract_strided_slice %82 {offsets = [0, 0], sizes = [8, 32], strides = [1, 1]} : vector<8x128xf32> to vector<8x32xf32>
    %88 = arith.mulf %87, %84 : vector<8x32xf32>
    %89 = arith.addf %86, %88 : vector<8x32xf32>
    %90 = vector.extract_strided_slice %82 {offsets = [0, 64], sizes = [8, 32], strides = [1, 1]} : vector<8x128xf32> to vector<8x32xf32>
    %91 = math.tanh %89 : vector<8x32xf32>
    %92 = arith.mulf %90, %91 : vector<8x32xf32>
    %cst_34 = arith.constant dense<0.000000e+00> : vector<8x128xf32>
    %93 = tpu.matmul %54, %1, %cst_34 {dimension_numbers = #tpu.dot_dimension_numbers<[1], [0], [0], [1], [0, 0, 1, 1], [], []>} : vector<8x32xf32>, vector<32x128xf32>, vector<8x128xf32> -> vector<8x128xf32>
    %cst_35 = arith.constant dense<0.000000e+00> : vector<8x128xf32>
    %94 = tpu.matmul %74, %4, %cst_35 {dimension_numbers = #tpu.dot_dimension_numbers<[1], [0], [0], [1], [0, 0, 1, 1], [], []>} : vector<8x32xf32>, vector<32x128xf32>, vector<8x128xf32> -> vector<8x128xf32>
    %95 = arith.addf %93, %94 : vector<8x128xf32>
    %96 = vector.broadcast %7 : vector<1x128xf32> to vector<8x128xf32>
    %97 = arith.addf %95, %96 : vector<8x128xf32>
    %98 = arith.negf %97 : vector<8x128xf32>
    %99 = math.exp %98 : vector<8x128xf32>
    %cst_36 = arith.constant 1.000000e+00 : f32
    %100 = vector.broadcast %cst_36 : f32 to vector<8x128xf32>
    %101 = arith.addf %100, %99 : vector<8x128xf32>
    %102 = arith.divf %100, %101 : vector<8x128xf32>
    %103 = vector.extract_strided_slice %97 {offsets = [0, 96], sizes = [8, 32], strides = [1, 1]} : vector<8x128xf32> to vector<8x32xf32>
    %104 = math.tanh %103 : vector<8x32xf32>
    %105 = vector.extract_strided_slice %102 {offsets = [0, 32], sizes = [8, 32], strides = [1, 1]} : vector<8x128xf32> to vector<8x32xf32>
    %106 = arith.mulf %105, %71 : vector<8x32xf32>
    %107 = vector.extract_strided_slice %102 {offsets = [0, 0], sizes = [8, 32], strides = [1, 1]} : vector<8x128xf32> to vector<8x32xf32>
    %108 = arith.mulf %107, %104 : vector<8x32xf32>
    %109 = arith.addf %106, %108 : vector<8x32xf32>
    %110 = vector.extract_strided_slice %102 {offsets = [0, 64], sizes = [8, 32], strides = [1, 1]} : vector<8x128xf32> to vector<8x32xf32>
    %111 = math.tanh %109 : vector<8x32xf32>
    %112 = arith.mulf %110, %111 : vector<8x32xf32>
    %cst_37 = arith.constant dense<0.000000e+00> : vector<8x128xf32>
    %113 = tpu.matmul %74, %2, %cst_37 {dimension_numbers = #tpu.dot_dimension_numbers<[1], [0], [0], [1], [0, 0, 1, 1], [], []>} : vector<8x32xf32>, vector<32x128xf32>, vector<8x128xf32> -> vector<8x128xf32>
    %cst_38 = arith.constant dense<0.000000e+00> : vector<8x128xf32>
    %114 = tpu.matmul %15, %5, %cst_38 {dimension_numbers = #tpu.dot_dimension_numbers<[1], [0], [0], [1], [0, 0, 1, 1], [], []>} : vector<8x32xf32>, vector<32x128xf32>, vector<8x128xf32> -> vector<8x128xf32>
    %115 = arith.addf %113, %114 : vector<8x128xf32>
    %116 = vector.broadcast %8 : vector<1x128xf32> to vector<8x128xf32>
    %117 = arith.addf %115, %116 : vector<8x128xf32>
    %118 = arith.negf %117 : vector<8x128xf32>
    %119 = math.exp %118 : vector<8x128xf32>
    %cst_39 = arith.constant 1.000000e+00 : f32
    %120 = vector.broadcast %cst_39 : f32 to vector<8x128xf32>
    %121 = arith.addf %120, %119 : vector<8x128xf32>
    %122 = arith.divf %120, %121 : vector<8x128xf32>
    %123 = vector.extract_strided_slice %117 {offsets = [0, 96], sizes = [8, 32], strides = [1, 1]} : vector<8x128xf32> to vector<8x32xf32>
    %124 = math.tanh %123 : vector<8x32xf32>
    %125 = vector.extract_strided_slice %122 {offsets = [0, 32], sizes = [8, 32], strides = [1, 1]} : vector<8x128xf32> to vector<8x32xf32>
    %126 = arith.mulf %125, %18 : vector<8x32xf32>
    %127 = vector.extract_strided_slice %122 {offsets = [0, 0], sizes = [8, 32], strides = [1, 1]} : vector<8x128xf32> to vector<8x32xf32>
    %128 = arith.mulf %127, %124 : vector<8x32xf32>
    %129 = arith.addf %126, %128 : vector<8x32xf32>
    %130 = vector.extract_strided_slice %122 {offsets = [0, 64], sizes = [8, 32], strides = [1, 1]} : vector<8x128xf32> to vector<8x32xf32>
    %131 = math.tanh %129 : vector<8x32xf32>
    %132 = arith.mulf %130, %131 : vector<8x32xf32>
    %133 = vector.extract_strided_slice %12 {offsets = [24, 0], sizes = [8, 128], strides = [1, 1]} : vector<64x128xf32> to vector<8x128xf32>
    %cst_40 = arith.constant dense<0.000000e+00> : vector<8x128xf32>
    %134 = tpu.matmul %92, %3, %cst_40 {dimension_numbers = #tpu.dot_dimension_numbers<[1], [0], [0], [1], [0, 0, 1, 1], [], []>} : vector<8x32xf32>, vector<32x128xf32>, vector<8x128xf32> -> vector<8x128xf32>
    %135 = arith.addf %133, %134 : vector<8x128xf32>
    %136 = arith.negf %135 : vector<8x128xf32>
    %137 = math.exp %136 : vector<8x128xf32>
    %cst_41 = arith.constant 1.000000e+00 : f32
    %138 = vector.broadcast %cst_41 : f32 to vector<8x128xf32>
    %139 = arith.addf %138, %137 : vector<8x128xf32>
    %140 = arith.divf %138, %139 : vector<8x128xf32>
    %141 = vector.extract_strided_slice %135 {offsets = [0, 96], sizes = [8, 32], strides = [1, 1]} : vector<8x128xf32> to vector<8x32xf32>
    %142 = math.tanh %141 : vector<8x32xf32>
    %143 = vector.extract_strided_slice %140 {offsets = [0, 32], sizes = [8, 32], strides = [1, 1]} : vector<8x128xf32> to vector<8x32xf32>
    %144 = arith.mulf %143, %89 : vector<8x32xf32>
    %145 = vector.extract_strided_slice %140 {offsets = [0, 0], sizes = [8, 32], strides = [1, 1]} : vector<8x128xf32> to vector<8x32xf32>
    %146 = arith.mulf %145, %142 : vector<8x32xf32>
    %147 = arith.addf %144, %146 : vector<8x32xf32>
    %148 = vector.extract_strided_slice %140 {offsets = [0, 64], sizes = [8, 32], strides = [1, 1]} : vector<8x128xf32> to vector<8x32xf32>
    %149 = math.tanh %147 : vector<8x32xf32>
    %150 = arith.mulf %148, %149 : vector<8x32xf32>
    %cst_42 = arith.constant dense<0.000000e+00> : vector<8x128xf32>
    %151 = tpu.matmul %92, %1, %cst_42 {dimension_numbers = #tpu.dot_dimension_numbers<[1], [0], [0], [1], [0, 0, 1, 1], [], []>} : vector<8x32xf32>, vector<32x128xf32>, vector<8x128xf32> -> vector<8x128xf32>
    %cst_43 = arith.constant dense<0.000000e+00> : vector<8x128xf32>
    %152 = tpu.matmul %112, %4, %cst_43 {dimension_numbers = #tpu.dot_dimension_numbers<[1], [0], [0], [1], [0, 0, 1, 1], [], []>} : vector<8x32xf32>, vector<32x128xf32>, vector<8x128xf32> -> vector<8x128xf32>
    %153 = arith.addf %151, %152 : vector<8x128xf32>
    %154 = vector.broadcast %7 : vector<1x128xf32> to vector<8x128xf32>
    %155 = arith.addf %153, %154 : vector<8x128xf32>
    %156 = arith.negf %155 : vector<8x128xf32>
    %157 = math.exp %156 : vector<8x128xf32>
    %cst_44 = arith.constant 1.000000e+00 : f32
    %158 = vector.broadcast %cst_44 : f32 to vector<8x128xf32>
    %159 = arith.addf %158, %157 : vector<8x128xf32>
    %160 = arith.divf %158, %159 : vector<8x128xf32>
    %161 = vector.extract_strided_slice %155 {offsets = [0, 96], sizes = [8, 32], strides = [1, 1]} : vector<8x128xf32> to vector<8x32xf32>
    %162 = math.tanh %161 : vector<8x32xf32>
    %163 = vector.extract_strided_slice %160 {offsets = [0, 32], sizes = [8, 32], strides = [1, 1]} : vector<8x128xf32> to vector<8x32xf32>
    %164 = arith.mulf %163, %109 : vector<8x32xf32>
    %165 = vector.extract_strided_slice %160 {offsets = [0, 0], sizes = [8, 32], strides = [1, 1]} : vector<8x128xf32> to vector<8x32xf32>
    %166 = arith.mulf %165, %162 : vector<8x32xf32>
    %167 = arith.addf %164, %166 : vector<8x32xf32>
    %168 = vector.extract_strided_slice %160 {offsets = [0, 64], sizes = [8, 32], strides = [1, 1]} : vector<8x128xf32> to vector<8x32xf32>
    %169 = math.tanh %167 : vector<8x32xf32>
    %170 = arith.mulf %168, %169 : vector<8x32xf32>
    %cst_45 = arith.constant dense<0.000000e+00> : vector<8x128xf32>
    %171 = tpu.matmul %112, %2, %cst_45 {dimension_numbers = #tpu.dot_dimension_numbers<[1], [0], [0], [1], [0, 0, 1, 1], [], []>} : vector<8x32xf32>, vector<32x128xf32>, vector<8x128xf32> -> vector<8x128xf32>
    %cst_46 = arith.constant dense<0.000000e+00> : vector<8x128xf32>
    %172 = tpu.matmul %132, %5, %cst_46 {dimension_numbers = #tpu.dot_dimension_numbers<[1], [0], [0], [1], [0, 0, 1, 1], [], []>} : vector<8x32xf32>, vector<32x128xf32>, vector<8x128xf32> -> vector<8x128xf32>
    %173 = arith.addf %171, %172 : vector<8x128xf32>
    %174 = vector.broadcast %8 : vector<1x128xf32> to vector<8x128xf32>
    %175 = arith.addf %173, %174 : vector<8x128xf32>
    %176 = arith.negf %175 : vector<8x128xf32>
    %177 = math.exp %176 : vector<8x128xf32>
    %cst_47 = arith.constant 1.000000e+00 : f32
    %178 = vector.broadcast %cst_47 : f32 to vector<8x128xf32>
    %179 = arith.addf %178, %177 : vector<8x128xf32>
    %180 = arith.divf %178, %179 : vector<8x128xf32>
    %181 = vector.extract_strided_slice %175 {offsets = [0, 96], sizes = [8, 32], strides = [1, 1]} : vector<8x128xf32> to vector<8x32xf32>
    %182 = math.tanh %181 : vector<8x32xf32>
    %183 = vector.extract_strided_slice %180 {offsets = [0, 32], sizes = [8, 32], strides = [1, 1]} : vector<8x128xf32> to vector<8x32xf32>
    %184 = arith.mulf %183, %129 : vector<8x32xf32>
    %185 = vector.extract_strided_slice %180 {offsets = [0, 0], sizes = [8, 32], strides = [1, 1]} : vector<8x128xf32> to vector<8x32xf32>
    %186 = arith.mulf %185, %182 : vector<8x32xf32>
    %187 = arith.addf %184, %186 : vector<8x32xf32>
    %188 = vector.extract_strided_slice %180 {offsets = [0, 64], sizes = [8, 32], strides = [1, 1]} : vector<8x128xf32> to vector<8x32xf32>
    %189 = math.tanh %187 : vector<8x32xf32>
    %190 = arith.mulf %188, %189 : vector<8x32xf32>
    %191 = vector.extract_strided_slice %12 {offsets = [32, 0], sizes = [8, 128], strides = [1, 1]} : vector<64x128xf32> to vector<8x128xf32>
    %cst_48 = arith.constant dense<0.000000e+00> : vector<8x128xf32>
    %192 = tpu.matmul %150, %3, %cst_48 {dimension_numbers = #tpu.dot_dimension_numbers<[1], [0], [0], [1], [0, 0, 1, 1], [], []>} : vector<8x32xf32>, vector<32x128xf32>, vector<8x128xf32> -> vector<8x128xf32>
    %193 = arith.addf %191, %192 : vector<8x128xf32>
    %194 = arith.negf %193 : vector<8x128xf32>
    %195 = math.exp %194 : vector<8x128xf32>
    %cst_49 = arith.constant 1.000000e+00 : f32
    %196 = vector.broadcast %cst_49 : f32 to vector<8x128xf32>
    %197 = arith.addf %196, %195 : vector<8x128xf32>
    %198 = arith.divf %196, %197 : vector<8x128xf32>
    %199 = vector.extract_strided_slice %193 {offsets = [0, 96], sizes = [8, 32], strides = [1, 1]} : vector<8x128xf32> to vector<8x32xf32>
    %200 = math.tanh %199 : vector<8x32xf32>
    %201 = vector.extract_strided_slice %198 {offsets = [0, 32], sizes = [8, 32], strides = [1, 1]} : vector<8x128xf32> to vector<8x32xf32>
    %202 = arith.mulf %201, %147 : vector<8x32xf32>
    %203 = vector.extract_strided_slice %198 {offsets = [0, 0], sizes = [8, 32], strides = [1, 1]} : vector<8x128xf32> to vector<8x32xf32>
    %204 = arith.mulf %203, %200 : vector<8x32xf32>
    %205 = arith.addf %202, %204 : vector<8x32xf32>
    %206 = vector.extract_strided_slice %198 {offsets = [0, 64], sizes = [8, 32], strides = [1, 1]} : vector<8x128xf32> to vector<8x32xf32>
    %207 = math.tanh %205 : vector<8x32xf32>
    %208 = arith.mulf %206, %207 : vector<8x32xf32>
    %cst_50 = arith.constant dense<0.000000e+00> : vector<8x128xf32>
    %209 = tpu.matmul %150, %1, %cst_50 {dimension_numbers = #tpu.dot_dimension_numbers<[1], [0], [0], [1], [0, 0, 1, 1], [], []>} : vector<8x32xf32>, vector<32x128xf32>, vector<8x128xf32> -> vector<8x128xf32>
    %cst_51 = arith.constant dense<0.000000e+00> : vector<8x128xf32>
    %210 = tpu.matmul %170, %4, %cst_51 {dimension_numbers = #tpu.dot_dimension_numbers<[1], [0], [0], [1], [0, 0, 1, 1], [], []>} : vector<8x32xf32>, vector<32x128xf32>, vector<8x128xf32> -> vector<8x128xf32>
    %211 = arith.addf %209, %210 : vector<8x128xf32>
    %212 = vector.broadcast %7 : vector<1x128xf32> to vector<8x128xf32>
    %213 = arith.addf %211, %212 : vector<8x128xf32>
    %214 = arith.negf %213 : vector<8x128xf32>
    %215 = math.exp %214 : vector<8x128xf32>
    %cst_52 = arith.constant 1.000000e+00 : f32
    %216 = vector.broadcast %cst_52 : f32 to vector<8x128xf32>
    %217 = arith.addf %216, %215 : vector<8x128xf32>
    %218 = arith.divf %216, %217 : vector<8x128xf32>
    %219 = vector.extract_strided_slice %213 {offsets = [0, 96], sizes = [8, 32], strides = [1, 1]} : vector<8x128xf32> to vector<8x32xf32>
    %220 = math.tanh %219 : vector<8x32xf32>
    %221 = vector.extract_strided_slice %218 {offsets = [0, 32], sizes = [8, 32], strides = [1, 1]} : vector<8x128xf32> to vector<8x32xf32>
    %222 = arith.mulf %221, %167 : vector<8x32xf32>
    %223 = vector.extract_strided_slice %218 {offsets = [0, 0], sizes = [8, 32], strides = [1, 1]} : vector<8x128xf32> to vector<8x32xf32>
    %224 = arith.mulf %223, %220 : vector<8x32xf32>
    %225 = arith.addf %222, %224 : vector<8x32xf32>
    %226 = vector.extract_strided_slice %218 {offsets = [0, 64], sizes = [8, 32], strides = [1, 1]} : vector<8x128xf32> to vector<8x32xf32>
    %227 = math.tanh %225 : vector<8x32xf32>
    %228 = arith.mulf %226, %227 : vector<8x32xf32>
    %cst_53 = arith.constant dense<0.000000e+00> : vector<8x128xf32>
    %229 = tpu.matmul %170, %2, %cst_53 {dimension_numbers = #tpu.dot_dimension_numbers<[1], [0], [0], [1], [0, 0, 1, 1], [], []>} : vector<8x32xf32>, vector<32x128xf32>, vector<8x128xf32> -> vector<8x128xf32>
    %cst_54 = arith.constant dense<0.000000e+00> : vector<8x128xf32>
    %230 = tpu.matmul %190, %5, %cst_54 {dimension_numbers = #tpu.dot_dimension_numbers<[1], [0], [0], [1], [0, 0, 1, 1], [], []>} : vector<8x32xf32>, vector<32x128xf32>, vector<8x128xf32> -> vector<8x128xf32>
    %231 = arith.addf %229, %230 : vector<8x128xf32>
    %232 = vector.broadcast %8 : vector<1x128xf32> to vector<8x128xf32>
    %233 = arith.addf %231, %232 : vector<8x128xf32>
    %234 = arith.negf %233 : vector<8x128xf32>
    %235 = math.exp %234 : vector<8x128xf32>
    %cst_55 = arith.constant 1.000000e+00 : f32
    %236 = vector.broadcast %cst_55 : f32 to vector<8x128xf32>
    %237 = arith.addf %236, %235 : vector<8x128xf32>
    %238 = arith.divf %236, %237 : vector<8x128xf32>
    %239 = vector.extract_strided_slice %233 {offsets = [0, 96], sizes = [8, 32], strides = [1, 1]} : vector<8x128xf32> to vector<8x32xf32>
    %240 = math.tanh %239 : vector<8x32xf32>
    %241 = vector.extract_strided_slice %238 {offsets = [0, 32], sizes = [8, 32], strides = [1, 1]} : vector<8x128xf32> to vector<8x32xf32>
    %242 = arith.mulf %241, %187 : vector<8x32xf32>
    %243 = vector.extract_strided_slice %238 {offsets = [0, 0], sizes = [8, 32], strides = [1, 1]} : vector<8x128xf32> to vector<8x32xf32>
    %244 = arith.mulf %243, %240 : vector<8x32xf32>
    %245 = arith.addf %242, %244 : vector<8x32xf32>
    %246 = vector.extract_strided_slice %238 {offsets = [0, 64], sizes = [8, 32], strides = [1, 1]} : vector<8x128xf32> to vector<8x32xf32>
    %247 = math.tanh %245 : vector<8x32xf32>
    %248 = arith.mulf %246, %247 : vector<8x32xf32>
    %249 = vector.extract_strided_slice %12 {offsets = [40, 0], sizes = [8, 128], strides = [1, 1]} : vector<64x128xf32> to vector<8x128xf32>
    %cst_56 = arith.constant dense<0.000000e+00> : vector<8x128xf32>
    %250 = tpu.matmul %208, %3, %cst_56 {dimension_numbers = #tpu.dot_dimension_numbers<[1], [0], [0], [1], [0, 0, 1, 1], [], []>} : vector<8x32xf32>, vector<32x128xf32>, vector<8x128xf32> -> vector<8x128xf32>
    %251 = arith.addf %249, %250 : vector<8x128xf32>
    %252 = arith.negf %251 : vector<8x128xf32>
    %253 = math.exp %252 : vector<8x128xf32>
    %cst_57 = arith.constant 1.000000e+00 : f32
    %254 = vector.broadcast %cst_57 : f32 to vector<8x128xf32>
    %255 = arith.addf %254, %253 : vector<8x128xf32>
    %256 = arith.divf %254, %255 : vector<8x128xf32>
    %257 = vector.extract_strided_slice %251 {offsets = [0, 96], sizes = [8, 32], strides = [1, 1]} : vector<8x128xf32> to vector<8x32xf32>
    %258 = math.tanh %257 : vector<8x32xf32>
    %259 = vector.extract_strided_slice %256 {offsets = [0, 32], sizes = [8, 32], strides = [1, 1]} : vector<8x128xf32> to vector<8x32xf32>
    %260 = arith.mulf %259, %205 : vector<8x32xf32>
    %261 = vector.extract_strided_slice %256 {offsets = [0, 0], sizes = [8, 32], strides = [1, 1]} : vector<8x128xf32> to vector<8x32xf32>
    %262 = arith.mulf %261, %258 : vector<8x32xf32>
    %263 = arith.addf %260, %262 : vector<8x32xf32>
    %264 = vector.extract_strided_slice %256 {offsets = [0, 64], sizes = [8, 32], strides = [1, 1]} : vector<8x128xf32> to vector<8x32xf32>
    %265 = math.tanh %263 : vector<8x32xf32>
    %266 = arith.mulf %264, %265 : vector<8x32xf32>
    %cst_58 = arith.constant dense<0.000000e+00> : vector<8x128xf32>
    %267 = tpu.matmul %208, %1, %cst_58 {dimension_numbers = #tpu.dot_dimension_numbers<[1], [0], [0], [1], [0, 0, 1, 1], [], []>} : vector<8x32xf32>, vector<32x128xf32>, vector<8x128xf32> -> vector<8x128xf32>
    %cst_59 = arith.constant dense<0.000000e+00> : vector<8x128xf32>
    %268 = tpu.matmul %228, %4, %cst_59 {dimension_numbers = #tpu.dot_dimension_numbers<[1], [0], [0], [1], [0, 0, 1, 1], [], []>} : vector<8x32xf32>, vector<32x128xf32>, vector<8x128xf32> -> vector<8x128xf32>
    %269 = arith.addf %267, %268 : vector<8x128xf32>
    %270 = vector.broadcast %7 : vector<1x128xf32> to vector<8x128xf32>
    %271 = arith.addf %269, %270 : vector<8x128xf32>
    %272 = arith.negf %271 : vector<8x128xf32>
    %273 = math.exp %272 : vector<8x128xf32>
    %cst_60 = arith.constant 1.000000e+00 : f32
    %274 = vector.broadcast %cst_60 : f32 to vector<8x128xf32>
    %275 = arith.addf %274, %273 : vector<8x128xf32>
    %276 = arith.divf %274, %275 : vector<8x128xf32>
    %277 = vector.extract_strided_slice %271 {offsets = [0, 96], sizes = [8, 32], strides = [1, 1]} : vector<8x128xf32> to vector<8x32xf32>
    %278 = math.tanh %277 : vector<8x32xf32>
    %279 = vector.extract_strided_slice %276 {offsets = [0, 32], sizes = [8, 32], strides = [1, 1]} : vector<8x128xf32> to vector<8x32xf32>
    %280 = arith.mulf %279, %225 : vector<8x32xf32>
    %281 = vector.extract_strided_slice %276 {offsets = [0, 0], sizes = [8, 32], strides = [1, 1]} : vector<8x128xf32> to vector<8x32xf32>
    %282 = arith.mulf %281, %278 : vector<8x32xf32>
    %283 = arith.addf %280, %282 : vector<8x32xf32>
    %284 = vector.extract_strided_slice %276 {offsets = [0, 64], sizes = [8, 32], strides = [1, 1]} : vector<8x128xf32> to vector<8x32xf32>
    %285 = math.tanh %283 : vector<8x32xf32>
    %286 = arith.mulf %284, %285 : vector<8x32xf32>
    %cst_61 = arith.constant dense<0.000000e+00> : vector<8x128xf32>
    %287 = tpu.matmul %228, %2, %cst_61 {dimension_numbers = #tpu.dot_dimension_numbers<[1], [0], [0], [1], [0, 0, 1, 1], [], []>} : vector<8x32xf32>, vector<32x128xf32>, vector<8x128xf32> -> vector<8x128xf32>
    %cst_62 = arith.constant dense<0.000000e+00> : vector<8x128xf32>
    %288 = tpu.matmul %248, %5, %cst_62 {dimension_numbers = #tpu.dot_dimension_numbers<[1], [0], [0], [1], [0, 0, 1, 1], [], []>} : vector<8x32xf32>, vector<32x128xf32>, vector<8x128xf32> -> vector<8x128xf32>
    %289 = arith.addf %287, %288 : vector<8x128xf32>
    %290 = vector.broadcast %8 : vector<1x128xf32> to vector<8x128xf32>
    %291 = arith.addf %289, %290 : vector<8x128xf32>
    %292 = arith.negf %291 : vector<8x128xf32>
    %293 = math.exp %292 : vector<8x128xf32>
    %cst_63 = arith.constant 1.000000e+00 : f32
    %294 = vector.broadcast %cst_63 : f32 to vector<8x128xf32>
    %295 = arith.addf %294, %293 : vector<8x128xf32>
    %296 = arith.divf %294, %295 : vector<8x128xf32>
    %297 = vector.extract_strided_slice %291 {offsets = [0, 96], sizes = [8, 32], strides = [1, 1]} : vector<8x128xf32> to vector<8x32xf32>
    %298 = math.tanh %297 : vector<8x32xf32>
    %299 = vector.extract_strided_slice %296 {offsets = [0, 32], sizes = [8, 32], strides = [1, 1]} : vector<8x128xf32> to vector<8x32xf32>
    %300 = arith.mulf %299, %245 : vector<8x32xf32>
    %301 = vector.extract_strided_slice %296 {offsets = [0, 0], sizes = [8, 32], strides = [1, 1]} : vector<8x128xf32> to vector<8x32xf32>
    %302 = arith.mulf %301, %298 : vector<8x32xf32>
    %303 = arith.addf %300, %302 : vector<8x32xf32>
    %304 = vector.extract_strided_slice %296 {offsets = [0, 64], sizes = [8, 32], strides = [1, 1]} : vector<8x128xf32> to vector<8x32xf32>
    %305 = math.tanh %303 : vector<8x32xf32>
    %306 = arith.mulf %304, %305 : vector<8x32xf32>
    %307 = vector.extract_strided_slice %12 {offsets = [48, 0], sizes = [8, 128], strides = [1, 1]} : vector<64x128xf32> to vector<8x128xf32>
    %cst_64 = arith.constant dense<0.000000e+00> : vector<8x128xf32>
    %308 = tpu.matmul %266, %3, %cst_64 {dimension_numbers = #tpu.dot_dimension_numbers<[1], [0], [0], [1], [0, 0, 1, 1], [], []>} : vector<8x32xf32>, vector<32x128xf32>, vector<8x128xf32> -> vector<8x128xf32>
    %309 = arith.addf %307, %308 : vector<8x128xf32>
    %310 = arith.negf %309 : vector<8x128xf32>
    %311 = math.exp %310 : vector<8x128xf32>
    %cst_65 = arith.constant 1.000000e+00 : f32
    %312 = vector.broadcast %cst_65 : f32 to vector<8x128xf32>
    %313 = arith.addf %312, %311 : vector<8x128xf32>
    %314 = arith.divf %312, %313 : vector<8x128xf32>
    %315 = vector.extract_strided_slice %309 {offsets = [0, 96], sizes = [8, 32], strides = [1, 1]} : vector<8x128xf32> to vector<8x32xf32>
    %316 = math.tanh %315 : vector<8x32xf32>
    %317 = vector.extract_strided_slice %314 {offsets = [0, 32], sizes = [8, 32], strides = [1, 1]} : vector<8x128xf32> to vector<8x32xf32>
    %318 = arith.mulf %317, %263 : vector<8x32xf32>
    %319 = vector.extract_strided_slice %314 {offsets = [0, 0], sizes = [8, 32], strides = [1, 1]} : vector<8x128xf32> to vector<8x32xf32>
    %320 = arith.mulf %319, %316 : vector<8x32xf32>
    %321 = arith.addf %318, %320 : vector<8x32xf32>
    %322 = vector.extract_strided_slice %314 {offsets = [0, 64], sizes = [8, 32], strides = [1, 1]} : vector<8x128xf32> to vector<8x32xf32>
    %323 = math.tanh %321 : vector<8x32xf32>
    %324 = arith.mulf %322, %323 : vector<8x32xf32>
    %cst_66 = arith.constant dense<0.000000e+00> : vector<8x128xf32>
    %325 = tpu.matmul %266, %1, %cst_66 {dimension_numbers = #tpu.dot_dimension_numbers<[1], [0], [0], [1], [0, 0, 1, 1], [], []>} : vector<8x32xf32>, vector<32x128xf32>, vector<8x128xf32> -> vector<8x128xf32>
    %cst_67 = arith.constant dense<0.000000e+00> : vector<8x128xf32>
    %326 = tpu.matmul %286, %4, %cst_67 {dimension_numbers = #tpu.dot_dimension_numbers<[1], [0], [0], [1], [0, 0, 1, 1], [], []>} : vector<8x32xf32>, vector<32x128xf32>, vector<8x128xf32> -> vector<8x128xf32>
    %327 = arith.addf %325, %326 : vector<8x128xf32>
    %328 = vector.broadcast %7 : vector<1x128xf32> to vector<8x128xf32>
    %329 = arith.addf %327, %328 : vector<8x128xf32>
    %330 = arith.negf %329 : vector<8x128xf32>
    %331 = math.exp %330 : vector<8x128xf32>
    %cst_68 = arith.constant 1.000000e+00 : f32
    %332 = vector.broadcast %cst_68 : f32 to vector<8x128xf32>
    %333 = arith.addf %332, %331 : vector<8x128xf32>
    %334 = arith.divf %332, %333 : vector<8x128xf32>
    %335 = vector.extract_strided_slice %329 {offsets = [0, 96], sizes = [8, 32], strides = [1, 1]} : vector<8x128xf32> to vector<8x32xf32>
    %336 = math.tanh %335 : vector<8x32xf32>
    %337 = vector.extract_strided_slice %334 {offsets = [0, 32], sizes = [8, 32], strides = [1, 1]} : vector<8x128xf32> to vector<8x32xf32>
    %338 = arith.mulf %337, %283 : vector<8x32xf32>
    %339 = vector.extract_strided_slice %334 {offsets = [0, 0], sizes = [8, 32], strides = [1, 1]} : vector<8x128xf32> to vector<8x32xf32>
    %340 = arith.mulf %339, %336 : vector<8x32xf32>
    %341 = arith.addf %338, %340 : vector<8x32xf32>
    %342 = vector.extract_strided_slice %334 {offsets = [0, 64], sizes = [8, 32], strides = [1, 1]} : vector<8x128xf32> to vector<8x32xf32>
    %343 = math.tanh %341 : vector<8x32xf32>
    %344 = arith.mulf %342, %343 : vector<8x32xf32>
    %cst_69 = arith.constant dense<0.000000e+00> : vector<8x128xf32>
    %345 = tpu.matmul %286, %2, %cst_69 {dimension_numbers = #tpu.dot_dimension_numbers<[1], [0], [0], [1], [0, 0, 1, 1], [], []>} : vector<8x32xf32>, vector<32x128xf32>, vector<8x128xf32> -> vector<8x128xf32>
    %cst_70 = arith.constant dense<0.000000e+00> : vector<8x128xf32>
    %346 = tpu.matmul %306, %5, %cst_70 {dimension_numbers = #tpu.dot_dimension_numbers<[1], [0], [0], [1], [0, 0, 1, 1], [], []>} : vector<8x32xf32>, vector<32x128xf32>, vector<8x128xf32> -> vector<8x128xf32>
    %347 = arith.addf %345, %346 : vector<8x128xf32>
    %348 = vector.broadcast %8 : vector<1x128xf32> to vector<8x128xf32>
    %349 = arith.addf %347, %348 : vector<8x128xf32>
    %350 = arith.negf %349 : vector<8x128xf32>
    %351 = math.exp %350 : vector<8x128xf32>
    %cst_71 = arith.constant 1.000000e+00 : f32
    %352 = vector.broadcast %cst_71 : f32 to vector<8x128xf32>
    %353 = arith.addf %352, %351 : vector<8x128xf32>
    %354 = arith.divf %352, %353 : vector<8x128xf32>
    %355 = vector.extract_strided_slice %349 {offsets = [0, 96], sizes = [8, 32], strides = [1, 1]} : vector<8x128xf32> to vector<8x32xf32>
    %356 = math.tanh %355 : vector<8x32xf32>
    %357 = vector.extract_strided_slice %354 {offsets = [0, 32], sizes = [8, 32], strides = [1, 1]} : vector<8x128xf32> to vector<8x32xf32>
    %358 = arith.mulf %357, %303 : vector<8x32xf32>
    %359 = vector.extract_strided_slice %354 {offsets = [0, 0], sizes = [8, 32], strides = [1, 1]} : vector<8x128xf32> to vector<8x32xf32>
    %360 = arith.mulf %359, %356 : vector<8x32xf32>
    %361 = arith.addf %358, %360 : vector<8x32xf32>
    %362 = vector.extract_strided_slice %354 {offsets = [0, 64], sizes = [8, 32], strides = [1, 1]} : vector<8x128xf32> to vector<8x32xf32>
    %363 = math.tanh %361 : vector<8x32xf32>
    %364 = arith.mulf %362, %363 : vector<8x32xf32>
    %365 = vector.extract_strided_slice %12 {offsets = [56, 0], sizes = [8, 128], strides = [1, 1]} : vector<64x128xf32> to vector<8x128xf32>
    %cst_72 = arith.constant dense<0.000000e+00> : vector<8x128xf32>
    %366 = tpu.matmul %324, %3, %cst_72 {dimension_numbers = #tpu.dot_dimension_numbers<[1], [0], [0], [1], [0, 0, 1, 1], [], []>} : vector<8x32xf32>, vector<32x128xf32>, vector<8x128xf32> -> vector<8x128xf32>
    %367 = arith.addf %365, %366 : vector<8x128xf32>
    %368 = arith.negf %367 : vector<8x128xf32>
    %369 = math.exp %368 : vector<8x128xf32>
    %cst_73 = arith.constant 1.000000e+00 : f32
    %370 = vector.broadcast %cst_73 : f32 to vector<8x128xf32>
    %371 = arith.addf %370, %369 : vector<8x128xf32>
    %372 = arith.divf %370, %371 : vector<8x128xf32>
    %373 = vector.extract_strided_slice %367 {offsets = [0, 96], sizes = [8, 32], strides = [1, 1]} : vector<8x128xf32> to vector<8x32xf32>
    %374 = math.tanh %373 : vector<8x32xf32>
    %375 = vector.extract_strided_slice %372 {offsets = [0, 32], sizes = [8, 32], strides = [1, 1]} : vector<8x128xf32> to vector<8x32xf32>
    %376 = arith.mulf %375, %321 : vector<8x32xf32>
    %377 = vector.extract_strided_slice %372 {offsets = [0, 0], sizes = [8, 32], strides = [1, 1]} : vector<8x128xf32> to vector<8x32xf32>
    %378 = arith.mulf %377, %374 : vector<8x32xf32>
    %379 = arith.addf %376, %378 : vector<8x32xf32>
    %380 = vector.extract_strided_slice %372 {offsets = [0, 64], sizes = [8, 32], strides = [1, 1]} : vector<8x128xf32> to vector<8x32xf32>
    %381 = math.tanh %379 : vector<8x32xf32>
    %382 = arith.mulf %380, %381 : vector<8x32xf32>
    %cst_74 = arith.constant dense<0.000000e+00> : vector<8x128xf32>
    %383 = tpu.matmul %324, %1, %cst_74 {dimension_numbers = #tpu.dot_dimension_numbers<[1], [0], [0], [1], [0, 0, 1, 1], [], []>} : vector<8x32xf32>, vector<32x128xf32>, vector<8x128xf32> -> vector<8x128xf32>
    %cst_75 = arith.constant dense<0.000000e+00> : vector<8x128xf32>
    %384 = tpu.matmul %344, %4, %cst_75 {dimension_numbers = #tpu.dot_dimension_numbers<[1], [0], [0], [1], [0, 0, 1, 1], [], []>} : vector<8x32xf32>, vector<32x128xf32>, vector<8x128xf32> -> vector<8x128xf32>
    %385 = arith.addf %383, %384 : vector<8x128xf32>
    %386 = vector.broadcast %7 : vector<1x128xf32> to vector<8x128xf32>
    %387 = arith.addf %385, %386 : vector<8x128xf32>
    %388 = arith.negf %387 : vector<8x128xf32>
    %389 = math.exp %388 : vector<8x128xf32>
    %cst_76 = arith.constant 1.000000e+00 : f32
    %390 = vector.broadcast %cst_76 : f32 to vector<8x128xf32>
    %391 = arith.addf %390, %389 : vector<8x128xf32>
    %392 = arith.divf %390, %391 : vector<8x128xf32>
    %393 = vector.extract_strided_slice %387 {offsets = [0, 96], sizes = [8, 32], strides = [1, 1]} : vector<8x128xf32> to vector<8x32xf32>
    %394 = math.tanh %393 : vector<8x32xf32>
    %395 = vector.extract_strided_slice %392 {offsets = [0, 32], sizes = [8, 32], strides = [1, 1]} : vector<8x128xf32> to vector<8x32xf32>
    %396 = arith.mulf %395, %341 : vector<8x32xf32>
    %397 = vector.extract_strided_slice %392 {offsets = [0, 0], sizes = [8, 32], strides = [1, 1]} : vector<8x128xf32> to vector<8x32xf32>
    %398 = arith.mulf %397, %394 : vector<8x32xf32>
    %399 = arith.addf %396, %398 : vector<8x32xf32>
    %400 = vector.extract_strided_slice %392 {offsets = [0, 64], sizes = [8, 32], strides = [1, 1]} : vector<8x128xf32> to vector<8x32xf32>
    %401 = math.tanh %399 : vector<8x32xf32>
    %402 = arith.mulf %400, %401 : vector<8x32xf32>
    %cst_77 = arith.constant dense<0.000000e+00> : vector<8x128xf32>
    %403 = tpu.matmul %344, %2, %cst_77 {dimension_numbers = #tpu.dot_dimension_numbers<[1], [0], [0], [1], [0, 0, 1, 1], [], []>} : vector<8x32xf32>, vector<32x128xf32>, vector<8x128xf32> -> vector<8x128xf32>
    %cst_78 = arith.constant dense<0.000000e+00> : vector<8x128xf32>
    %404 = tpu.matmul %364, %5, %cst_78 {dimension_numbers = #tpu.dot_dimension_numbers<[1], [0], [0], [1], [0, 0, 1, 1], [], []>} : vector<8x32xf32>, vector<32x128xf32>, vector<8x128xf32> -> vector<8x128xf32>
    %405 = arith.addf %403, %404 : vector<8x128xf32>
    %406 = vector.broadcast %8 : vector<1x128xf32> to vector<8x128xf32>
    %407 = arith.addf %405, %406 : vector<8x128xf32>
    %408 = arith.negf %407 : vector<8x128xf32>
    %409 = math.exp %408 : vector<8x128xf32>
    %cst_79 = arith.constant 1.000000e+00 : f32
    %410 = vector.broadcast %cst_79 : f32 to vector<8x128xf32>
    %411 = arith.addf %410, %409 : vector<8x128xf32>
    %412 = arith.divf %410, %411 : vector<8x128xf32>
    %413 = vector.extract_strided_slice %407 {offsets = [0, 96], sizes = [8, 32], strides = [1, 1]} : vector<8x128xf32> to vector<8x32xf32>
    %414 = math.tanh %413 : vector<8x32xf32>
    %415 = vector.extract_strided_slice %412 {offsets = [0, 32], sizes = [8, 32], strides = [1, 1]} : vector<8x128xf32> to vector<8x32xf32>
    %416 = arith.mulf %415, %361 : vector<8x32xf32>
    %417 = vector.extract_strided_slice %412 {offsets = [0, 0], sizes = [8, 32], strides = [1, 1]} : vector<8x128xf32> to vector<8x32xf32>
    %418 = arith.mulf %417, %414 : vector<8x32xf32>
    %419 = arith.addf %416, %418 : vector<8x32xf32>
    %420 = vector.extract_strided_slice %412 {offsets = [0, 64], sizes = [8, 32], strides = [1, 1]} : vector<8x128xf32> to vector<8x32xf32>
    %421 = math.tanh %419 : vector<8x32xf32>
    %422 = arith.mulf %420, %421 : vector<8x32xf32>
    %cst_80 = arith.constant dense<0.000000e+00> : vector<8x128xf32>
    %423 = tpu.matmul %382, %1, %cst_80 {dimension_numbers = #tpu.dot_dimension_numbers<[1], [0], [0], [1], [0, 0, 1, 1], [], []>} : vector<8x32xf32>, vector<32x128xf32>, vector<8x128xf32> -> vector<8x128xf32>
    %cst_81 = arith.constant dense<0.000000e+00> : vector<8x128xf32>
    %424 = tpu.matmul %402, %4, %cst_81 {dimension_numbers = #tpu.dot_dimension_numbers<[1], [0], [0], [1], [0, 0, 1, 1], [], []>} : vector<8x32xf32>, vector<32x128xf32>, vector<8x128xf32> -> vector<8x128xf32>
    %425 = arith.addf %423, %424 : vector<8x128xf32>
    %426 = vector.broadcast %7 : vector<1x128xf32> to vector<8x128xf32>
    %427 = arith.addf %425, %426 : vector<8x128xf32>
    %428 = arith.negf %427 : vector<8x128xf32>
    %429 = math.exp %428 : vector<8x128xf32>
    %cst_82 = arith.constant 1.000000e+00 : f32
    %430 = vector.broadcast %cst_82 : f32 to vector<8x128xf32>
    %431 = arith.addf %430, %429 : vector<8x128xf32>
    %432 = arith.divf %430, %431 : vector<8x128xf32>
    %433 = vector.extract_strided_slice %427 {offsets = [0, 96], sizes = [8, 32], strides = [1, 1]} : vector<8x128xf32> to vector<8x32xf32>
    %434 = math.tanh %433 : vector<8x32xf32>
    %435 = vector.extract_strided_slice %432 {offsets = [0, 32], sizes = [8, 32], strides = [1, 1]} : vector<8x128xf32> to vector<8x32xf32>
    %436 = arith.mulf %435, %399 : vector<8x32xf32>
    %437 = vector.extract_strided_slice %432 {offsets = [0, 0], sizes = [8, 32], strides = [1, 1]} : vector<8x128xf32> to vector<8x32xf32>
    %438 = arith.mulf %437, %434 : vector<8x32xf32>
    %439 = arith.addf %436, %438 : vector<8x32xf32>
    %440 = vector.extract_strided_slice %432 {offsets = [0, 64], sizes = [8, 32], strides = [1, 1]} : vector<8x128xf32> to vector<8x32xf32>
    %441 = math.tanh %439 : vector<8x32xf32>
    %442 = arith.mulf %440, %441 : vector<8x32xf32>
    %cst_83 = arith.constant dense<0.000000e+00> : vector<8x128xf32>
    %443 = tpu.matmul %402, %2, %cst_83 {dimension_numbers = #tpu.dot_dimension_numbers<[1], [0], [0], [1], [0, 0, 1, 1], [], []>} : vector<8x32xf32>, vector<32x128xf32>, vector<8x128xf32> -> vector<8x128xf32>
    %cst_84 = arith.constant dense<0.000000e+00> : vector<8x128xf32>
    %444 = tpu.matmul %422, %5, %cst_84 {dimension_numbers = #tpu.dot_dimension_numbers<[1], [0], [0], [1], [0, 0, 1, 1], [], []>} : vector<8x32xf32>, vector<32x128xf32>, vector<8x128xf32> -> vector<8x128xf32>
    %445 = arith.addf %443, %444 : vector<8x128xf32>
    %446 = vector.broadcast %8 : vector<1x128xf32> to vector<8x128xf32>
    %447 = arith.addf %445, %446 : vector<8x128xf32>
    %448 = arith.negf %447 : vector<8x128xf32>
    %449 = math.exp %448 : vector<8x128xf32>
    %cst_85 = arith.constant 1.000000e+00 : f32
    %450 = vector.broadcast %cst_85 : f32 to vector<8x128xf32>
    %451 = arith.addf %450, %449 : vector<8x128xf32>
    %452 = arith.divf %450, %451 : vector<8x128xf32>
    %453 = vector.extract_strided_slice %447 {offsets = [0, 96], sizes = [8, 32], strides = [1, 1]} : vector<8x128xf32> to vector<8x32xf32>
    %454 = math.tanh %453 : vector<8x32xf32>
    %455 = vector.extract_strided_slice %452 {offsets = [0, 32], sizes = [8, 32], strides = [1, 1]} : vector<8x128xf32> to vector<8x32xf32>
    %456 = arith.mulf %455, %419 : vector<8x32xf32>
    %457 = vector.extract_strided_slice %452 {offsets = [0, 0], sizes = [8, 32], strides = [1, 1]} : vector<8x128xf32> to vector<8x32xf32>
    %458 = arith.mulf %457, %454 : vector<8x32xf32>
    %459 = arith.addf %456, %458 : vector<8x32xf32>
    %460 = vector.extract_strided_slice %452 {offsets = [0, 64], sizes = [8, 32], strides = [1, 1]} : vector<8x128xf32> to vector<8x32xf32>
    %461 = math.tanh %459 : vector<8x32xf32>
    %462 = arith.mulf %460, %461 : vector<8x32xf32>
    %cst_86 = arith.constant dense<0.000000e+00> : vector<8x128xf32>
    %463 = tpu.matmul %442, %2, %cst_86 {dimension_numbers = #tpu.dot_dimension_numbers<[1], [0], [0], [1], [0, 0, 1, 1], [], []>} : vector<8x32xf32>, vector<32x128xf32>, vector<8x128xf32> -> vector<8x128xf32>
    %cst_87 = arith.constant dense<0.000000e+00> : vector<8x128xf32>
    %464 = tpu.matmul %462, %5, %cst_87 {dimension_numbers = #tpu.dot_dimension_numbers<[1], [0], [0], [1], [0, 0, 1, 1], [], []>} : vector<8x32xf32>, vector<32x128xf32>, vector<8x128xf32> -> vector<8x128xf32>
    %465 = arith.addf %463, %464 : vector<8x128xf32>
    %466 = vector.broadcast %8 : vector<1x128xf32> to vector<8x128xf32>
    %467 = arith.addf %465, %466 : vector<8x128xf32>
    %468 = arith.negf %467 : vector<8x128xf32>
    %469 = math.exp %468 : vector<8x128xf32>
    %cst_88 = arith.constant 1.000000e+00 : f32
    %470 = vector.broadcast %cst_88 : f32 to vector<8x128xf32>
    %471 = arith.addf %470, %469 : vector<8x128xf32>
    %472 = arith.divf %470, %471 : vector<8x128xf32>
    %473 = vector.extract_strided_slice %467 {offsets = [0, 96], sizes = [8, 32], strides = [1, 1]} : vector<8x128xf32> to vector<8x32xf32>
    %474 = math.tanh %473 : vector<8x32xf32>
    %475 = vector.extract_strided_slice %472 {offsets = [0, 32], sizes = [8, 32], strides = [1, 1]} : vector<8x128xf32> to vector<8x32xf32>
    %476 = arith.mulf %475, %459 : vector<8x32xf32>
    %477 = vector.extract_strided_slice %472 {offsets = [0, 0], sizes = [8, 32], strides = [1, 1]} : vector<8x128xf32> to vector<8x32xf32>
    %478 = arith.mulf %477, %474 : vector<8x32xf32>
    %479 = arith.addf %476, %478 : vector<8x32xf32>
    %480 = vector.extract_strided_slice %472 {offsets = [0, 64], sizes = [8, 32], strides = [1, 1]} : vector<8x128xf32> to vector<8x32xf32>
    %481 = math.tanh %479 : vector<8x32xf32>
    %482 = arith.mulf %480, %481 : vector<8x32xf32>
    %c0_89 = arith.constant 0 : index
    %c0_90 = arith.constant 0 : index
    %483 = vector.load %arg10[%c0_89, %c0_90] : memref<1x32xf32, #tpu.memory_space<vmem>>, vector<1x32xf32>
    %484 = vector.broadcast %483 : vector<1x32xf32> to vector<8x32xf32>
    %485 = arith.mulf %482, %484 : vector<8x32xf32>
    %cst_91 = arith.constant dense<0.000000e+00> : vector<8xf32>
    %486 = vector.multi_reduction <add>, %485, %cst_91 [1] : vector<8x32xf32> to vector<8xf32>
    %487 = vector.shape_cast %486 : vector<8xf32> to vector<8x1xf32>
    %c0_92 = arith.constant 0 : index
    %c0_93 = arith.constant 0 : index
    %488 = vector.load %arg11[%c0_92, %c0_93] : memref<1x1xf32, #tpu.memory_space<vmem>>, vector<1x1xf32>
    %489 = vector.broadcast %488 : vector<1x1xf32> to vector<8x1xf32>
    %490 = arith.addf %487, %489 : vector<8x1xf32>
    %c0_94 = arith.constant 0 : index
    %c0_95 = arith.constant 0 : index
    %491 = vector.load %arg12[%c0_94, %c0_95] : memref<8x1xf32, #tpu.memory_space<vmem>>, vector<8x1xf32>
    tpu.vector_store %arg12[%c0_94, %c0_95], %490 {strides = array<i32>} : memref<8x1xf32, #tpu.memory_space<vmem>>, vector<8x1xf32>,
    return
  }
}

</mosaic_0001>

<llo_original>
// kernel: lstm_model_forward.1
$region0: #{lstm_model_forward.1}
  #allocation0 [shape = 'u32[]', space=smem, size = 0x4, offset = 0x4, fixed_abs, tag = 'smem constant byte address 0x4 - core index']
  #allocation1 [shape = 'u32[144,128]{1,0:T(1,128)}', space=vmem, size = 0x12000, scoped, tag = 'internal scratch']
  #allocation2 [shape = 'f32[1,1]{1,0:T(1,128)S(1)}', space=vmem, size = 0x200, scoped, tag = 'scoped memory for lstm_model_forward.1']
  %s0 = inlined_call_operand.vmem [shape: f32[64,16], index: 0, kind: input, shape index: {}]
  %s1 = inlined_call_operand.hbm [shape: f32[16,128], index: 1, kind: input, shape index: {}]
  %s2 = inlined_call_operand.vmem [shape: f32[32,128], index: 2, kind: input, shape index: {}]
  %s3 = inlined_call_operand.vmem [shape: f32[1,128], index: 3, kind: input, shape index: {}]
  %s4 = inlined_call_operand.vmem [shape: f32[32,128], index: 4, kind: input, shape index: {}]
  %s5 = inlined_call_operand.vmem [shape: f32[32,128], index: 5, kind: input, shape index: {}]
  %s6 = inlined_call_operand.vmem [shape: f32[1,128], index: 6, kind: input, shape index: {}]
  %s7 = inlined_call_operand.vmem [shape: f32[32,128], index: 7, kind: input, shape index: {}]
  %s8 = inlined_call_operand.vmem [shape: f32[32,128], index: 8, kind: input, shape index: {}]
  %s9 = inlined_call_operand.vmem [shape: f32[1,128], index: 9, kind: input, shape index: {}]
  %s10 = inlined_call_operand.vmem [shape: f32[1,32], index: 10, kind: input, shape index: {}]
  %s11 = inlined_call_operand.<no memory space> [shape: f32[1,1], index: 11, kind: input, shape index: {}]
  %s12 = inlined_call_operand.vmem [shape: f32[8,1], index: 12, kind: output, shape index: {}]
  %s13 = sld [smem:[#allocation0]]
  $region62: #{lstm_model_forward.1} parent=0
    _
  %s15 = ssub.s32 1, %s13
  %s16 = scalar_select 0, %s15, %s13
  %v17 = vstv %s11
  %18 = vst [vmem:[#allocation2] sm:$0x1] %v17
  $region1: #{lstm_model_forward.1} parent=0
    #allocation3 [shape = 'u8[8192]{0}', space=vmem, size = 0x2000, scoped, tag = 'input window, operand 1, single buffered']
    #allocation4 [shape = 's32[1]{0}', space=sflag, size = 0x4, scoped, tag = 'scoped memory for lstm_model_forward.1']
    %19 = vsyncpa [#allocation4], 0
    // Predicated region
    $region2: #{lstm_model_forward.1} parent=1 // pred_check
      _
    $region3: #{lstm_model_forward.1} parent=1 // pred_check_branch
      %21 = sbr.rel (0) target = $region5
    $region4: #{lstm_model_forward.1} parent=1 // pred_region
      _
    $region5: #{lstm_model_forward.1} parent=1 // pred_fallthru
      _
    // Predicated region
    $region6: #{lstm_model_forward.1} parent=1 // pred_check
      _
    $region7: #{lstm_model_forward.1} parent=1 // pred_check_branch
      %23 = sbr.rel (0) target = $region9
    $region8: #{lstm_model_forward.1} parent=1 // pred_region
      %s25 = ssub.s32 256, 256
      %26 = vsyncadd [#allocation4], %s25
      %s27 = sshll.u32 [#allocation3], 4
      %s28 = int_to_ptr.vmem [resolvable:$true] %s27
      %33 = dma.hbm_to_vmem [thread:$0]  %s1, 256, %s28, [#allocation4], 128, 128, 8
    $region9: #{lstm_model_forward.1} parent=1 // pred_fallthru
      _
    // Predicated region
    $region10: #{lstm_model_forward.1} parent=1 // pred_check
      _
    $region11: #{lstm_model_forward.1} parent=1 // pred_check_branch
      %35 = sbr.rel (0) target = $region13
    $region12: #{lstm_model_forward.1} parent=1 // pred_region
      _
    $region13: #{lstm_model_forward.1} parent=1 // pred_fallthru
      _
    // Predicated region
    $region14: #{lstm_model_forward.1} parent=1 // pred_check
      _
    $region15: #{lstm_model_forward.1} parent=1 // pred_check_branch
      %37 = sbr.rel (0) target = $region17
    $region16: #{lstm_model_forward.1} parent=1 // pred_region
      _
    $region17: #{lstm_model_forward.1} parent=1 // pred_fallthru
      _
    // Predicated region
    $region18: #{lstm_model_forward.1} parent=1 // pred_check
      _
    $region19: #{lstm_model_forward.1} parent=1 // pred_check_branch
      %39 = sbr.rel (0) target = $region21
    $region20: #{lstm_model_forward.1} parent=1 // pred_region
      _
    $region21: #{lstm_model_forward.1} parent=1 // pred_fallthru
      _
    // Predicated region
    $region22: #{lstm_model_forward.1} parent=1 // pred_check
      _
    $region23: #{lstm_model_forward.1} parent=1 // pred_check_branch
      %41 = sbr.rel (0) target = $region25
    $region24: #{lstm_model_forward.1} parent=1 // pred_region
      _
    $region25: #{lstm_model_forward.1} parent=1 // pred_fallthru
      _
    // Predicated region
    $region26: #{lstm_model_forward.1} parent=1 // pred_check
      _
    $region27: #{lstm_model_forward.1} parent=1 // pred_check_branch
      %43 = sbr.rel (0) target = $region29
    $region28: #{lstm_model_forward.1} parent=1 // pred_region
      _
    $region29: #{lstm_model_forward.1} parent=1 // pred_fallthru
      _
    // Predicated region
    $region30: #{lstm_model_forward.1} parent=1 // pred_check
      _
    $region31: #{lstm_model_forward.1} parent=1 // pred_check_branch
      %45 = sbr.rel (0) target = $region33
    $region32: #{lstm_model_forward.1} parent=1 // pred_region
      _
    $region33: #{lstm_model_forward.1} parent=1 // pred_fallthru
      _
    // Predicated region
    $region34: #{lstm_model_forward.1} parent=1 // pred_check
      _
    $region35: #{lstm_model_forward.1} parent=1 // pred_check_branch
      %47 = sbr.rel (0) target = $region37
    $region36: #{lstm_model_forward.1} parent=1 // pred_region
      _
    $region37: #{lstm_model_forward.1} parent=1 // pred_fallthru
      _
    // Predicated region
    $region38: #{lstm_model_forward.1} parent=1 // pred_check
      _
    $region39: #{lstm_model_forward.1} parent=1 // pred_check_branch
      %49 = sbr.rel (0) target = $region41
    $region40: #{lstm_model_forward.1} parent=1 // pred_region
      _
    $region41: #{lstm_model_forward.1} parent=1 // pred_fallthru
      _
    // Predicated region
    $region42: #{lstm_model_forward.1} parent=1 // pred_check
      _
    $region43: #{lstm_model_forward.1} parent=1 // pred_check_branch
      %51 = sbr.rel (0) target = $region45
    $region44: #{lstm_model_forward.1} parent=1 // pred_region
      _
    $region45: #{lstm_model_forward.1} parent=1 // pred_fallthru
      _
    // Predicated region
    $region46: #{lstm_model_forward.1} parent=1 // pred_check
      _
    $region47: #{lstm_model_forward.1} parent=1 // pred_check_branch
      %53 = sbr.rel (0) target = $region49
    $region48: #{lstm_model_forward.1} parent=1 // pred_region
      _
    $region49: #{lstm_model_forward.1} parent=1 // pred_fallthru
      _
    // Predicated region
    $region50: #{lstm_model_forward.1} parent=1 // pred_check
      _
    $region51: #{lstm_model_forward.1} parent=1 // pred_check_branch
      %55 = sbr.rel (0) target = $region53
    $region52: #{lstm_model_forward.1} parent=1 // pred_region
      %56 = dma.done [#allocation4], 256
    $region53: #{lstm_model_forward.1} parent=1 // pred_fallthru
      _
    %v57 = vld [vmem:[#allocation3] sm:$0xff]
    %v58 = vld [vmem:[#allocation3 + $0x8] sm:$0xff]
    %v59 = vld [vmem:[%s4] sm:$0xff]
    %v60 = vld [vmem:[%s4 + $0x8] sm:$0xff]
    %v61 = vld [vmem:[%s4 + $0x10] sm:$0xff]
    %v62 = vld [vmem:[%s4 + $0x18] sm:$0xff]
    %v63 = vld [vmem:[%s7] sm:$0xff]
    %v64 = vld [vmem:[%s7 + $0x8] sm:$0xff]
    %v65 = vld [vmem:[%s7 + $0x10] sm:$0xff]
    %v66 = vld [vmem:[%s7 + $0x18] sm:$0xff]
    %v67 = vld [vmem:[%s2] sm:$0xff]
    %v68 = vld [vmem:[%s2 + $0x8] sm:$0xff]
    %v69 = vld [vmem:[%s2 + $0x10] sm:$0xff]
    %v70 = vld [vmem:[%s2 + $0x18] sm:$0xff]
    %v71 = vld [vmem:[%s5] sm:$0xff]
    %v72 = vld [vmem:[%s5 + $0x8] sm:$0xff]
    %v73 = vld [vmem:[%s5 + $0x10] sm:$0xff]
    %v74 = vld [vmem:[%s5 + $0x18] sm:$0xff]
    %v75 = vld [vmem:[%s8] sm:$0xff]
    %v76 = vld [vmem:[%s8 + $0x8] sm:$0xff]
    %v77 = vld [vmem:[%s8 + $0x10] sm:$0xff]
    %v78 = vld [vmem:[%s8 + $0x18] sm:$0xff]
    %v79 = vld [vmem:[%s3] sm:$0x1]
    %v80 = vld [vmem:[%s6] sm:$0x1]
    %v81 = vld [vmem:[%s9] sm:$0x1]
    %v82 = vld [vmem:[%s0] sm:$0xff]
    %v83 = vld [vmem:[%s0 + $0x8] sm:$0xff]
    %v84 = vld [vmem:[%s0 + $0x10] sm:$0xff]
    %v85 = vld [vmem:[%s0 + $0x18] sm:$0xff]
    %v86 = vld [vmem:[%s0 + $0x20] sm:$0xff]
    %v87 = vld [vmem:[%s0 + $0x28] sm:$0xff]
    %v88 = vld [vmem:[%s0 + $0x30] sm:$0xff]
    %v89 = vld [vmem:[%s0 + $0x38] sm:$0xff]
    %v91 = vlaneseq
    %v92 = vshrl.u32 %v91, 7
    %v93 = vsub.s32 0, %v92
    %v94 = vrot.slane %v79, %v93
    %vm96 = vcmask 130048
    %v98 = vsel %vm96, %v82, 0
    %v101 = vsel %vm96, %v83, 0
    %v104 = vsel %vm96, %v84, 0
    %v107 = vsel %vm96, %v85, 0
    %v110 = vsel %vm96, %v86, 0
    %v113 = vsel %vm96, %v87, 0
    %v116 = vsel %vm96, %v88, 0
    %v119 = vsel %vm96, %v89, 0
    %121 = vmatprep.subr.mxu0 0.0
    %122 = vmatpush1.msra.mxu0 %v57
    %123 = vmatprep.subr.mxu0 0.0
    %124 = vmatpush1.msra.mxu0 %v58
    %125 = vmatprep.subr.mxu0 0.0
    %126 = vmatpush1.msra.mxu0 0.0
    %127 = vmatprep.subr.mxu0 0.0
    %128 = vmatpush1.msra.mxu0 0.0
    %129 = vmatprep.subr.mxu0 0.0
    %130 = vmatpush1.msra.mxu0 0.0
    %131 = vmatprep.subr.mxu0 0.0
    %132 = vmatpush1.msra.mxu0 0.0
    %133 = vmatprep.subr.mxu0 0.0
    %134 = vmatpush1.msra.mxu0 0.0
    %135 = vmatprep.subr.mxu0 0.0
    %136 = vmatpush1.msra.mxu0 0.0
    %137 = vmatprep.subr.mxu0 0.0
    %138 = vmatpush1.msra.mxu0 0.0
    %139 = vmatprep.subr.mxu0 0.0
    %140 = vmatpush1.msra.mxu0 0.0
    %141 = vmatprep.subr.mxu0 0.0
    %142 = vmatpush1.msra.mxu0 0.0
    %143 = vmatprep.subr.mxu0 0.0
    %144 = vmatpush1.msra.mxu0 0.0
    %145 = vmatprep.subr.mxu0 0.0
    %146 = vmatpush1.msra.mxu0 0.0
    %147 = vmatprep.subr.mxu0 0.0
    %148 = vmatpush1.msra.mxu0 0.0
    %149 = vmatprep.subr.mxu0 0.0
    %150 = vmatpush1.msra.mxu0 0.0
    %151 = vmatprep.subr.mxu0 0.0
    %152 = vmatpush1.msra.mxu0 0.0
    %153 = vmatprep.subr.mxu0 0.0
    %154 = vmatpush1.msra.mxu0 0.0
    %155 = vmatprep.subr.mxu0 0.0
    %156 = vmatpush1.msra.mxu0 0.0
    %157 = vmatprep.subr.mxu0 0.0
    %158 = vmatpush1.msra.mxu0 0.0
    %159 = vmatprep.subr.mxu0 0.0
    %160 = vmatpush1.msra.mxu0 0.0
    %161 = vmatprep.subr.mxu0 0.0
    %162 = vmatpush1.msra.mxu0 0.0
    %163 = vmatprep.subr.mxu0 0.0
    %164 = vmatpush1.msra.mxu0 0.0
    %165 = vmatprep.subr.mxu0 0.0
    %166 = vmatpush1.msra.mxu0 0.0
    %167 = vmatprep.subr.mxu0 0.0
    %168 = vmatpush1.msra.mxu0 0.0
    %169 = vmatprep.subr.mxu0 0.0
    %170 = vmatpush1.msra.mxu0 0.0
    %171 = vmatprep.subr.mxu0 0.0
    %172 = vmatpush1.msra.mxu0 0.0
    %173 = vmatprep.subr.mxu0 0.0
    %174 = vmatpush1.msra.mxu0 0.0
    %175 = vmatprep.subr.mxu0 0.0
    %176 = vmatpush1.msra.mxu0 0.0
    %177 = vmatprep.subr.mxu0 0.0
    %178 = vmatpush1.msra.mxu0 0.0
    %179 = vmatprep.subr.mxu0 0.0
    %180 = vmatpush1.msra.mxu0 0.0
    %181 = vmatprep.subr.mxu0 0.0
    %182 = vmatpush1.msra.mxu0 0.0
    %183 = vmatprep.subr.mxu0 0.0
    %184 = vmatpush1.msra.mxu0 0.0
    %185 = vmatprep.mubr.f32.mxu0 0.0
    %186 = vmatmul.mubr.f32.gmra.mrb[0].mxu0 %v98
    %v187 = vpop.f32.mrb[0].mxu0
    %v188 = vadd.f32 %v94, %v187
    %v189 = vpop.f32.mrb[0].mxu0
    %190 = vmatprep.mubr.f32.mxu0 0.0
    %191 = vmatmul.mubr.f32.gmra.mrb[0].mxu0 %v101
    %v192 = vpop.f32.mrb[0].mxu0
    %v193 = vadd.f32 %v94, %v192
    %v194 = vpop.f32.mrb[0].mxu0
    %195 = vmatprep.mubr.f32.mxu0 0.0
    %196 = vmatmul.mubr.f32.gmra.mrb[0].mxu0 %v104
    %v197 = vpop.f32.mrb[0].mxu0
    %v198 = vadd.f32 %v94, %v197
    %v199 = vpop.f32.mrb[0].mxu0
    %200 = vmatprep.mubr.f32.mxu0 0.0
    %201 = vmatmul.mubr.f32.gmra.mrb[0].mxu0 %v107
    %v202 = vpop.f32.mrb[0].mxu0
    %v203 = vadd.f32 %v94, %v202
    %v204 = vpop.f32.mrb[0].mxu0
    %205 = vmatprep.mubr.f32.mxu0 0.0
    %206 = vmatmul.mubr.f32.gmra.mrb[0].mxu0 %v110
    %v207 = vpop.f32.mrb[0].mxu0
    %v208 = vadd.f32 %v94, %v207
    %v209 = vpop.f32.mrb[0].mxu0
    %210 = vmatprep.mubr.f32.mxu0 0.0
    %211 = vmatmul.mubr.f32.gmra.mrb[0].mxu0 %v113
    %v212 = vpop.f32.mrb[0].mxu0
    %v213 = vadd.f32 %v94, %v212
    %v214 = vpop.f32.mrb[0].mxu0
    %215 = vmatprep.mubr.f32.mxu0 0.0
    %216 = vmatmul.mubr.f32.gmra.mrb[0].mxu0 %v116
    %v217 = vpop.f32.mrb[0].mxu0
    %v218 = vadd.f32 %v94, %v217
    %v219 = vpop.f32.mrb[0].mxu0
    %220 = vmatprep.mubr.f32.mxu0 0.0
    %221 = vmatmul.mubr.f32.gmra.mrb[0].mxu0 %v119
    %v222 = vpop.f32.mrb[0].mxu0
    %v223 = vadd.f32 %v94, %v222
    %v224 = vpop.f32.mrb[0].mxu0
    %225 = vdwg.mxu0
    %vm226 = vcmask 261120
    %v228 = vsel %vm226, 0.0, 0
    %230 = vmatprep.subr.mxu0 0.0
    %231 = vmatpush1.msra.mxu0 %v67
    %232 = vmatprep.subr.mxu0 0.0
    %233 = vmatpush1.msra.mxu0 %v68
    %234 = vmatprep.subr.mxu0 0.0
    %235 = vmatpush1.msra.mxu0 %v69
    %236 = vmatprep.subr.mxu0 0.0
    %237 = vmatpush1.msra.mxu0 %v70
    %238 = vmatprep.subr.mxu0 0.0
    %239 = vmatpush1.msra.mxu0 0.0
    %240 = vmatprep.subr.mxu0 0.0
    %241 = vmatpush1.msra.mxu0 0.0
    %242 = vmatprep.subr.mxu0 0.0
    %243 = vmatpush1.msra.mxu0 0.0
    %244 = vmatprep.subr.mxu0 0.0
    %245 = vmatpush1.msra.mxu0 0.0
    %246 = vmatprep.subr.mxu0 0.0
    %247 = vmatpush1.msra.mxu0 0.0
    %248 = vmatprep.subr.mxu0 0.0
    %249 = vmatpush1.msra.mxu0 0.0
    %250 = vmatprep.subr.mxu0 0.0
    %251 = vmatpush1.msra.mxu0 0.0
    %252 = vmatprep.subr.mxu0 0.0
    %253 = vmatpush1.msra.mxu0 0.0
    %254 = vmatprep.subr.mxu0 0.0
    %255 = vmatpush1.msra.mxu0 0.0
    %256 = vmatprep.subr.mxu0 0.0
    %257 = vmatpush1.msra.mxu0 0.0
    %258 = vmatprep.subr.mxu0 0.0
    %259 = vmatpush1.msra.mxu0 0.0
    %260 = vmatprep.subr.mxu0 0.0
    %261 = vmatpush1.msra.mxu0 0.0
    %262 = vmatprep.subr.mxu0 0.0
    %263 = vmatpush1.msra.mxu0 0.0
    %264 = vmatprep.subr.mxu0 0.0
    %265 = vmatpush1.msra.mxu0 0.0
    %266 = vmatprep.subr.mxu0 0.0
    %267 = vmatpush1.msra.mxu0 0.0
    %268 = vmatprep.subr.mxu0 0.0
    %269 = vmatpush1.msra.mxu0 0.0
    %270 = vmatprep.subr.mxu0 0.0
    %271 = vmatpush1.msra.mxu0 0.0
    %272 = vmatprep.subr.mxu0 0.0
    %273 = vmatpush1.msra.mxu0 0.0
    %274 = vmatprep.subr.mxu0 0.0
    %275 = vmatpush1.msra.mxu0 0.0
    %276 = vmatprep.subr.mxu0 0.0
    %277 = vmatpush1.msra.mxu0 0.0
    %278 = vmatprep.subr.mxu0 0.0
    %279 = vmatpush1.msra.mxu0 0.0
    %280 = vmatprep.subr.mxu0 0.0
    %281 = vmatpush1.msra.mxu0 0.0
    %282 = vmatprep.subr.mxu0 0.0
    %283 = vmatpush1.msra.mxu0 0.0
    %284 = vmatprep.subr.mxu0 0.0
    %285 = vmatpush1.msra.mxu0 0.0
    %286 = vmatprep.subr.mxu0 0.0
    %287 = vmatpush1.msra.mxu0 0.0
    %288 = vmatprep.subr.mxu0 0.0
    %289 = vmatpush1.msra.mxu0 0.0
    %290 = vmatprep.subr.mxu0 0.0
    %291 = vmatpush1.msra.mxu0 0.0
    %292 = vmatprep.subr.mxu0 0.0
    %293 = vmatpush1.msra.mxu0 0.0
    %294 = vmatprep.mubr.f32.mxu0 0.0
    %295 = vmatmul.mubr.f32.gmra.mrb[0].mxu0 %v228
    %v296 = vpop.f32.mrb[0].mxu0
    %v297 = vadd.f32 0.0, %v296
    %v298 = vpop.f32.mrb[0].mxu0
    %299 = vdwg.mxu0
    %v300 = vadd.f32 %v188, %v297
    %v301 = vxor.u32 %v300, 2147483648
    %v302 = vmul.f32 %v301, 1.442695
    %v303 = vpow.pop %v302
    %v304 = vadd.f32 %v303, 1.0
    %v305 = vrcp.pop %v304
    %v306 = vmul.f32 1.0, %v305
    %v307 = vtanh.pop %v300
    %v308 = vmul.f32 %v306, 0.0
    %310 = vrot.lane.b32.xlu0 %v307, 32
    %v311 = vpop.permute.xlu0 %310
    %v313 = vmul.f32 %v306, %v311
    %315 = vrot.lane.b32.xlu0 %v313, 32
    %v316 = vpop.permute.xlu0 %315
    %v318 = vadd.f32 %v308, %v316
    %v319 = vtanh.pop %v318
    %321 = vrot.lane.b32.xlu0 %v319, 32
    %v322 = vpop.permute.xlu0 %321
    %v324 = vmul.f32 %v306, %v322
    %326 = vrot.lane.b32.xlu0 %v324, 64
    %v327 = vpop.permute.xlu0 %326
    %v328 = vsel %vm226, %v327, 0
    %330 = vmatprep.subr.mxu0 0.0
    %331 = vmatpush1.msra.mxu0 %v67
    %332 = vmatprep.subr.mxu0 0.0
    %333 = vmatpush1.msra.mxu0 %v68
    %334 = vmatprep.subr.mxu0 0.0
    %335 = vmatpush1.msra.mxu0 %v69
    %336 = vmatprep.subr.mxu0 0.0
    %337 = vmatpush1.msra.mxu0 %v70
    %338 = vmatprep.subr.mxu0 0.0
    %339 = vmatpush1.msra.mxu0 0.0
    %340 = vmatprep.subr.mxu0 0.0
    %341 = vmatpush1.msra.mxu0 0.0
    %342 = vmatprep.subr.mxu0 0.0
    %343 = vmatpush1.msra.mxu0 0.0
    %344 = vmatprep.subr.mxu0 0.0
    %345 = vmatpush1.msra.mxu0 0.0
    %346 = vmatprep.subr.mxu0 0.0
    %347 = vmatpush1.msra.mxu0 0.0
    %348 = vmatprep.subr.mxu0 0.0
    %349 = vmatpush1.msra.mxu0 0.0
    %350 = vmatprep.subr.mxu0 0.0
    %351 = vmatpush1.msra.mxu0 0.0
    %352 = vmatprep.subr.mxu0 0.0
    %353 = vmatpush1.msra.mxu0 0.0
    %354 = vmatprep.subr.mxu0 0.0
    %355 = vmatpush1.msra.mxu0 0.0
    %356 = vmatprep.subr.mxu0 0.0
    %357 = vmatpush1.msra.mxu0 0.0
    %358 = vmatprep.subr.mxu0 0.0
    %359 = vmatpush1.msra.mxu0 0.0
    %360 = vmatprep.subr.mxu0 0.0
    %361 = vmatpush1.msra.mxu0 0.0
    %362 = vmatprep.subr.mxu0 0.0
    %363 = vmatpush1.msra.mxu0 0.0
    %364 = vmatprep.subr.mxu0 0.0
    %365 = vmatpush1.msra.mxu0 0.0
    %366 = vmatprep.subr.mxu0 0.0
    %367 = vmatpush1.msra.mxu0 0.0
    %368 = vmatprep.subr.mxu0 0.0
    %369 = vmatpush1.msra.mxu0 0.0
    %370 = vmatprep.subr.mxu0 0.0
    %371 = vmatpush1.msra.mxu0 0.0
    %372 = vmatprep.subr.mxu0 0.0
    %373 = vmatpush1.msra.mxu0 0.0
    %374 = vmatprep.subr.mxu0 0.0
    %375 = vmatpush1.msra.mxu0 0.0
    %376 = vmatprep.subr.mxu0 0.0
    %377 = vmatpush1.msra.mxu0 0.0
    %378 = vmatprep.subr.mxu0 0.0
    %379 = vmatpush1.msra.mxu0 0.0
    %380 = vmatprep.subr.mxu0 0.0
    %381 = vmatpush1.msra.mxu0 0.0
    %382 = vmatprep.subr.mxu0 0.0
    %383 = vmatpush1.msra.mxu0 0.0
    %384 = vmatprep.subr.mxu0 0.0
    %385 = vmatpush1.msra.mxu0 0.0
    %386 = vmatprep.subr.mxu0 0.0
    %387 = vmatpush1.msra.mxu0 0.0
    %388 = vmatprep.subr.mxu0 0.0
    %389 = vmatpush1.msra.mxu0 0.0
    %390 = vmatprep.subr.mxu0 0.0
    %391 = vmatpush1.msra.mxu0 0.0
    %392 = vmatprep.subr.mxu0 0.0
    %393 = vmatpush1.msra.mxu0 0.0
    %394 = vmatprep.mubr.f32.mxu0 0.0
    %395 = vmatmul.mubr.f32.gmra.mrb[0].mxu0 %v328
    %v396 = vpop.f32.mrb[0].mxu0
    %v397 = vadd.f32 0.0, %v396
    %v398 = vpop.f32.mrb[0].mxu0
    %399 = vdwg.mxu0
    %v400 = vadd.f32 %v193, %v397
    %v401 = vxor.u32 %v400, 2147483648
    %v402 = vmul.f32 %v401, 1.442695
    %v403 = vpow.pop %v402
    %v404 = vadd.f32 %v403, 1.0
    %v405 = vrcp.pop %v404
    %v406 = vmul.f32 1.0, %v405
    %v407 = vtanh.pop %v400
    %v408 = vmul.f32 %v406, %v318
    %410 = vrot.lane.b32.xlu0 %v407, 32
    %v411 = vpop.permute.xlu0 %410
    %v413 = vmul.f32 %v406, %v411
    %415 = vrot.lane.b32.xlu0 %v413, 32
    %v416 = vpop.permute.xlu0 %415
    %v418 = vadd.f32 %v408, %v416
    %v419 = vtanh.pop %v418
    %421 = vrot.lane.b32.xlu0 %v419, 32
    %v422 = vpop.permute.xlu0 %421
    %v424 = vmul.f32 %v406, %v422
    %425 = vmatprep.subr.mxu0 0.0
    %426 = vmatpush1.msra.mxu0 %v71
    %427 = vmatprep.subr.mxu0 0.0
    %428 = vmatpush1.msra.mxu0 %v72
    %429 = vmatprep.subr.mxu0 0.0
    %430 = vmatpush1.msra.mxu0 %v73
    %431 = vmatprep.subr.mxu0 0.0
    %432 = vmatpush1.msra.mxu0 %v74
    %433 = vmatprep.subr.mxu0 0.0
    %434 = vmatpush1.msra.mxu0 0.0
    %435 = vmatprep.subr.mxu0 0.0
    %436 = vmatpush1.msra.mxu0 0.0
    %437 = vmatprep.subr.mxu0 0.0
    %438 = vmatpush1.msra.mxu0 0.0
    %439 = vmatprep.subr.mxu0 0.0
    %440 = vmatpush1.msra.mxu0 0.0
    %441 = vmatprep.subr.mxu0 0.0
    %442 = vmatpush1.msra.mxu0 0.0
    %443 = vmatprep.subr.mxu0 0.0
    %444 = vmatpush1.msra.mxu0 0.0
    %445 = vmatprep.subr.mxu0 0.0
    %446 = vmatpush1.msra.mxu0 0.0
    %447 = vmatprep.subr.mxu0 0.0
    %448 = vmatpush1.msra.mxu0 0.0
    %449 = vmatprep.subr.mxu0 0.0
    %450 = vmatpush1.msra.mxu0 0.0
    %451 = vmatprep.subr.mxu0 0.0
    %452 = vmatpush1.msra.mxu0 0.0
    %453 = vmatprep.subr.mxu0 0.0
    %454 = vmatpush1.msra.mxu0 0.0
    %455 = vmatprep.subr.mxu0 0.0
    %456 = vmatpush1.msra.mxu0 0.0
    %457 = vmatprep.subr.mxu0 0.0
    %458 = vmatpush1.msra.mxu0 0.0
    %459 = vmatprep.subr.mxu0 0.0
    %460 = vmatpush1.msra.mxu0 0.0
    %461 = vmatprep.subr.mxu0 0.0
    %462 = vmatpush1.msra.mxu0 0.0
    %463 = vmatprep.subr.mxu0 0.0
    %464 = vmatpush1.msra.mxu0 0.0
    %465 = vmatprep.subr.mxu0 0.0
    %466 = vmatpush1.msra.mxu0 0.0
    %467 = vmatprep.subr.mxu0 0.0
    %468 = vmatpush1.msra.mxu0 0.0
    %469 = vmatprep.subr.mxu0 0.0
    %470 = vmatpush1.msra.mxu0 0.0
    %471 = vmatprep.subr.mxu0 0.0
    %472 = vmatpush1.msra.mxu0 0.0
    %473 = vmatprep.subr.mxu0 0.0
    %474 = vmatpush1.msra.mxu0 0.0
    %475 = vmatprep.subr.mxu0 0.0
    %476 = vmatpush1.msra.mxu0 0.0
    %477 = vmatprep.subr.mxu0 0.0
    %478 = vmatpush1.msra.mxu0 0.0
    %479 = vmatprep.subr.mxu0 0.0
    %480 = vmatpush1.msra.mxu0 0.0
    %481 = vmatprep.subr.mxu0 0.0
    %482 = vmatpush1.msra.mxu0 0.0
    %483 = vmatprep.subr.mxu0 0.0
    %484 = vmatpush1.msra.mxu0 0.0
    %485 = vmatprep.subr.mxu0 0.0
    %486 = vmatpush1.msra.mxu0 0.0
    %487 = vmatprep.subr.mxu0 0.0
    %488 = vmatpush1.msra.mxu0 0.0
    %489 = vmatprep.mubr.f32.mxu0 0.0
    %490 = vmatmul.mubr.f32.gmra.mrb[0].mxu0 %v228
    %v491 = vpop.f32.mrb[0].mxu0
    %v492 = vadd.f32 0.0, %v491
    %v493 = vpop.f32.mrb[0].mxu0
    %494 = vdwg.mxu0
    %495 = vmatprep.subr.mxu0 0.0
    %496 = vmatpush1.msra.mxu0 %v59
    %497 = vmatprep.subr.mxu0 0.0
    %498 = vmatpush1.msra.mxu0 %v60
    %499 = vmatprep.subr.mxu0 0.0
    %500 = vmatpush1.msra.mxu0 %v61
    %501 = vmatprep.subr.mxu0 0.0
    %502 = vmatpush1.msra.mxu0 %v62
    %503 = vmatprep.subr.mxu0 0.0
    %504 = vmatpush1.msra.mxu0 0.0
    %505 = vmatprep.subr.mxu0 0.0
    %506 = vmatpush1.msra.mxu0 0.0
    %507 = vmatprep.subr.mxu0 0.0
    %508 = vmatpush1.msra.mxu0 0.0
    %509 = vmatprep.subr.mxu0 0.0
    %510 = vmatpush1.msra.mxu0 0.0
    %511 = vmatprep.subr.mxu0 0.0
    %512 = vmatpush1.msra.mxu0 0.0
    %513 = vmatprep.subr.mxu0 0.0
    %514 = vmatpush1.msra.mxu0 0.0
    %515 = vmatprep.subr.mxu0 0.0
    %516 = vmatpush1.msra.mxu0 0.0
    %517 = vmatprep.subr.mxu0 0.0
    %518 = vmatpush1.msra.mxu0 0.0
    %519 = vmatprep.subr.mxu0 0.0
    %520 = vmatpush1.msra.mxu0 0.0
    %521 = vmatprep.subr.mxu0 0.0
    %522 = vmatpush1.msra.mxu0 0.0
    %523 = vmatprep.subr.mxu0 0.0
    %524 = vmatpush1.msra.mxu0 0.0
    %525 = vmatprep.subr.mxu0 0.0
    %526 = vmatpush1.msra.mxu0 0.0
    %527 = vmatprep.subr.mxu0 0.0
    %528 = vmatpush1.msra.mxu0 0.0
    %529 = vmatprep.subr.mxu0 0.0
    %530 = vmatpush1.msra.mxu0 0.0
    %531 = vmatprep.subr.mxu0 0.0
    %532 = vmatpush1.msra.mxu0 0.0
    %533 = vmatprep.subr.mxu0 0.0
    %534 = vmatpush1.msra.mxu0 0.0
    %535 = vmatprep.subr.mxu0 0.0
    %536 = vmatpush1.msra.mxu0 0.0
    %537 = vmatprep.subr.mxu0 0.0
    %538 = vmatpush1.msra.mxu0 0.0
    %539 = vmatprep.subr.mxu0 0.0
    %540 = vmatpush1.msra.mxu0 0.0
    %541 = vmatprep.subr.mxu0 0.0
    %542 = vmatpush1.msra.mxu0 0.0
    %543 = vmatprep.subr.mxu0 0.0
    %544 = vmatpush1.msra.mxu0 0.0
    %545 = vmatprep.subr.mxu0 0.0
    %546 = vmatpush1.msra.mxu0 0.0
    %547 = vmatprep.subr.mxu0 0.0
    %548 = vmatpush1.msra.mxu0 0.0
    %549 = vmatprep.subr.mxu0 0.0
    %550 = vmatpush1.msra.mxu0 0.0
    %551 = vmatprep.subr.mxu0 0.0
    %552 = vmatpush1.msra.mxu0 0.0
    %553 = vmatprep.subr.mxu0 0.0
    %554 = vmatpush1.msra.mxu0 0.0
    %555 = vmatprep.subr.mxu0 0.0
    %556 = vmatpush1.msra.mxu0 0.0
    %557 = vmatprep.subr.mxu0 0.0
    %558 = vmatpush1.msra.mxu0 0.0
    %559 = vmatprep.mubr.f32.mxu0 0.0
    %560 = vmatmul.mubr.f32.gmra.mrb[0].mxu0 %v328
    %v561 = vpop.f32.mrb[0].mxu0
    %v562 = vadd.f32 %v492, %v561
    %v563 = vpop.f32.mrb[0].mxu0
    %564 = vdwg.mxu0
    %v566 = vlaneseq
    %v567 = vshrl.u32 %v566, 7
    %v568 = vsub.s32 0, %v567
    %v569 = vrot.slane %v80, %v568
    %v571 = vadd.f32 %v562, %v569
    %v572 = vxor.u32 %v571, 2147483648
    %v573 = vmul.f32 %v572, 1.442695
    %v574 = vpow.pop %v573
    %v575 = vadd.f32 %v574, 1.0
    %v576 = vrcp.pop %v575
    %v577 = vmul.f32 1.0, %v576
    %v578 = vtanh.pop %v571
    %v579 = vmul.f32 %v577, 0.0
    %581 = vrot.lane.b32.xlu0 %v578, 32
    %v582 = vpop.permute.xlu0 %581
    %v584 = vmul.f32 %v577, %v582
    %586 = vrot.lane.b32.xlu0 %v584, 32
    %v587 = vpop.permute.xlu0 %586
    %v589 = vadd.f32 %v579, %v587
    %v590 = vtanh.pop %v589
    %592 = vrot.lane.b32.xlu0 %v590, 32
    %v593 = vpop.permute.xlu0 %592
    %v595 = vmul.f32 %v577, %v593
    %597 = vrot.lane.b32.xlu0 %v424, 64
    %v598 = vpop.permute.xlu0 %597
    %v599 = vsel %vm226, %v598, 0
    %601 = vmatprep.subr.mxu0 0.0
    %602 = vmatpush1.msra.mxu0 %v67
    %603 = vmatprep.subr.mxu0 0.0
    %604 = vmatpush1.msra.mxu0 %v68
    %605 = vmatprep.subr.mxu0 0.0
    %606 = vmatpush1.msra.mxu0 %v69
    %607 = vmatprep.subr.mxu0 0.0
    %608 = vmatpush1.msra.mxu0 %v70
    %609 = vmatprep.subr.mxu0 0.0
    %610 = vmatpush1.msra.mxu0 0.0
    %611 = vmatprep.subr.mxu0 0.0
    %612 = vmatpush1.msra.mxu0 0.0
    %613 = vmatprep.subr.mxu0 0.0
    %614 = vmatpush1.msra.mxu0 0.0
    %615 = vmatprep.subr.mxu0 0.0
    %616 = vmatpush1.msra.mxu0 0.0
    %617 = vmatprep.subr.mxu0 0.0
    %618 = vmatpush1.msra.mxu0 0.0
    %619 = vmatprep.subr.mxu0 0.0
    %620 = vmatpush1.msra.mxu0 0.0
    %621 = vmatprep.subr.mxu0 0.0
    %622 = vmatpush1.msra.mxu0 0.0
    %623 = vmatprep.subr.mxu0 0.0
    %624 = vmatpush1.msra.mxu0 0.0
    %625 = vmatprep.subr.mxu0 0.0
    %626 = vmatpush1.msra.mxu0 0.0
    %627 = vmatprep.subr.mxu0 0.0
    %628 = vmatpush1.msra.mxu0 0.0
    %629 = vmatprep.subr.mxu0 0.0
    %630 = vmatpush1.msra.mxu0 0.0
    %631 = vmatprep.subr.mxu0 0.0
    %632 = vmatpush1.msra.mxu0 0.0
    %633 = vmatprep.subr.mxu0 0.0
    %634 = vmatpush1.msra.mxu0 0.0
    %635 = vmatprep.subr.mxu0 0.0
    %636 = vmatpush1.msra.mxu0 0.0
    %637 = vmatprep.subr.mxu0 0.0
    %638 = vmatpush1.msra.mxu0 0.0
    %639 = vmatprep.subr.mxu0 0.0
    %640 = vmatpush1.msra.mxu0 0.0
    %641 = vmatprep.subr.mxu0 0.0
    %642 = vmatpush1.msra.mxu0 0.0
    %643 = vmatprep.subr.mxu0 0.0
    %644 = vmatpush1.msra.mxu0 0.0
    %645 = vmatprep.subr.mxu0 0.0
    %646 = vmatpush1.msra.mxu0 0.0
    %647 = vmatprep.subr.mxu0 0.0
    %648 = vmatpush1.msra.mxu0 0.0
    %649 = vmatprep.subr.mxu0 0.0
    %650 = vmatpush1.msra.mxu0 0.0
    %651 = vmatprep.subr.mxu0 0.0
    %652 = vmatpush1.msra.mxu0 0.0
    %653 = vmatprep.subr.mxu0 0.0
    %654 = vmatpush1.msra.mxu0 0.0
    %655 = vmatprep.subr.mxu0 0.0
    %656 = vmatpush1.msra.mxu0 0.0
    %657 = vmatprep.subr.mxu0 0.0
    %658 = vmatpush1.msra.mxu0 0.0
    %659 = vmatprep.subr.mxu0 0.0
    %660 = vmatpush1.msra.mxu0 0.0
    %661 = vmatprep.subr.mxu0 0.0
    %662 = vmatpush1.msra.mxu0 0.0
    %663 = vmatprep.subr.mxu0 0.0
    %664 = vmatpush1.msra.mxu0 0.0
    %665 = vmatprep.mubr.f32.mxu0 0.0
    %666 = vmatmul.mubr.f32.gmra.mrb[0].mxu0 %v599
    %v667 = vpop.f32.mrb[0].mxu0
    %v668 = vadd.f32 0.0, %v667
    %v669 = vpop.f32.mrb[0].mxu0
    %670 = vdwg.mxu0
    %v671 = vadd.f32 %v198, %v668
    %v672 = vxor.u32 %v671, 2147483648
    %v673 = vmul.f32 %v672, 1.442695
    %v674 = vpow.pop %v673
    %v675 = vadd.f32 %v674, 1.0
    %v676 = vrcp.pop %v675
    %v677 = vmul.f32 1.0, %v676
    %v678 = vtanh.pop %v671
    %v679 = vmul.f32 %v677, %v418
    %681 = vrot.lane.b32.xlu0 %v678, 32
    %v682 = vpop.permute.xlu0 %681
    %v684 = vmul.f32 %v677, %v682
    %686 = vrot.lane.b32.xlu0 %v684, 32
    %v687 = vpop.permute.xlu0 %686
    %v689 = vadd.f32 %v679, %v687
    %v690 = vtanh.pop %v689
    %692 = vrot.lane.b32.xlu0 %v690, 32
    %v693 = vpop.permute.xlu0 %692
    %v695 = vmul.f32 %v677, %v693
    %697 = vrot.lane.b32.xlu0 %v595, 64
    %v698 = vpop.permute.xlu0 %697
    %v699 = vsel %vm226, %v698, 0
    %701 = vmatprep.subr.mxu0 0.0
    %702 = vmatpush1.msra.mxu0 %v71
    %703 = vmatprep.subr.mxu0 0.0
    %704 = vmatpush1.msra.mxu0 %v72
    %705 = vmatprep.subr.mxu0 0.0
    %706 = vmatpush1.msra.mxu0 %v73
    %707 = vmatprep.subr.mxu0 0.0
    %708 = vmatpush1.msra.mxu0 %v74
    %709 = vmatprep.subr.mxu0 0.0
    %710 = vmatpush1.msra.mxu0 0.0
    %711 = vmatprep.subr.mxu0 0.0
    %712 = vmatpush1.msra.mxu0 0.0
    %713 = vmatprep.subr.mxu0 0.0
    %714 = vmatpush1.msra.mxu0 0.0
    %715 = vmatprep.subr.mxu0 0.0
    %716 = vmatpush1.msra.mxu0 0.0
    %717 = vmatprep.subr.mxu0 0.0
    %718 = vmatpush1.msra.mxu0 0.0
    %719 = vmatprep.subr.mxu0 0.0
    %720 = vmatpush1.msra.mxu0 0.0
    %721 = vmatprep.subr.mxu0 0.0
    %722 = vmatpush1.msra.mxu0 0.0
    %723 = vmatprep.subr.mxu0 0.0
    %724 = vmatpush1.msra.mxu0 0.0
    %725 = vmatprep.subr.mxu0 0.0
    %726 = vmatpush1.msra.mxu0 0.0
    %727 = vmatprep.subr.mxu0 0.0
    %728 = vmatpush1.msra.mxu0 0.0
    %729 = vmatprep.subr.mxu0 0.0
    %730 = vmatpush1.msra.mxu0 0.0
    %731 = vmatprep.subr.mxu0 0.0
    %732 = vmatpush1.msra.mxu0 0.0
    %733 = vmatprep.subr.mxu0 0.0
    %734 = vmatpush1.msra.mxu0 0.0
    %735 = vmatprep.subr.mxu0 0.0
    %736 = vmatpush1.msra.mxu0 0.0
    %737 = vmatprep.subr.mxu0 0.0
    %738 = vmatpush1.msra.mxu0 0.0
    %739 = vmatprep.subr.mxu0 0.0
    %740 = vmatpush1.msra.mxu0 0.0
    %741 = vmatprep.subr.mxu0 0.0
    %742 = vmatpush1.msra.mxu0 0.0
    %743 = vmatprep.subr.mxu0 0.0
    %744 = vmatpush1.msra.mxu0 0.0
    %745 = vmatprep.subr.mxu0 0.0
    %746 = vmatpush1.msra.mxu0 0.0
    %747 = vmatprep.subr.mxu0 0.0
    %748 = vmatpush1.msra.mxu0 0.0
    %749 = vmatprep.subr.mxu0 0.0
    %750 = vmatpush1.msra.mxu0 0.0
    %751 = vmatprep.subr.mxu0 0.0
    %752 = vmatpush1.msra.mxu0 0.0
    %753 = vmatprep.subr.mxu0 0.0
    %754 = vmatpush1.msra.mxu0 0.0
    %755 = vmatprep.subr.mxu0 0.0
    %756 = vmatpush1.msra.mxu0 0.0
    %757 = vmatprep.subr.mxu0 0.0
    %758 = vmatpush1.msra.mxu0 0.0
    %759 = vmatprep.subr.mxu0 0.0
    %760 = vmatpush1.msra.mxu0 0.0
    %761 = vmatprep.subr.mxu0 0.0
    %762 = vmatpush1.msra.mxu0 0.0
    %763 = vmatprep.subr.mxu0 0.0
    %764 = vmatpush1.msra.mxu0 0.0
    %765 = vmatprep.mubr.f32.mxu0 0.0
    %766 = vmatmul.mubr.f32.gmra.mrb[0].mxu0 %v699
    %v767 = vpop.f32.mrb[0].mxu0
    %v768 = vadd.f32 0.0, %v767
    %v769 = vpop.f32.mrb[0].mxu0
    %770 = vdwg.mxu0
    %771 = vmatprep.subr.mxu0 0.0
    %772 = vmatpush1.msra.mxu0 %v59
    %773 = vmatprep.subr.mxu0 0.0
    %774 = vmatpush1.msra.mxu0 %v60
    %775 = vmatprep.subr.mxu0 0.0
    %776 = vmatpush1.msra.mxu0 %v61
    %777 = vmatprep.subr.mxu0 0.0
    %778 = vmatpush1.msra.mxu0 %v62
    %779 = vmatprep.subr.mxu0 0.0
    %780 = vmatpush1.msra.mxu0 0.0
    %781 = vmatprep.subr.mxu0 0.0
    %782 = vmatpush1.msra.mxu0 0.0
    %783 = vmatprep.subr.mxu0 0.0
    %784 = vmatpush1.msra.mxu0 0.0
    %785 = vmatprep.subr.mxu0 0.0
    %786 = vmatpush1.msra.mxu0 0.0
    %787 = vmatprep.subr.mxu0 0.0
    %788 = vmatpush1.msra.mxu0 0.0
    %789 = vmatprep.subr.mxu0 0.0
    %790 = vmatpush1.msra.mxu0 0.0
    %791 = vmatprep.subr.mxu0 0.0
    %792 = vmatpush1.msra.mxu0 0.0
    %793 = vmatprep.subr.mxu0 0.0
    %794 = vmatpush1.msra.mxu0 0.0
    %795 = vmatprep.subr.mxu0 0.0
    %796 = vmatpush1.msra.mxu0 0.0
    %797 = vmatprep.subr.mxu0 0.0
    %798 = vmatpush1.msra.mxu0 0.0
    %799 = vmatprep.subr.mxu0 0.0
    %800 = vmatpush1.msra.mxu0 0.0
    %801 = vmatprep.subr.mxu0 0.0
    %802 = vmatpush1.msra.mxu0 0.0
    %803 = vmatprep.subr.mxu0 0.0
    %804 = vmatpush1.msra.mxu0 0.0
    %805 = vmatprep.subr.mxu0 0.0
    %806 = vmatpush1.msra.mxu0 0.0
    %807 = vmatprep.subr.mxu0 0.0
    %808 = vmatpush1.msra.mxu0 0.0
    %809 = vmatprep.subr.mxu0 0.0
    %810 = vmatpush1.msra.mxu0 0.0
    %811 = vmatprep.subr.mxu0 0.0
    %812 = vmatpush1.msra.mxu0 0.0
    %813 = vmatprep.subr.mxu0 0.0
    %814 = vmatpush1.msra.mxu0 0.0
    %815 = vmatprep.subr.mxu0 0.0
    %816 = vmatpush1.msra.mxu0 0.0
    %817 = vmatprep.subr.mxu0 0.0
    %818 = vmatpush1.msra.mxu0 0.0
    %819 = vmatprep.subr.mxu0 0.0
    %820 = vmatpush1.msra.mxu0 0.0
    %821 = vmatprep.subr.mxu0 0.0
    %822 = vmatpush1.msra.mxu0 0.0
    %823 = vmatprep.subr.mxu0 0.0
    %824 = vmatpush1.msra.mxu0 0.0
    %825 = vmatprep.subr.mxu0 0.0
    %826 = vmatpush1.msra.mxu0 0.0
    %827 = vmatprep.subr.mxu0 0.0
    %828 = vmatpush1.msra.mxu0 0.0
    %829 = vmatprep.subr.mxu0 0.0
    %830 = vmatpush1.msra.mxu0 0.0
    %831 = vmatprep.subr.mxu0 0.0
    %832 = vmatpush1.msra.mxu0 0.0
    %833 = vmatprep.subr.mxu0 0.0
    %834 = vmatpush1.msra.mxu0 0.0
    %835 = vmatprep.mubr.f32.mxu0 0.0
    %836 = vmatmul.mubr.f32.gmra.mrb[0].mxu0 %v599
    %v837 = vpop.f32.mrb[0].mxu0
    %v838 = vadd.f32 %v768, %v837
    %v839 = vpop.f32.mrb[0].mxu0
    %840 = vdwg.mxu0
    %v841 = vadd.f32 %v838, %v569
    %v842 = vxor.u32 %v841, 2147483648
    %v843 = vmul.f32 %v842, 1.442695
    %v844 = vpow.pop %v843
    %v845 = vadd.f32 %v844, 1.0
    %v846 = vrcp.pop %v845
    %v847 = vmul.f32 1.0, %v846
    %v848 = vtanh.pop %v841
    %v849 = vmul.f32 %v847, %v589
    %851 = vrot.lane.b32.xlu0 %v848, 32
    %v852 = vpop.permute.xlu0 %851
    %v854 = vmul.f32 %v847, %v852
    %856 = vrot.lane.b32.xlu0 %v854, 32
    %v857 = vpop.permute.xlu0 %856
    %v859 = vadd.f32 %v849, %v857
    %v860 = vtanh.pop %v859
    %862 = vrot.lane.b32.xlu0 %v860, 32
    %v863 = vpop.permute.xlu0 %862
    %v865 = vmul.f32 %v847, %v863
    %866 = vmatprep.subr.mxu0 0.0
    %867 = vmatpush1.msra.mxu0 %v75
    %868 = vmatprep.subr.mxu0 0.0
    %869 = vmatpush1.msra.mxu0 %v76
    %870 = vmatprep.subr.mxu0 0.0
    %871 = vmatpush1.msra.mxu0 %v77
    %872 = vmatprep.subr.mxu0 0.0
    %873 = vmatpush1.msra.mxu0 %v78
    %874 = vmatprep.subr.mxu0 0.0
    %875 = vmatpush1.msra.mxu0 0.0
    %876 = vmatprep.subr.mxu0 0.0
    %877 = vmatpush1.msra.mxu0 0.0
    %878 = vmatprep.subr.mxu0 0.0
    %879 = vmatpush1.msra.mxu0 0.0
    %880 = vmatprep.subr.mxu0 0.0
    %881 = vmatpush1.msra.mxu0 0.0
    %882 = vmatprep.subr.mxu0 0.0
    %883 = vmatpush1.msra.mxu0 0.0
    %884 = vmatprep.subr.mxu0 0.0
    %885 = vmatpush1.msra.mxu0 0.0
    %886 = vmatprep.subr.mxu0 0.0
    %887 = vmatpush1.msra.mxu0 0.0
    %888 = vmatprep.subr.mxu0 0.0
    %889 = vmatpush1.msra.mxu0 0.0
    %890 = vmatprep.subr.mxu0 0.0
    %891 = vmatpush1.msra.mxu0 0.0
    %892 = vmatprep.subr.mxu0 0.0
    %893 = vmatpush1.msra.mxu0 0.0
    %894 = vmatprep.subr.mxu0 0.0
    %895 = vmatpush1.msra.mxu0 0.0
    %896 = vmatprep.subr.mxu0 0.0
    %897 = vmatpush1.msra.mxu0 0.0
    %898 = vmatprep.subr.mxu0 0.0
    %899 = vmatpush1.msra.mxu0 0.0
    %900 = vmatprep.subr.mxu0 0.0
    %901 = vmatpush1.msra.mxu0 0.0
    %902 = vmatprep.subr.mxu0 0.0
    %903 = vmatpush1.msra.mxu0 0.0
    %904 = vmatprep.subr.mxu0 0.0
    %905 = vmatpush1.msra.mxu0 0.0
    %906 = vmatprep.subr.mxu0 0.0
    %907 = vmatpush1.msra.mxu0 0.0
    %908 = vmatprep.subr.mxu0 0.0
    %909 = vmatpush1.msra.mxu0 0.0
    %910 = vmatprep.subr.mxu0 0.0
    %911 = vmatpush1.msra.mxu0 0.0
    %912 = vmatprep.subr.mxu0 0.0
    %913 = vmatpush1.msra.mxu0 0.0
    %914 = vmatprep.subr.mxu0 0.0
    %915 = vmatpush1.msra.mxu0 0.0
    %916 = vmatprep.subr.mxu0 0.0
    %917 = vmatpush1.msra.mxu0 0.0
    %918 = vmatprep.subr.mxu0 0.0
    %919 = vmatpush1.msra.mxu0 0.0
    %920 = vmatprep.subr.mxu0 0.0
    %921 = vmatpush1.msra.mxu0 0.0
    %922 = vmatprep.subr.mxu0 0.0
    %923 = vmatpush1.msra.mxu0 0.0
    %924 = vmatprep.subr.mxu0 0.0
    %925 = vmatpush1.msra.mxu0 0.0
    %926 = vmatprep.subr.mxu0 0.0
    %927 = vmatpush1.msra.mxu0 0.0
    %928 = vmatprep.subr.mxu0 0.0
    %929 = vmatpush1.msra.mxu0 0.0
    %930 = vmatprep.mubr.f32.mxu0 0.0
    %931 = vmatmul.mubr.f32.gmra.mrb[0].mxu0 %v228
    %v932 = vpop.f32.mrb[0].mxu0
    %v933 = vadd.f32 0.0, %v932
    %v934 = vpop.f32.mrb[0].mxu0
    %935 = vdwg.mxu0
    %936 = vmatprep.subr.mxu0 0.0
    %937 = vmatpush1.msra.mxu0 %v63
    %938 = vmatprep.subr.mxu0 0.0
    %939 = vmatpush1.msra.mxu0 %v64
    %940 = vmatprep.subr.mxu0 0.0
    %941 = vmatpush1.msra.mxu0 %v65
    %942 = vmatprep.subr.mxu0 0.0
    %943 = vmatpush1.msra.mxu0 %v66
    %944 = vmatprep.subr.mxu0 0.0
    %945 = vmatpush1.msra.mxu0 0.0
    %946 = vmatprep.subr.mxu0 0.0
    %947 = vmatpush1.msra.mxu0 0.0
    %948 = vmatprep.subr.mxu0 0.0
    %949 = vmatpush1.msra.mxu0 0.0
    %950 = vmatprep.subr.mxu0 0.0
    %951 = vmatpush1.msra.mxu0 0.0
    %952 = vmatprep.subr.mxu0 0.0
    %953 = vmatpush1.msra.mxu0 0.0
    %954 = vmatprep.subr.mxu0 0.0
    %955 = vmatpush1.msra.mxu0 0.0
    %956 = vmatprep.subr.mxu0 0.0
    %957 = vmatpush1.msra.mxu0 0.0
    %958 = vmatprep.subr.mxu0 0.0
    %959 = vmatpush1.msra.mxu0 0.0
    %960 = vmatprep.subr.mxu0 0.0
    %961 = vmatpush1.msra.mxu0 0.0
    %962 = vmatprep.subr.mxu0 0.0
    %963 = vmatpush1.msra.mxu0 0.0
    %964 = vmatprep.subr.mxu0 0.0
    %965 = vmatpush1.msra.mxu0 0.0
    %966 = vmatprep.subr.mxu0 0.0
    %967 = vmatpush1.msra.mxu0 0.0
    %968 = vmatprep.subr.mxu0 0.0
    %969 = vmatpush1.msra.mxu0 0.0
    %970 = vmatprep.subr.mxu0 0.0
    %971 = vmatpush1.msra.mxu0 0.0
    %972 = vmatprep.subr.mxu0 0.0
    %973 = vmatpush1.msra.mxu0 0.0
    %974 = vmatprep.subr.mxu0 0.0
    %975 = vmatpush1.msra.mxu0 0.0
    %976 = vmatprep.subr.mxu0 0.0
    %977 = vmatpush1.msra.mxu0 0.0
    %978 = vmatprep.subr.mxu0 0.0
    %979 = vmatpush1.msra.mxu0 0.0
    %980 = vmatprep.subr.mxu0 0.0
    %981 = vmatpush1.msra.mxu0 0.0
    %982 = vmatprep.subr.mxu0 0.0
    %983 = vmatpush1.msra.mxu0 0.0
    %984 = vmatprep.subr.mxu0 0.0
    %985 = vmatpush1.msra.mxu0 0.0
    %986 = vmatprep.subr.mxu0 0.0
    %987 = vmatpush1.msra.mxu0 0.0
    %988 = vmatprep.subr.mxu0 0.0
    %989 = vmatpush1.msra.mxu0 0.0
    %990 = vmatprep.subr.mxu0 0.0
    %991 = vmatpush1.msra.mxu0 0.0
    %992 = vmatprep.subr.mxu0 0.0
    %993 = vmatpush1.msra.mxu0 0.0
    %994 = vmatprep.subr.mxu0 0.0
    %995 = vmatpush1.msra.mxu0 0.0
    %996 = vmatprep.subr.mxu0 0.0
    %997 = vmatpush1.msra.mxu0 0.0
    %998 = vmatprep.subr.mxu0 0.0
    %999 = vmatpush1.msra.mxu0 0.0
    %1000 = vmatprep.mubr.f32.mxu0 0.0
    %1001 = vmatmul.mubr.f32.gmra.mrb[0].mxu0 %v699
    %v1002 = vpop.f32.mrb[0].mxu0
    %v1003 = vadd.f32 %v933, %v1002
    %v1004 = vpop.f32.mrb[0].mxu0
    %1005 = vdwg.mxu0
    %v1007 = vlaneseq
    %v1008 = vshrl.u32 %v1007, 7
    %v1009 = vsub.s32 0, %v1008
    %v1010 = vrot.slane %v81, %v1009
    %v1012 = vadd.f32 %v1003, %v1010
    %v1013 = vxor.u32 %v1012, 2147483648
    %v1014 = vmul.f32 %v1013, 1.442695
    %v1015 = vpow.pop %v1014
    %v1016 = vadd.f32 %v1015, 1.0
    %v1017 = vrcp.pop %v1016
    %v1018 = vmul.f32 1.0, %v1017
    %v1019 = vtanh.pop %v1012
    %v1020 = vmul.f32 %v1018, 0.0
    %1022 = vrot.lane.b32.xlu0 %v1019, 32
    %v1023 = vpop.permute.xlu0 %1022
    %v1025 = vmul.f32 %v1018, %v1023
    %1027 = vrot.lane.b32.xlu0 %v1025, 32
    %v1028 = vpop.permute.xlu0 %1027
    %v1030 = vadd.f32 %v1020, %v1028
    %v1031 = vtanh.pop %v1030
    %1033 = vrot.lane.b32.xlu0 %v1031, 32
    %v1034 = vpop.permute.xlu0 %1033
    %v1036 = vmul.f32 %v1018, %v1034
    %1038 = vrot.lane.b32.xlu0 %v695, 64
    %v1039 = vpop.permute.xlu0 %1038
    %v1040 = vsel %vm226, %v1039, 0
    %1042 = vmatprep.subr.mxu0 0.0
    %1043 = vmatpush1.msra.mxu0 %v67
    %1044 = vmatprep.subr.mxu0 0.0
    %1045 = vmatpush1.msra.mxu0 %v68
    %1046 = vmatprep.subr.mxu0 0.0
    %1047 = vmatpush1.msra.mxu0 %v69
    %1048 = vmatprep.subr.mxu0 0.0
    %1049 = vmatpush1.msra.mxu0 %v70
    %1050 = vmatprep.subr.mxu0 0.0
    %1051 = vmatpush1.msra.mxu0 0.0
    %1052 = vmatprep.subr.mxu0 0.0
    %1053 = vmatpush1.msra.mxu0 0.0
    %1054 = vmatprep.subr.mxu0 0.0
    %1055 = vmatpush1.msra.mxu0 0.0
    %1056 = vmatprep.subr.mxu0 0.0
    %1057 = vmatpush1.msra.mxu0 0.0
    %1058 = vmatprep.subr.mxu0 0.0
    %1059 = vmatpush1.msra.mxu0 0.0
    %1060 = vmatprep.subr.mxu0 0.0
    %1061 = vmatpush1.msra.mxu0 0.0
    %1062 = vmatprep.subr.mxu0 0.0
    %1063 = vmatpush1.msra.mxu0 0.0
    %1064 = vmatprep.subr.mxu0 0.0
    %1065 = vmatpush1.msra.mxu0 0.0
    %1066 = vmatprep.subr.mxu0 0.0
    %1067 = vmatpush1.msra.mxu0 0.0
    %1068 = vmatprep.subr.mxu0 0.0
    %1069 = vmatpush1.msra.mxu0 0.0
    %1070 = vmatprep.subr.mxu0 0.0
    %1071 = vmatpush1.msra.mxu0 0.0
    %1072 = vmatprep.subr.mxu0 0.0
    %1073 = vmatpush1.msra.mxu0 0.0
    %1074 = vmatprep.subr.mxu0 0.0
    %1075 = vmatpush1.msra.mxu0 0.0
    %1076 = vmatprep.subr.mxu0 0.0
    %1077 = vmatpush1.msra.mxu0 0.0
    %1078 = vmatprep.subr.mxu0 0.0
    %1079 = vmatpush1.msra.mxu0 0.0
    %1080 = vmatprep.subr.mxu0 0.0
    %1081 = vmatpush1.msra.mxu0 0.0
    %1082 = vmatprep.subr.mxu0 0.0
    %1083 = vmatpush1.msra.mxu0 0.0
    %1084 = vmatprep.subr.mxu0 0.0
    %1085 = vmatpush1.msra.mxu0 0.0
    %1086 = vmatprep.subr.mxu0 0.0
    %1087 = vmatpush1.msra.mxu0 0.0
    %1088 = vmatprep.subr.mxu0 0.0
    %1089 = vmatpush1.msra.mxu0 0.0
    %1090 = vmatprep.subr.mxu0 0.0
    %1091 = vmatpush1.msra.mxu0 0.0
    %1092 = vmatprep.subr.mxu0 0.0
    %1093 = vmatpush1.msra.mxu0 0.0
    %1094 = vmatprep.subr.mxu0 0.0
    %1095 = vmatpush1.msra.mxu0 0.0
    %1096 = vmatprep.subr.mxu0 0.0
    %1097 = vmatpush1.msra.mxu0 0.0
    %1098 = vmatprep.subr.mxu0 0.0
    %1099 = vmatpush1.msra.mxu0 0.0
    %1100 = vmatprep.subr.mxu0 0.0
    %1101 = vmatpush1.msra.mxu0 0.0
    %1102 = vmatprep.subr.mxu0 0.0
    %1103 = vmatpush1.msra.mxu0 0.0
    %1104 = vmatprep.subr.mxu0 0.0
    %1105 = vmatpush1.msra.mxu0 0.0
    %1106 = vmatprep.mubr.f32.mxu0 0.0
    %1107 = vmatmul.mubr.f32.gmra.mrb[0].mxu0 %v1040
    %v1108 = vpop.f32.mrb[0].mxu0
    %v1109 = vadd.f32 0.0, %v1108
    %v1110 = vpop.f32.mrb[0].mxu0
    %1111 = vdwg.mxu0
    %v1112 = vadd.f32 %v203, %v1109
    %v1113 = vxor.u32 %v1112, 2147483648
    %v1114 = vmul.f32 %v1113, 1.442695
    %v1115 = vpow.pop %v1114
    %v1116 = vadd.f32 %v1115, 1.0
    %v1117 = vrcp.pop %v1116
    %v1118 = vmul.f32 1.0, %v1117
    %v1119 = vtanh.pop %v1112
    %v1120 = vmul.f32 %v1118, %v689
    %1122 = vrot.lane.b32.xlu0 %v1119, 32
    %v1123 = vpop.permute.xlu0 %1122
    %v1125 = vmul.f32 %v1118, %v1123
    %1127 = vrot.lane.b32.xlu0 %v1125, 32
    %v1128 = vpop.permute.xlu0 %1127
    %v1130 = vadd.f32 %v1120, %v1128
    %v1131 = vtanh.pop %v1130
    %1133 = vrot.lane.b32.xlu0 %v1131, 32
    %v1134 = vpop.permute.xlu0 %1133
    %v1136 = vmul.f32 %v1118, %v1134
    %1138 = vrot.lane.b32.xlu0 %v865, 64
    %v1139 = vpop.permute.xlu0 %1138
    %v1140 = vsel %vm226, %v1139, 0
    %1142 = vmatprep.subr.mxu0 0.0
    %1143 = vmatpush1.msra.mxu0 %v71
    %1144 = vmatprep.subr.mxu0 0.0
    %1145 = vmatpush1.msra.mxu0 %v72
    %1146 = vmatprep.subr.mxu0 0.0
    %1147 = vmatpush1.msra.mxu0 %v73
    %1148 = vmatprep.subr.mxu0 0.0
    %1149 = vmatpush1.msra.mxu0 %v74
    %1150 = vmatprep.subr.mxu0 0.0
    %1151 = vmatpush1.msra.mxu0 0.0
    %1152 = vmatprep.subr.mxu0 0.0
    %1153 = vmatpush1.msra.mxu0 0.0
    %1154 = vmatprep.subr.mxu0 0.0
    %1155 = vmatpush1.msra.mxu0 0.0
    %1156 = vmatprep.subr.mxu0 0.0
    %1157 = vmatpush1.msra.mxu0 0.0
    %1158 = vmatprep.subr.mxu0 0.0
    %1159 = vmatpush1.msra.mxu0 0.0
    %1160 = vmatprep.subr.mxu0 0.0
    %1161 = vmatpush1.msra.mxu0 0.0
    %1162 = vmatprep.subr.mxu0 0.0
    %1163 = vmatpush1.msra.mxu0 0.0
    %1164 = vmatprep.subr.mxu0 0.0
    %1165 = vmatpush1.msra.mxu0 0.0
    %1166 = vmatprep.subr.mxu0 0.0
    %1167 = vmatpush1.msra.mxu0 0.0
    %1168 = vmatprep.subr.mxu0 0.0
    %1169 = vmatpush1.msra.mxu0 0.0
    %1170 = vmatprep.subr.mxu0 0.0
    %1171 = vmatpush1.msra.mxu0 0.0
    %1172 = vmatprep.subr.mxu0 0.0
    %1173 = vmatpush1.msra.mxu0 0.0
    %1174 = vmatprep.subr.mxu0 0.0
    %1175 = vmatpush1.msra.mxu0 0.0
    %1176 = vmatprep.subr.mxu0 0.0
    %1177 = vmatpush1.msra.mxu0 0.0
    %1178 = vmatprep.subr.mxu0 0.0
    %1179 = vmatpush1.msra.mxu0 0.0
    %1180 = vmatprep.subr.mxu0 0.0
    %1181 = vmatpush1.msra.mxu0 0.0
    %1182 = vmatprep.subr.mxu0 0.0
    %1183 = vmatpush1.msra.mxu0 0.0
    %1184 = vmatprep.subr.mxu0 0.0
    %1185 = vmatpush1.msra.mxu0 0.0
    %1186 = vmatprep.subr.mxu0 0.0
    %1187 = vmatpush1.msra.mxu0 0.0
    %1188 = vmatprep.subr.mxu0 0.0
    %1189 = vmatpush1.msra.mxu0 0.0
    %1190 = vmatprep.subr.mxu0 0.0
    %1191 = vmatpush1.msra.mxu0 0.0
    %1192 = vmatprep.subr.mxu0 0.0
    %1193 = vmatpush1.msra.mxu0 0.0
    %1194 = vmatprep.subr.mxu0 0.0
    %1195 = vmatpush1.msra.mxu0 0.0
    %1196 = vmatprep.subr.mxu0 0.0
    %1197 = vmatpush1.msra.mxu0 0.0
    %1198 = vmatprep.subr.mxu0 0.0
    %1199 = vmatpush1.msra.mxu0 0.0
    %1200 = vmatprep.subr.mxu0 0.0
    %1201 = vmatpush1.msra.mxu0 0.0
    %1202 = vmatprep.subr.mxu0 0.0
    %1203 = vmatpush1.msra.mxu0 0.0
    %1204 = vmatprep.subr.mxu0 0.0
    %1205 = vmatpush1.msra.mxu0 0.0
    %1206 = vmatprep.mubr.f32.mxu0 0.0
    %1207 = vmatmul.mubr.f32.gmra.mrb[0].mxu0 %v1140
    %v1208 = vpop.f32.mrb[0].mxu0
    %v1209 = vadd.f32 0.0, %v1208
    %v1210 = vpop.f32.mrb[0].mxu0
    %1211 = vdwg.mxu0
    %1212 = vmatprep.subr.mxu0 0.0
    %1213 = vmatpush1.msra.mxu0 %v59
    %1214 = vmatprep.subr.mxu0 0.0
    %1215 = vmatpush1.msra.mxu0 %v60
    %1216 = vmatprep.subr.mxu0 0.0
    %1217 = vmatpush1.msra.mxu0 %v61
    %1218 = vmatprep.subr.mxu0 0.0
    %1219 = vmatpush1.msra.mxu0 %v62
    %1220 = vmatprep.subr.mxu0 0.0
    %1221 = vmatpush1.msra.mxu0 0.0
    %1222 = vmatprep.subr.mxu0 0.0
    %1223 = vmatpush1.msra.mxu0 0.0
    %1224 = vmatprep.subr.mxu0 0.0
    %1225 = vmatpush1.msra.mxu0 0.0
    %1226 = vmatprep.subr.mxu0 0.0
    %1227 = vmatpush1.msra.mxu0 0.0
    %1228 = vmatprep.subr.mxu0 0.0
    %1229 = vmatpush1.msra.mxu0 0.0
    %1230 = vmatprep.subr.mxu0 0.0
    %1231 = vmatpush1.msra.mxu0 0.0
    %1232 = vmatprep.subr.mxu0 0.0
    %1233 = vmatpush1.msra.mxu0 0.0
    %1234 = vmatprep.subr.mxu0 0.0
    %1235 = vmatpush1.msra.mxu0 0.0
    %1236 = vmatprep.subr.mxu0 0.0
    %1237 = vmatpush1.msra.mxu0 0.0
    %1238 = vmatprep.subr.mxu0 0.0
    %1239 = vmatpush1.msra.mxu0 0.0
    %1240 = vmatprep.subr.mxu0 0.0
    %1241 = vmatpush1.msra.mxu0 0.0
    %1242 = vmatprep.subr.mxu0 0.0
    %1243 = vmatpush1.msra.mxu0 0.0
    %1244 = vmatprep.subr.mxu0 0.0
    %1245 = vmatpush1.msra.mxu0 0.0
    %1246 = vmatprep.subr.mxu0 0.0
    %1247 = vmatpush1.msra.mxu0 0.0
    %1248 = vmatprep.subr.mxu0 0.0
    %1249 = vmatpush1.msra.mxu0 0.0
    %1250 = vmatprep.subr.mxu0 0.0
    %1251 = vmatpush1.msra.mxu0 0.0
    %1252 = vmatprep.subr.mxu0 0.0
    %1253 = vmatpush1.msra.mxu0 0.0
    %1254 = vmatprep.subr.mxu0 0.0
    %1255 = vmatpush1.msra.mxu0 0.0
    %1256 = vmatprep.subr.mxu0 0.0
    %1257 = vmatpush1.msra.mxu0 0.0
    %1258 = vmatprep.subr.mxu0 0.0
    %1259 = vmatpush1.msra.mxu0 0.0
    %1260 = vmatprep.subr.mxu0 0.0
    %1261 = vmatpush1.msra.mxu0 0.0
    %1262 = vmatprep.subr.mxu0 0.0
    %1263 = vmatpush1.msra.mxu0 0.0
    %1264 = vmatprep.subr.mxu0 0.0
    %1265 = vmatpush1.msra.mxu0 0.0
    %1266 = vmatprep.subr.mxu0 0.0
    %1267 = vmatpush1.msra.mxu0 0.0
    %1268 = vmatprep.subr.mxu0 0.0
    %1269 = vmatpush1.msra.mxu0 0.0
    %1270 = vmatprep.subr.mxu0 0.0
    %1271 = vmatpush1.msra.mxu0 0.0
    %1272 = vmatprep.subr.mxu0 0.0
    %1273 = vmatpush1.msra.mxu0 0.0
    %1274 = vmatprep.subr.mxu0 0.0
    %1275 = vmatpush1.msra.mxu0 0.0
    %1276 = vmatprep.mubr.f32.mxu0 0.0
    %1277 = vmatmul.mubr.f32.gmra.mrb[0].mxu0 %v1040
    %v1278 = vpop.f32.mrb[0].mxu0
    %v1279 = vadd.f32 %v1209, %v1278
    %v1280 = vpop.f32.mrb[0].mxu0
    %1281 = vdwg.mxu0
    %v1282 = vadd.f32 %v1279, %v569
    %v1283 = vxor.u32 %v1282, 2147483648
    %v1284 = vmul.f32 %v1283, 1.442695
    %v1285 = vpow.pop %v1284
    %v1286 = vadd.f32 %v1285, 1.0
    %v1287 = vrcp.pop %v1286
    %v1288 = vmul.f32 1.0, %v1287
    %v1289 = vtanh.pop %v1282
    %v1290 = vmul.f32 %v1288, %v859
    %1292 = vrot.lane.b32.xlu0 %v1289, 32
    %v1293 = vpop.permute.xlu0 %1292
    %v1295 = vmul.f32 %v1288, %v1293
    %1297 = vrot.lane.b32.xlu0 %v1295, 32
    %v1298 = vpop.permute.xlu0 %1297
    %v1300 = vadd.f32 %v1290, %v1298
    %v1301 = vtanh.pop %v1300
    %1303 = vrot.lane.b32.xlu0 %v1301, 32
    %v1304 = vpop.permute.xlu0 %1303
    %v1306 = vmul.f32 %v1288, %v1304
    %1308 = vrot.lane.b32.xlu0 %v1036, 64
    %v1309 = vpop.permute.xlu0 %1308
    %v1310 = vsel %vm226, %v1309, 0
    %1312 = vmatprep.subr.mxu0 0.0
    %1313 = vmatpush1.msra.mxu0 %v75
    %1314 = vmatprep.subr.mxu0 0.0
    %1315 = vmatpush1.msra.mxu0 %v76
    %1316 = vmatprep.subr.mxu0 0.0
    %1317 = vmatpush1.msra.mxu0 %v77
    %1318 = vmatprep.subr.mxu0 0.0
    %1319 = vmatpush1.msra.mxu0 %v78
    %1320 = vmatprep.subr.mxu0 0.0
    %1321 = vmatpush1.msra.mxu0 0.0
    %1322 = vmatprep.subr.mxu0 0.0
    %1323 = vmatpush1.msra.mxu0 0.0
    %1324 = vmatprep.subr.mxu0 0.0
    %1325 = vmatpush1.msra.mxu0 0.0
    %1326 = vmatprep.subr.mxu0 0.0
    %1327 = vmatpush1.msra.mxu0 0.0
    %1328 = vmatprep.subr.mxu0 0.0
    %1329 = vmatpush1.msra.mxu0 0.0
    %1330 = vmatprep.subr.mxu0 0.0
    %1331 = vmatpush1.msra.mxu0 0.0
    %1332 = vmatprep.subr.mxu0 0.0
    %1333 = vmatpush1.msra.mxu0 0.0
    %1334 = vmatprep.subr.mxu0 0.0
    %1335 = vmatpush1.msra.mxu0 0.0
    %1336 = vmatprep.subr.mxu0 0.0
    %1337 = vmatpush1.msra.mxu0 0.0
    %1338 = vmatprep.subr.mxu0 0.0
    %1339 = vmatpush1.msra.mxu0 0.0
    %1340 = vmatprep.subr.mxu0 0.0
    %1341 = vmatpush1.msra.mxu0 0.0
    %1342 = vmatprep.subr.mxu0 0.0
    %1343 = vmatpush1.msra.mxu0 0.0
    %1344 = vmatprep.subr.mxu0 0.0
    %1345 = vmatpush1.msra.mxu0 0.0
    %1346 = vmatprep.subr.mxu0 0.0
    %1347 = vmatpush1.msra.mxu0 0.0
    %1348 = vmatprep.subr.mxu0 0.0
    %1349 = vmatpush1.msra.mxu0 0.0
    %1350 = vmatprep.subr.mxu0 0.0
    %1351 = vmatpush1.msra.mxu0 0.0
    %1352 = vmatprep.subr.mxu0 0.0
    %1353 = vmatpush1.msra.mxu0 0.0
    %1354 = vmatprep.subr.mxu0 0.0
    %1355 = vmatpush1.msra.mxu0 0.0
    %1356 = vmatprep.subr.mxu0 0.0
    %1357 = vmatpush1.msra.mxu0 0.0
    %1358 = vmatprep.subr.mxu0 0.0
    %1359 = vmatpush1.msra.mxu0 0.0
    %1360 = vmatprep.subr.mxu0 0.0
    %1361 = vmatpush1.msra.mxu0 0.0
    %1362 = vmatprep.subr.mxu0 0.0
    %1363 = vmatpush1.msra.mxu0 0.0
    %1364 = vmatprep.subr.mxu0 0.0
    %1365 = vmatpush1.msra.mxu0 0.0
    %1366 = vmatprep.subr.mxu0 0.0
    %1367 = vmatpush1.msra.mxu0 0.0
    %1368 = vmatprep.subr.mxu0 0.0
    %1369 = vmatpush1.msra.mxu0 0.0
    %1370 = vmatprep.subr.mxu0 0.0
    %1371 = vmatpush1.msra.mxu0 0.0
    %1372 = vmatprep.subr.mxu0 0.0
    %1373 = vmatpush1.msra.mxu0 0.0
    %1374 = vmatprep.subr.mxu0 0.0
    %1375 = vmatpush1.msra.mxu0 0.0
    %1376 = vmatprep.mubr.f32.mxu0 0.0
    %1377 = vmatmul.mubr.f32.gmra.mrb[0].mxu0 %v1310
    %v1378 = vpop.f32.mrb[0].mxu0
    %v1379 = vadd.f32 0.0, %v1378
    %v1380 = vpop.f32.mrb[0].mxu0
    %1381 = vdwg.mxu0
    %1382 = vmatprep.subr.mxu0 0.0
    %1383 = vmatpush1.msra.mxu0 %v63
    %1384 = vmatprep.subr.mxu0 0.0
    %1385 = vmatpush1.msra.mxu0 %v64
    %1386 = vmatprep.subr.mxu0 0.0
    %1387 = vmatpush1.msra.mxu0 %v65
    %1388 = vmatprep.subr.mxu0 0.0
    %1389 = vmatpush1.msra.mxu0 %v66
    %1390 = vmatprep.subr.mxu0 0.0
    %1391 = vmatpush1.msra.mxu0 0.0
    %1392 = vmatprep.subr.mxu0 0.0
    %1393 = vmatpush1.msra.mxu0 0.0
    %1394 = vmatprep.subr.mxu0 0.0
    %1395 = vmatpush1.msra.mxu0 0.0
    %1396 = vmatprep.subr.mxu0 0.0
    %1397 = vmatpush1.msra.mxu0 0.0
    %1398 = vmatprep.subr.mxu0 0.0
    %1399 = vmatpush1.msra.mxu0 0.0
    %1400 = vmatprep.subr.mxu0 0.0
    %1401 = vmatpush1.msra.mxu0 0.0
    %1402 = vmatprep.subr.mxu0 0.0
    %1403 = vmatpush1.msra.mxu0 0.0
    %1404 = vmatprep.subr.mxu0 0.0
    %1405 = vmatpush1.msra.mxu0 0.0
    %1406 = vmatprep.subr.mxu0 0.0
    %1407 = vmatpush1.msra.mxu0 0.0
    %1408 = vmatprep.subr.mxu0 0.0
    %1409 = vmatpush1.msra.mxu0 0.0
    %1410 = vmatprep.subr.mxu0 0.0
    %1411 = vmatpush1.msra.mxu0 0.0
    %1412 = vmatprep.subr.mxu0 0.0
    %1413 = vmatpush1.msra.mxu0 0.0
    %1414 = vmatprep.subr.mxu0 0.0
    %1415 = vmatpush1.msra.mxu0 0.0
    %1416 = vmatprep.subr.mxu0 0.0
    %1417 = vmatpush1.msra.mxu0 0.0
    %1418 = vmatprep.subr.mxu0 0.0
    %1419 = vmatpush1.msra.mxu0 0.0
    %1420 = vmatprep.subr.mxu0 0.0
    %1421 = vmatpush1.msra.mxu0 0.0
    %1422 = vmatprep.subr.mxu0 0.0
    %1423 = vmatpush1.msra.mxu0 0.0
    %1424 = vmatprep.subr.mxu0 0.0
    %1425 = vmatpush1.msra.mxu0 0.0
    %1426 = vmatprep.subr.mxu0 0.0
    %1427 = vmatpush1.msra.mxu0 0.0
    %1428 = vmatprep.subr.mxu0 0.0
    %1429 = vmatpush1.msra.mxu0 0.0
    %1430 = vmatprep.subr.mxu0 0.0
    %1431 = vmatpush1.msra.mxu0 0.0
    %1432 = vmatprep.subr.mxu0 0.0
    %1433 = vmatpush1.msra.mxu0 0.0
    %1434 = vmatprep.subr.mxu0 0.0
    %1435 = vmatpush1.msra.mxu0 0.0
    %1436 = vmatprep.subr.mxu0 0.0
    %1437 = vmatpush1.msra.mxu0 0.0
    %1438 = vmatprep.subr.mxu0 0.0
    %1439 = vmatpush1.msra.mxu0 0.0
    %1440 = vmatprep.subr.mxu0 0.0
    %1441 = vmatpush1.msra.mxu0 0.0
    %1442 = vmatprep.subr.mxu0 0.0
    %1443 = vmatpush1.msra.mxu0 0.0
    %1444 = vmatprep.subr.mxu0 0.0
    %1445 = vmatpush1.msra.mxu0 0.0
    %1446 = vmatprep.mubr.f32.mxu0 0.0
    %1447 = vmatmul.mubr.f32.gmra.mrb[0].mxu0 %v1140
    %v1448 = vpop.f32.mrb[0].mxu0
    %v1449 = vadd.f32 %v1379, %v1448
    %v1450 = vpop.f32.mrb[0].mxu0
    %1451 = vdwg.mxu0
    %v1452 = vadd.f32 %v1449, %v1010
    %v1453 = vxor.u32 %v1452, 2147483648
    %v1454 = vmul.f32 %v1453, 1.442695
    %v1455 = vpow.pop %v1454
    %v1456 = vadd.f32 %v1455, 1.0
    %v1457 = vrcp.pop %v1456
    %v1458 = vmul.f32 1.0, %v1457
    %v1459 = vtanh.pop %v1452
    %v1460 = vmul.f32 %v1458, %v1030
    %1462 = vrot.lane.b32.xlu0 %v1459, 32
    %v1463 = vpop.permute.xlu0 %1462
    %v1465 = vmul.f32 %v1458, %v1463
    %1467 = vrot.lane.b32.xlu0 %v1465, 32
    %v1468 = vpop.permute.xlu0 %1467
    %v1470 = vadd.f32 %v1460, %v1468
    %v1471 = vtanh.pop %v1470
    %1473 = vrot.lane.b32.xlu0 %v1471, 32
    %v1474 = vpop.permute.xlu0 %1473
    %v1476 = vmul.f32 %v1458, %v1474
    %1478 = vrot.lane.b32.xlu0 %v1136, 64
    %v1479 = vpop.permute.xlu0 %1478
    %v1480 = vsel %vm226, %v1479, 0
    %1482 = vmatprep.subr.mxu0 0.0
    %1483 = vmatpush1.msra.mxu0 %v67
    %1484 = vmatprep.subr.mxu0 0.0
    %1485 = vmatpush1.msra.mxu0 %v68
    %1486 = vmatprep.subr.mxu0 0.0
    %1487 = vmatpush1.msra.mxu0 %v69
    %1488 = vmatprep.subr.mxu0 0.0
    %1489 = vmatpush1.msra.mxu0 %v70
    %1490 = vmatprep.subr.mxu0 0.0
    %1491 = vmatpush1.msra.mxu0 0.0
    %1492 = vmatprep.subr.mxu0 0.0
    %1493 = vmatpush1.msra.mxu0 0.0
    %1494 = vmatprep.subr.mxu0 0.0
    %1495 = vmatpush1.msra.mxu0 0.0
    %1496 = vmatprep.subr.mxu0 0.0
    %1497 = vmatpush1.msra.mxu0 0.0
    %1498 = vmatprep.subr.mxu0 0.0
    %1499 = vmatpush1.msra.mxu0 0.0
    %1500 = vmatprep.subr.mxu0 0.0
    %1501 = vmatpush1.msra.mxu0 0.0
    %1502 = vmatprep.subr.mxu0 0.0
    %1503 = vmatpush1.msra.mxu0 0.0
    %1504 = vmatprep.subr.mxu0 0.0
    %1505 = vmatpush1.msra.mxu0 0.0
    %1506 = vmatprep.subr.mxu0 0.0
    %1507 = vmatpush1.msra.mxu0 0.0
    %1508 = vmatprep.subr.mxu0 0.0
    %1509 = vmatpush1.msra.mxu0 0.0
    %1510 = vmatprep.subr.mxu0 0.0
    %1511 = vmatpush1.msra.mxu0 0.0
    %1512 = vmatprep.subr.mxu0 0.0
    %1513 = vmatpush1.msra.mxu0 0.0
    %1514 = vmatprep.subr.mxu0 0.0
    %1515 = vmatpush1.msra.mxu0 0.0
    %1516 = vmatprep.subr.mxu0 0.0
    %1517 = vmatpush1.msra.mxu0 0.0
    %1518 = vmatprep.subr.mxu0 0.0
    %1519 = vmatpush1.msra.mxu0 0.0
    %1520 = vmatprep.subr.mxu0 0.0
    %1521 = vmatpush1.msra.mxu0 0.0
    %1522 = vmatprep.subr.mxu0 0.0
    %1523 = vmatpush1.msra.mxu0 0.0
    %1524 = vmatprep.subr.mxu0 0.0
    %1525 = vmatpush1.msra.mxu0 0.0
    %1526 = vmatprep.subr.mxu0 0.0
    %1527 = vmatpush1.msra.mxu0 0.0
    %1528 = vmatprep.subr.mxu0 0.0
    %1529 = vmatpush1.msra.mxu0 0.0
    %1530 = vmatprep.subr.mxu0 0.0
    %1531 = vmatpush1.msra.mxu0 0.0
    %1532 = vmatprep.subr.mxu0 0.0
    %1533 = vmatpush1.msra.mxu0 0.0
    %1534 = vmatprep.subr.mxu0 0.0
    %1535 = vmatpush1.msra.mxu0 0.0
    %1536 = vmatprep.subr.mxu0 0.0
    %1537 = vmatpush1.msra.mxu0 0.0
    %1538 = vmatprep.subr.mxu0 0.0
    %1539 = vmatpush1.msra.mxu0 0.0
    %1540 = vmatprep.subr.mxu0 0.0
    %1541 = vmatpush1.msra.mxu0 0.0
    %1542 = vmatprep.subr.mxu0 0.0
    %1543 = vmatpush1.msra.mxu0 0.0
    %1544 = vmatprep.subr.mxu0 0.0
    %1545 = vmatpush1.msra.mxu0 0.0
    %1546 = vmatprep.mubr.f32.mxu0 0.0
    %1547 = vmatmul.mubr.f32.gmra.mrb[0].mxu0 %v1480
    %v1548 = vpop.f32.mrb[0].mxu0
    %v1549 = vadd.f32 0.0, %v1548
    %v1550 = vpop.f32.mrb[0].mxu0
    %1551 = vdwg.mxu0
    %v1552 = vadd.f32 %v208, %v1549
    %v1553 = vxor.u32 %v1552, 2147483648
    %v1554 = vmul.f32 %v1553, 1.442695
    %v1555 = vpow.pop %v1554
    %v1556 = vadd.f32 %v1555, 1.0
    %v1557 = vrcp.pop %v1556
    %v1558 = vmul.f32 1.0, %v1557
    %v1559 = vtanh.pop %v1552
    %v1560 = vmul.f32 %v1558, %v1130
    %1562 = vrot.lane.b32.xlu0 %v1559, 32
    %v1563 = vpop.permute.xlu0 %1562
    %v1565 = vmul.f32 %v1558, %v1563
    %1567 = vrot.lane.b32.xlu0 %v1565, 32
    %v1568 = vpop.permute.xlu0 %1567
    %v1570 = vadd.f32 %v1560, %v1568
    %v1571 = vtanh.pop %v1570
    %1573 = vrot.lane.b32.xlu0 %v1571, 32
    %v1574 = vpop.permute.xlu0 %1573
    %v1576 = vmul.f32 %v1558, %v1574
    %1578 = vrot.lane.b32.xlu0 %v1306, 64
    %v1579 = vpop.permute.xlu0 %1578
    %v1580 = vsel %vm226, %v1579, 0
    %1582 = vmatprep.subr.mxu0 0.0
    %1583 = vmatpush1.msra.mxu0 %v71
    %1584 = vmatprep.subr.mxu0 0.0
    %1585 = vmatpush1.msra.mxu0 %v72
    %1586 = vmatprep.subr.mxu0 0.0
    %1587 = vmatpush1.msra.mxu0 %v73
    %1588 = vmatprep.subr.mxu0 0.0
    %1589 = vmatpush1.msra.mxu0 %v74
    %1590 = vmatprep.subr.mxu0 0.0
    %1591 = vmatpush1.msra.mxu0 0.0
    %1592 = vmatprep.subr.mxu0 0.0
    %1593 = vmatpush1.msra.mxu0 0.0
    %1594 = vmatprep.subr.mxu0 0.0
    %1595 = vmatpush1.msra.mxu0 0.0
    %1596 = vmatprep.subr.mxu0 0.0
    %1597 = vmatpush1.msra.mxu0 0.0
    %1598 = vmatprep.subr.mxu0 0.0
    %1599 = vmatpush1.msra.mxu0 0.0
    %1600 = vmatprep.subr.mxu0 0.0
    %1601 = vmatpush1.msra.mxu0 0.0
    %1602 = vmatprep.subr.mxu0 0.0
    %1603 = vmatpush1.msra.mxu0 0.0
    %1604 = vmatprep.subr.mxu0 0.0
    %1605 = vmatpush1.msra.mxu0 0.0
    %1606 = vmatprep.subr.mxu0 0.0
    %1607 = vmatpush1.msra.mxu0 0.0
    %1608 = vmatprep.subr.mxu0 0.0
    %1609 = vmatpush1.msra.mxu0 0.0
    %1610 = vmatprep.subr.mxu0 0.0
    %1611 = vmatpush1.msra.mxu0 0.0
    %1612 = vmatprep.subr.mxu0 0.0
    %1613 = vmatpush1.msra.mxu0 0.0
    %1614 = vmatprep.subr.mxu0 0.0
    %1615 = vmatpush1.msra.mxu0 0.0
    %1616 = vmatprep.subr.mxu0 0.0
    %1617 = vmatpush1.msra.mxu0 0.0
    %1618 = vmatprep.subr.mxu0 0.0
    %1619 = vmatpush1.msra.mxu0 0.0
    %1620 = vmatprep.subr.mxu0 0.0
    %1621 = vmatpush1.msra.mxu0 0.0
    %1622 = vmatprep.subr.mxu0 0.0
    %1623 = vmatpush1.msra.mxu0 0.0
    %1624 = vmatprep.subr.mxu0 0.0
    %1625 = vmatpush1.msra.mxu0 0.0
    %1626 = vmatprep.subr.mxu0 0.0
    %1627 = vmatpush1.msra.mxu0 0.0
    %1628 = vmatprep.subr.mxu0 0.0
    %1629 = vmatpush1.msra.mxu0 0.0
    %1630 = vmatprep.subr.mxu0 0.0
    %1631 = vmatpush1.msra.mxu0 0.0
    %1632 = vmatprep.subr.mxu0 0.0
    %1633 = vmatpush1.msra.mxu0 0.0
    %1634 = vmatprep.subr.mxu0 0.0
    %1635 = vmatpush1.msra.mxu0 0.0
    %1636 = vmatprep.subr.mxu0 0.0
    %1637 = vmatpush1.msra.mxu0 0.0
    %1638 = vmatprep.subr.mxu0 0.0
    %1639 = vmatpush1.msra.mxu0 0.0
    %1640 = vmatprep.subr.mxu0 0.0
    %1641 = vmatpush1.msra.mxu0 0.0
    %1642 = vmatprep.subr.mxu0 0.0
    %1643 = vmatpush1.msra.mxu0 0.0
    %1644 = vmatprep.subr.mxu0 0.0
    %1645 = vmatpush1.msra.mxu0 0.0
    %1646 = vmatprep.mubr.f32.mxu0 0.0
    %1647 = vmatmul.mubr.f32.gmra.mrb[0].mxu0 %v1580
    %v1648 = vpop.f32.mrb[0].mxu0
    %v1649 = vadd.f32 0.0, %v1648
    %v1650 = vpop.f32.mrb[0].mxu0
    %1651 = vdwg.mxu0
    %1652 = vmatprep.subr.mxu0 0.0
    %1653 = vmatpush1.msra.mxu0 %v59
    %1654 = vmatprep.subr.mxu0 0.0
    %1655 = vmatpush1.msra.mxu0 %v60
    %1656 = vmatprep.subr.mxu0 0.0
    %1657 = vmatpush1.msra.mxu0 %v61
    %1658 = vmatprep.subr.mxu0 0.0
    %1659 = vmatpush1.msra.mxu0 %v62
    %1660 = vmatprep.subr.mxu0 0.0
    %1661 = vmatpush1.msra.mxu0 0.0
    %1662 = vmatprep.subr.mxu0 0.0
    %1663 = vmatpush1.msra.mxu0 0.0
    %1664 = vmatprep.subr.mxu0 0.0
    %1665 = vmatpush1.msra.mxu0 0.0
    %1666 = vmatprep.subr.mxu0 0.0
    %1667 = vmatpush1.msra.mxu0 0.0
    %1668 = vmatprep.subr.mxu0 0.0
    %1669 = vmatpush1.msra.mxu0 0.0
    %1670 = vmatprep.subr.mxu0 0.0
    %1671 = vmatpush1.msra.mxu0 0.0
    %1672 = vmatprep.subr.mxu0 0.0
    %1673 = vmatpush1.msra.mxu0 0.0
    %1674 = vmatprep.subr.mxu0 0.0
    %1675 = vmatpush1.msra.mxu0 0.0
    %1676 = vmatprep.subr.mxu0 0.0
    %1677 = vmatpush1.msra.mxu0 0.0
    %1678 = vmatprep.subr.mxu0 0.0
    %1679 = vmatpush1.msra.mxu0 0.0
    %1680 = vmatprep.subr.mxu0 0.0
    %1681 = vmatpush1.msra.mxu0 0.0
    %1682 = vmatprep.subr.mxu0 0.0
    %1683 = vmatpush1.msra.mxu0 0.0
    %1684 = vmatprep.subr.mxu0 0.0
    %1685 = vmatpush1.msra.mxu0 0.0
    %1686 = vmatprep.subr.mxu0 0.0
    %1687 = vmatpush1.msra.mxu0 0.0
    %1688 = vmatprep.subr.mxu0 0.0
    %1689 = vmatpush1.msra.mxu0 0.0
    %1690 = vmatprep.subr.mxu0 0.0
    %1691 = vmatpush1.msra.mxu0 0.0
    %1692 = vmatprep.subr.mxu0 0.0
    %1693 = vmatpush1.msra.mxu0 0.0
    %1694 = vmatprep.subr.mxu0 0.0
    %1695 = vmatpush1.msra.mxu0 0.0
    %1696 = vmatprep.subr.mxu0 0.0
    %1697 = vmatpush1.msra.mxu0 0.0
    %1698 = vmatprep.subr.mxu0 0.0
    %1699 = vmatpush1.msra.mxu0 0.0
    %1700 = vmatprep.subr.mxu0 0.0
    %1701 = vmatpush1.msra.mxu0 0.0
    %1702 = vmatprep.subr.mxu0 0.0
    %1703 = vmatpush1.msra.mxu0 0.0
    %1704 = vmatprep.subr.mxu0 0.0
    %1705 = vmatpush1.msra.mxu0 0.0
    %1706 = vmatprep.subr.mxu0 0.0
    %1707 = vmatpush1.msra.mxu0 0.0
    %1708 = vmatprep.subr.mxu0 0.0
    %1709 = vmatpush1.msra.mxu0 0.0
    %1710 = vmatprep.subr.mxu0 0.0
    %1711 = vmatpush1.msra.mxu0 0.0
    %1712 = vmatprep.subr.mxu0 0.0
    %1713 = vmatpush1.msra.mxu0 0.0
    %1714 = vmatprep.subr.mxu0 0.0
    %1715 = vmatpush1.msra.mxu0 0.0
    %1716 = vmatprep.mubr.f32.mxu0 0.0
    %1717 = vmatmul.mubr.f32.gmra.mrb[0].mxu0 %v1480
    %v1718 = vpop.f32.mrb[0].mxu0
    %v1719 = vadd.f32 %v1649, %v1718
    %v1720 = vpop.f32.mrb[0].mxu0
    %1721 = vdwg.mxu0
    %v1722 = vadd.f32 %v1719, %v569
    %v1723 = vxor.u32 %v1722, 2147483648
    %v1724 = vmul.f32 %v1723, 1.442695
    %v1725 = vpow.pop %v1724
    %v1726 = vadd.f32 %v1725, 1.0
    %v1727 = vrcp.pop %v1726
    %v1728 = vmul.f32 1.0, %v1727
    %v1729 = vtanh.pop %v1722
    %v1730 = vmul.f32 %v1728, %v1300
    %1732 = vrot.lane.b32.xlu0 %v1729, 32
    %v1733 = vpop.permute.xlu0 %1732
    %v1735 = vmul.f32 %v1728, %v1733
    %1737 = vrot.lane.b32.xlu0 %v1735, 32
    %v1738 = vpop.permute.xlu0 %1737
    %v1740 = vadd.f32 %v1730, %v1738
    %v1741 = vtanh.pop %v1740
    %1743 = vrot.lane.b32.xlu0 %v1741, 32
    %v1744 = vpop.permute.xlu0 %1743
    %v1746 = vmul.f32 %v1728, %v1744
    %1748 = vrot.lane.b32.xlu0 %v1476, 64
    %v1749 = vpop.permute.xlu0 %1748
    %v1750 = vsel %vm226, %v1749, 0
    %1752 = vmatprep.subr.mxu0 0.0
    %1753 = vmatpush1.msra.mxu0 %v75
    %1754 = vmatprep.subr.mxu0 0.0
    %1755 = vmatpush1.msra.mxu0 %v76
    %1756 = vmatprep.subr.mxu0 0.0
    %1757 = vmatpush1.msra.mxu0 %v77
    %1758 = vmatprep.subr.mxu0 0.0
    %1759 = vmatpush1.msra.mxu0 %v78
    %1760 = vmatprep.subr.mxu0 0.0
    %1761 = vmatpush1.msra.mxu0 0.0
    %1762 = vmatprep.subr.mxu0 0.0
    %1763 = vmatpush1.msra.mxu0 0.0
    %1764 = vmatprep.subr.mxu0 0.0
    %1765 = vmatpush1.msra.mxu0 0.0
    %1766 = vmatprep.subr.mxu0 0.0
    %1767 = vmatpush1.msra.mxu0 0.0
    %1768 = vmatprep.subr.mxu0 0.0
    %1769 = vmatpush1.msra.mxu0 0.0
    %1770 = vmatprep.subr.mxu0 0.0
    %1771 = vmatpush1.msra.mxu0 0.0
    %1772 = vmatprep.subr.mxu0 0.0
    %1773 = vmatpush1.msra.mxu0 0.0
    %1774 = vmatprep.subr.mxu0 0.0
    %1775 = vmatpush1.msra.mxu0 0.0
    %1776 = vmatprep.subr.mxu0 0.0
    %1777 = vmatpush1.msra.mxu0 0.0
    %1778 = vmatprep.subr.mxu0 0.0
    %1779 = vmatpush1.msra.mxu0 0.0
    %1780 = vmatprep.subr.mxu0 0.0
    %1781 = vmatpush1.msra.mxu0 0.0
    %1782 = vmatprep.subr.mxu0 0.0
    %1783 = vmatpush1.msra.mxu0 0.0
    %1784 = vmatprep.subr.mxu0 0.0
    %1785 = vmatpush1.msra.mxu0 0.0
    %1786 = vmatprep.subr.mxu0 0.0
    %1787 = vmatpush1.msra.mxu0 0.0
    %1788 = vmatprep.subr.mxu0 0.0
    %1789 = vmatpush1.msra.mxu0 0.0
    %1790 = vmatprep.subr.mxu0 0.0
    %1791 = vmatpush1.msra.mxu0 0.0
    %1792 = vmatprep.subr.mxu0 0.0
    %1793 = vmatpush1.msra.mxu0 0.0
    %1794 = vmatprep.subr.mxu0 0.0
    %1795 = vmatpush1.msra.mxu0 0.0
    %1796 = vmatprep.subr.mxu0 0.0
    %1797 = vmatpush1.msra.mxu0 0.0
    %1798 = vmatprep.subr.mxu0 0.0
    %1799 = vmatpush1.msra.mxu0 0.0
    %1800 = vmatprep.subr.mxu0 0.0
    %1801 = vmatpush1.msra.mxu0 0.0
    %1802 = vmatprep.subr.mxu0 0.0
    %1803 = vmatpush1.msra.mxu0 0.0
    %1804 = vmatprep.subr.mxu0 0.0
    %1805 = vmatpush1.msra.mxu0 0.0
    %1806 = vmatprep.subr.mxu0 0.0
    %1807 = vmatpush1.msra.mxu0 0.0
    %1808 = vmatprep.subr.mxu0 0.0
    %1809 = vmatpush1.msra.mxu0 0.0
    %1810 = vmatprep.subr.mxu0 0.0
    %1811 = vmatpush1.msra.mxu0 0.0
    %1812 = vmatprep.subr.mxu0 0.0
    %1813 = vmatpush1.msra.mxu0 0.0
    %1814 = vmatprep.subr.mxu0 0.0
    %1815 = vmatpush1.msra.mxu0 0.0
    %1816 = vmatprep.mubr.f32.mxu0 0.0
    %1817 = vmatmul.mubr.f32.gmra.mrb[0].mxu0 %v1750
    %v1818 = vpop.f32.mrb[0].mxu0
    %v1819 = vadd.f32 0.0, %v1818
    %v1820 = vpop.f32.mrb[0].mxu0
    %1821 = vdwg.mxu0
    %1822 = vmatprep.subr.mxu0 0.0
    %1823 = vmatpush1.msra.mxu0 %v63
    %1824 = vmatprep.subr.mxu0 0.0
    %1825 = vmatpush1.msra.mxu0 %v64
    %1826 = vmatprep.subr.mxu0 0.0
    %1827 = vmatpush1.msra.mxu0 %v65
    %1828 = vmatprep.subr.mxu0 0.0
    %1829 = vmatpush1.msra.mxu0 %v66
    %1830 = vmatprep.subr.mxu0 0.0
    %1831 = vmatpush1.msra.mxu0 0.0
    %1832 = vmatprep.subr.mxu0 0.0
    %1833 = vmatpush1.msra.mxu0 0.0
    %1834 = vmatprep.subr.mxu0 0.0
    %1835 = vmatpush1.msra.mxu0 0.0
    %1836 = vmatprep.subr.mxu0 0.0
    %1837 = vmatpush1.msra.mxu0 0.0
    %1838 = vmatprep.subr.mxu0 0.0
    %1839 = vmatpush1.msra.mxu0 0.0
    %1840 = vmatprep.subr.mxu0 0.0
    %1841 = vmatpush1.msra.mxu0 0.0
    %1842 = vmatprep.subr.mxu0 0.0
    %1843 = vmatpush1.msra.mxu0 0.0
    %1844 = vmatprep.subr.mxu0 0.0
    %1845 = vmatpush1.msra.mxu0 0.0
    %1846 = vmatprep.subr.mxu0 0.0
    %1847 = vmatpush1.msra.mxu0 0.0
    %1848 = vmatprep.subr.mxu0 0.0
    %1849 = vmatpush1.msra.mxu0 0.0
    %1850 = vmatprep.subr.mxu0 0.0
    %1851 = vmatpush1.msra.mxu0 0.0
    %1852 = vmatprep.subr.mxu0 0.0
    %1853 = vmatpush1.msra.mxu0 0.0
    %1854 = vmatprep.subr.mxu0 0.0
    %1855 = vmatpush1.msra.mxu0 0.0
    %1856 = vmatprep.subr.mxu0 0.0
    %1857 = vmatpush1.msra.mxu0 0.0
    %1858 = vmatprep.subr.mxu0 0.0
    %1859 = vmatpush1.msra.mxu0 0.0
    %1860 = vmatprep.subr.mxu0 0.0
    %1861 = vmatpush1.msra.mxu0 0.0
    %1862 = vmatprep.subr.mxu0 0.0
    %1863 = vmatpush1.msra.mxu0 0.0
    %1864 = vmatprep.subr.mxu0 0.0
    %1865 = vmatpush1.msra.mxu0 0.0
    %1866 = vmatprep.subr.mxu0 0.0
    %1867 = vmatpush1.msra.mxu0 0.0
    %1868 = vmatprep.subr.mxu0 0.0
    %1869 = vmatpush1.msra.mxu0 0.0
    %1870 = vmatprep.subr.mxu0 0.0
    %1871 = vmatpush1.msra.mxu0 0.0
    %1872 = vmatprep.subr.mxu0 0.0
    %1873 = vmatpush1.msra.mxu0 0.0
    %1874 = vmatprep.subr.mxu0 0.0
    %1875 = vmatpush1.msra.mxu0 0.0
    %1876 = vmatprep.subr.mxu0 0.0
    %1877 = vmatpush1.msra.mxu0 0.0
    %1878 = vmatprep.subr.mxu0 0.0
    %1879 = vmatpush1.msra.mxu0 0.0
    %1880 = vmatprep.subr.mxu0 0.0
    %1881 = vmatpush1.msra.mxu0 0.0
    %1882 = vmatprep.subr.mxu0 0.0
    %1883 = vmatpush1.msra.mxu0 0.0
    %1884 = vmatprep.subr.mxu0 0.0
    %1885 = vmatpush1.msra.mxu0 0.0
    %1886 = vmatprep.mubr.f32.mxu0 0.0
    %1887 = vmatmul.mubr.f32.gmra.mrb[0].mxu0 %v1580
    %v1888 = vpop.f32.mrb[0].mxu0
    %v1889 = vadd.f32 %v1819, %v1888
    %v1890 = vpop.f32.mrb[0].mxu0
    %1891 = vdwg.mxu0
    %v1892 = vadd.f32 %v1889, %v1010
    %v1893 = vxor.u32 %v1892, 2147483648
    %v1894 = vmul.f32 %v1893, 1.442695
    %v1895 = vpow.pop %v1894
    %v1896 = vadd.f32 %v1895, 1.0
    %v1897 = vrcp.pop %v1896
    %v1898 = vmul.f32 1.0, %v1897
    %v1899 = vtanh.pop %v1892
    %v1900 = vmul.f32 %v1898, %v1470
    %1902 = vrot.lane.b32.xlu0 %v1899, 32
    %v1903 = vpop.permute.xlu0 %1902
    %v1905 = vmul.f32 %v1898, %v1903
    %1907 = vrot.lane.b32.xlu0 %v1905, 32
    %v1908 = vpop.permute.xlu0 %1907
    %v1910 = vadd.f32 %v1900, %v1908
    %v1911 = vtanh.pop %v1910
    %1913 = vrot.lane.b32.xlu0 %v1911, 32
    %v1914 = vpop.permute.xlu0 %1913
    %v1916 = vmul.f32 %v1898, %v1914
    %1918 = vrot.lane.b32.xlu0 %v1576, 64
    %v1919 = vpop.permute.xlu0 %1918
    %v1920 = vsel %vm226, %v1919, 0
    %1922 = vmatprep.subr.mxu0 0.0
    %1923 = vmatpush1.msra.mxu0 %v67
    %1924 = vmatprep.subr.mxu0 0.0
    %1925 = vmatpush1.msra.mxu0 %v68
    %1926 = vmatprep.subr.mxu0 0.0
    %1927 = vmatpush1.msra.mxu0 %v69
    %1928 = vmatprep.subr.mxu0 0.0
    %1929 = vmatpush1.msra.mxu0 %v70
    %1930 = vmatprep.subr.mxu0 0.0
    %1931 = vmatpush1.msra.mxu0 0.0
    %1932 = vmatprep.subr.mxu0 0.0
    %1933 = vmatpush1.msra.mxu0 0.0
    %1934 = vmatprep.subr.mxu0 0.0
    %1935 = vmatpush1.msra.mxu0 0.0
    %1936 = vmatprep.subr.mxu0 0.0
    %1937 = vmatpush1.msra.mxu0 0.0
    %1938 = vmatprep.subr.mxu0 0.0
    %1939 = vmatpush1.msra.mxu0 0.0
    %1940 = vmatprep.subr.mxu0 0.0
    %1941 = vmatpush1.msra.mxu0 0.0
    %1942 = vmatprep.subr.mxu0 0.0
    %1943 = vmatpush1.msra.mxu0 0.0
    %1944 = vmatprep.subr.mxu0 0.0
    %1945 = vmatpush1.msra.mxu0 0.0
    %1946 = vmatprep.subr.mxu0 0.0
    %1947 = vmatpush1.msra.mxu0 0.0
    %1948 = vmatprep.subr.mxu0 0.0
    %1949 = vmatpush1.msra.mxu0 0.0
    %1950 = vmatprep.subr.mxu0 0.0
    %1951 = vmatpush1.msra.mxu0 0.0
    %1952 = vmatprep.subr.mxu0 0.0
    %1953 = vmatpush1.msra.mxu0 0.0
    %1954 = vmatprep.subr.mxu0 0.0
    %1955 = vmatpush1.msra.mxu0 0.0
    %1956 = vmatprep.subr.mxu0 0.0
    %1957 = vmatpush1.msra.mxu0 0.0
    %1958 = vmatprep.subr.mxu0 0.0
    %1959 = vmatpush1.msra.mxu0 0.0
    %1960 = vmatprep.subr.mxu0 0.0
    %1961 = vmatpush1.msra.mxu0 0.0
    %1962 = vmatprep.subr.mxu0 0.0
    %1963 = vmatpush1.msra.mxu0 0.0
    %1964 = vmatprep.subr.mxu0 0.0
    %1965 = vmatpush1.msra.mxu0 0.0
    %1966 = vmatprep.subr.mxu0 0.0
    %1967 = vmatpush1.msra.mxu0 0.0
    %1968 = vmatprep.subr.mxu0 0.0
    %1969 = vmatpush1.msra.mxu0 0.0
    %1970 = vmatprep.subr.mxu0 0.0
    %1971 = vmatpush1.msra.mxu0 0.0
    %1972 = vmatprep.subr.mxu0 0.0
    %1973 = vmatpush1.msra.mxu0 0.0
    %1974 = vmatprep.subr.mxu0 0.0
    %1975 = vmatpush1.msra.mxu0 0.0
    %1976 = vmatprep.subr.mxu0 0.0
    %1977 = vmatpush1.msra.mxu0 0.0
    %1978 = vmatprep.subr.mxu0 0.0
    %1979 = vmatpush1.msra.mxu0 0.0
    %1980 = vmatprep.subr.mxu0 0.0
    %1981 = vmatpush1.msra.mxu0 0.0
    %1982 = vmatprep.subr.mxu0 0.0
    %1983 = vmatpush1.msra.mxu0 0.0
    %1984 = vmatprep.subr.mxu0 0.0
    %1985 = vmatpush1.msra.mxu0 0.0
    %1986 = vmatprep.mubr.f32.mxu0 0.0
    %1987 = vmatmul.mubr.f32.gmra.mrb[0].mxu0 %v1920
    %v1988 = vpop.f32.mrb[0].mxu0
    %v1989 = vadd.f32 0.0, %v1988
    %v1990 = vpop.f32.mrb[0].mxu0
    %1991 = vdwg.mxu0
    %v1992 = vadd.f32 %v213, %v1989
    %v1993 = vxor.u32 %v1992, 2147483648
    %v1994 = vmul.f32 %v1993, 1.442695
    %v1995 = vpow.pop %v1994
    %v1996 = vadd.f32 %v1995, 1.0
    %v1997 = vrcp.pop %v1996
    %v1998 = vmul.f32 1.0, %v1997
    %v1999 = vtanh.pop %v1992
    %v2000 = vmul.f32 %v1998, %v1570
    %2002 = vrot.lane.b32.xlu0 %v1999, 32
    %v2003 = vpop.permute.xlu0 %2002
    %v2005 = vmul.f32 %v1998, %v2003
    %2007 = vrot.lane.b32.xlu0 %v2005, 32
    %v2008 = vpop.permute.xlu0 %2007
    %v2010 = vadd.f32 %v2000, %v2008
    %v2011 = vtanh.pop %v2010
    %2013 = vrot.lane.b32.xlu0 %v2011, 32
    %v2014 = vpop.permute.xlu0 %2013
    %v2016 = vmul.f32 %v1998, %v2014
    %2018 = vrot.lane.b32.xlu0 %v1746, 64
    %v2019 = vpop.permute.xlu0 %2018
    %v2020 = vsel %vm226, %v2019, 0
    %2022 = vmatprep.subr.mxu0 0.0
    %2023 = vmatpush1.msra.mxu0 %v71
    %2024 = vmatprep.subr.mxu0 0.0
    %2025 = vmatpush1.msra.mxu0 %v72
    %2026 = vmatprep.subr.mxu0 0.0
    %2027 = vmatpush1.msra.mxu0 %v73
    %2028 = vmatprep.subr.mxu0 0.0
    %2029 = vmatpush1.msra.mxu0 %v74
    %2030 = vmatprep.subr.mxu0 0.0
    %2031 = vmatpush1.msra.mxu0 0.0
    %2032 = vmatprep.subr.mxu0 0.0
    %2033 = vmatpush1.msra.mxu0 0.0
    %2034 = vmatprep.subr.mxu0 0.0
    %2035 = vmatpush1.msra.mxu0 0.0
    %2036 = vmatprep.subr.mxu0 0.0
    %2037 = vmatpush1.msra.mxu0 0.0
    %2038 = vmatprep.subr.mxu0 0.0
    %2039 = vmatpush1.msra.mxu0 0.0
    %2040 = vmatprep.subr.mxu0 0.0
    %2041 = vmatpush1.msra.mxu0 0.0
    %2042 = vmatprep.subr.mxu0 0.0
    %2043 = vmatpush1.msra.mxu0 0.0
    %2044 = vmatprep.subr.mxu0 0.0
    %2045 = vmatpush1.msra.mxu0 0.0
    %2046 = vmatprep.subr.mxu0 0.0
    %2047 = vmatpush1.msra.mxu0 0.0
    %2048 = vmatprep.subr.mxu0 0.0
    %2049 = vmatpush1.msra.mxu0 0.0
    %2050 = vmatprep.subr.mxu0 0.0
    %2051 = vmatpush1.msra.mxu0 0.0
    %2052 = vmatprep.subr.mxu0 0.0
    %2053 = vmatpush1.msra.mxu0 0.0
    %2054 = vmatprep.subr.mxu0 0.0
    %2055 = vmatpush1.msra.mxu0 0.0
    %2056 = vmatprep.subr.mxu0 0.0
    %2057 = vmatpush1.msra.mxu0 0.0
    %2058 = vmatprep.subr.mxu0 0.0
    %2059 = vmatpush1.msra.mxu0 0.0
    %2060 = vmatprep.subr.mxu0 0.0
    %2061 = vmatpush1.msra.mxu0 0.0
    %2062 = vmatprep.subr.mxu0 0.0
    %2063 = vmatpush1.msra.mxu0 0.0
    %2064 = vmatprep.subr.mxu0 0.0
    %2065 = vmatpush1.msra.mxu0 0.0
    %2066 = vmatprep.subr.mxu0 0.0
    %2067 = vmatpush1.msra.mxu0 0.0
    %2068 = vmatprep.subr.mxu0 0.0
    %2069 = vmatpush1.msra.mxu0 0.0
    %2070 = vmatprep.subr.mxu0 0.0
    %2071 = vmatpush1.msra.mxu0 0.0
    %2072 = vmatprep.subr.mxu0 0.0
    %2073 = vmatpush1.msra.mxu0 0.0
    %2074 = vmatprep.subr.mxu0 0.0
    %2075 = vmatpush1.msra.mxu0 0.0
    %2076 = vmatprep.subr.mxu0 0.0
    %2077 = vmatpush1.msra.mxu0 0.0
    %2078 = vmatprep.subr.mxu0 0.0
    %2079 = vmatpush1.msra.mxu0 0.0
    %2080 = vmatprep.subr.mxu0 0.0
    %2081 = vmatpush1.msra.mxu0 0.0
    %2082 = vmatprep.subr.mxu0 0.0
    %2083 = vmatpush1.msra.mxu0 0.0
    %2084 = vmatprep.subr.mxu0 0.0
    %2085 = vmatpush1.msra.mxu0 0.0
    %2086 = vmatprep.mubr.f32.mxu0 0.0
    %2087 = vmatmul.mubr.f32.gmra.mrb[0].mxu0 %v2020
    %v2088 = vpop.f32.mrb[0].mxu0
    %v2089 = vadd.f32 0.0, %v2088
    %v2090 = vpop.f32.mrb[0].mxu0
    %2091 = vdwg.mxu0
    %2092 = vmatprep.subr.mxu0 0.0
    %2093 = vmatpush1.msra.mxu0 %v59
    %2094 = vmatprep.subr.mxu0 0.0
    %2095 = vmatpush1.msra.mxu0 %v60
    %2096 = vmatprep.subr.mxu0 0.0
    %2097 = vmatpush1.msra.mxu0 %v61
    %2098 = vmatprep.subr.mxu0 0.0
    %2099 = vmatpush1.msra.mxu0 %v62
    %2100 = vmatprep.subr.mxu0 0.0
    %2101 = vmatpush1.msra.mxu0 0.0
    %2102 = vmatprep.subr.mxu0 0.0
    %2103 = vmatpush1.msra.mxu0 0.0
    %2104 = vmatprep.subr.mxu0 0.0
    %2105 = vmatpush1.msra.mxu0 0.0
    %2106 = vmatprep.subr.mxu0 0.0
    %2107 = vmatpush1.msra.mxu0 0.0
    %2108 = vmatprep.subr.mxu0 0.0
    %2109 = vmatpush1.msra.mxu0 0.0
    %2110 = vmatprep.subr.mxu0 0.0
    %2111 = vmatpush1.msra.mxu0 0.0
    %2112 = vmatprep.subr.mxu0 0.0
    %2113 = vmatpush1.msra.mxu0 0.0
    %2114 = vmatprep.subr.mxu0 0.0
    %2115 = vmatpush1.msra.mxu0 0.0
    %2116 = vmatprep.subr.mxu0 0.0
    %2117 = vmatpush1.msra.mxu0 0.0
    %2118 = vmatprep.subr.mxu0 0.0
    %2119 = vmatpush1.msra.mxu0 0.0
    %2120 = vmatprep.subr.mxu0 0.0
    %2121 = vmatpush1.msra.mxu0 0.0
    %2122 = vmatprep.subr.mxu0 0.0
    %2123 = vmatpush1.msra.mxu0 0.0
    %2124 = vmatprep.subr.mxu0 0.0
    %2125 = vmatpush1.msra.mxu0 0.0
    %2126 = vmatprep.subr.mxu0 0.0
    %2127 = vmatpush1.msra.mxu0 0.0
    %2128 = vmatprep.subr.mxu0 0.0
    %2129 = vmatpush1.msra.mxu0 0.0
    %2130 = vmatprep.subr.mxu0 0.0
    %2131 = vmatpush1.msra.mxu0 0.0
    %2132 = vmatprep.subr.mxu0 0.0
    %2133 = vmatpush1.msra.mxu0 0.0
    %2134 = vmatprep.subr.mxu0 0.0
    %2135 = vmatpush1.msra.mxu0 0.0
    %2136 = vmatprep.subr.mxu0 0.0
    %2137 = vmatpush1.msra.mxu0 0.0
    %2138 = vmatprep.subr.mxu0 0.0
    %2139 = vmatpush1.msra.mxu0 0.0
    %2140 = vmatprep.subr.mxu0 0.0
    %2141 = vmatpush1.msra.mxu0 0.0
    %2142 = vmatprep.subr.mxu0 0.0
    %2143 = vmatpush1.msra.mxu0 0.0
    %2144 = vmatprep.subr.mxu0 0.0
    %2145 = vmatpush1.msra.mxu0 0.0
    %2146 = vmatprep.subr.mxu0 0.0
    %2147 = vmatpush1.msra.mxu0 0.0
    %2148 = vmatprep.subr.mxu0 0.0
    %2149 = vmatpush1.msra.mxu0 0.0
    %2150 = vmatprep.subr.mxu0 0.0
    %2151 = vmatpush1.msra.mxu0 0.0
    %2152 = vmatprep.subr.mxu0 0.0
    %2153 = vmatpush1.msra.mxu0 0.0
    %2154 = vmatprep.subr.mxu0 0.0
    %2155 = vmatpush1.msra.mxu0 0.0
    %2156 = vmatprep.mubr.f32.mxu0 0.0
    %2157 = vmatmul.mubr.f32.gmra.mrb[0].mxu0 %v1920
    %v2158 = vpop.f32.mrb[0].mxu0
    %v2159 = vadd.f32 %v2089, %v2158
    %v2160 = vpop.f32.mrb[0].mxu0
    %2161 = vdwg.mxu0
    %v2162 = vadd.f32 %v2159, %v569
    %v2163 = vxor.u32 %v2162, 2147483648
    %v2164 = vmul.f32 %v2163, 1.442695
    %v2165 = vpow.pop %v2164
    %v2166 = vadd.f32 %v2165, 1.0
    %v2167 = vrcp.pop %v2166
    %v2168 = vmul.f32 1.0, %v2167
    %v2169 = vtanh.pop %v2162
    %v2170 = vmul.f32 %v2168, %v1740
    %2172 = vrot.lane.b32.xlu0 %v2169, 32
    %v2173 = vpop.permute.xlu0 %2172
    %v2175 = vmul.f32 %v2168, %v2173
    %2177 = vrot.lane.b32.xlu0 %v2175, 32
    %v2178 = vpop.permute.xlu0 %2177
    %v2180 = vadd.f32 %v2170, %v2178
    %v2181 = vtanh.pop %v2180
    %2183 = vrot.lane.b32.xlu0 %v2181, 32
    %v2184 = vpop.permute.xlu0 %2183
    %v2186 = vmul.f32 %v2168, %v2184
    %2188 = vrot.lane.b32.xlu0 %v1916, 64
    %v2189 = vpop.permute.xlu0 %2188
    %v2190 = vsel %vm226, %v2189, 0
    %2192 = vmatprep.subr.mxu0 0.0
    %2193 = vmatpush1.msra.mxu0 %v75
    %2194 = vmatprep.subr.mxu0 0.0
    %2195 = vmatpush1.msra.mxu0 %v76
    %2196 = vmatprep.subr.mxu0 0.0
    %2197 = vmatpush1.msra.mxu0 %v77
    %2198 = vmatprep.subr.mxu0 0.0
    %2199 = vmatpush1.msra.mxu0 %v78
    %2200 = vmatprep.subr.mxu0 0.0
    %2201 = vmatpush1.msra.mxu0 0.0
    %2202 = vmatprep.subr.mxu0 0.0
    %2203 = vmatpush1.msra.mxu0 0.0
    %2204 = vmatprep.subr.mxu0 0.0
    %2205 = vmatpush1.msra.mxu0 0.0
    %2206 = vmatprep.subr.mxu0 0.0
    %2207 = vmatpush1.msra.mxu0 0.0
    %2208 = vmatprep.subr.mxu0 0.0
    %2209 = vmatpush1.msra.mxu0 0.0
    %2210 = vmatprep.subr.mxu0 0.0
    %2211 = vmatpush1.msra.mxu0 0.0
    %2212 = vmatprep.subr.mxu0 0.0
    %2213 = vmatpush1.msra.mxu0 0.0
    %2214 = vmatprep.subr.mxu0 0.0
    %2215 = vmatpush1.msra.mxu0 0.0
    %2216 = vmatprep.subr.mxu0 0.0
    %2217 = vmatpush1.msra.mxu0 0.0
    %2218 = vmatprep.subr.mxu0 0.0
    %2219 = vmatpush1.msra.mxu0 0.0
    %2220 = vmatprep.subr.mxu0 0.0
    %2221 = vmatpush1.msra.mxu0 0.0
    %2222 = vmatprep.subr.mxu0 0.0
    %2223 = vmatpush1.msra.mxu0 0.0
    %2224 = vmatprep.subr.mxu0 0.0
    %2225 = vmatpush1.msra.mxu0 0.0
    %2226 = vmatprep.subr.mxu0 0.0
    %2227 = vmatpush1.msra.mxu0 0.0
    %2228 = vmatprep.subr.mxu0 0.0
    %2229 = vmatpush1.msra.mxu0 0.0
    %2230 = vmatprep.subr.mxu0 0.0
    %2231 = vmatpush1.msra.mxu0 0.0
    %2232 = vmatprep.subr.mxu0 0.0
    %2233 = vmatpush1.msra.mxu0 0.0
    %2234 = vmatprep.subr.mxu0 0.0
    %2235 = vmatpush1.msra.mxu0 0.0
    %2236 = vmatprep.subr.mxu0 0.0
    %2237 = vmatpush1.msra.mxu0 0.0
    %2238 = vmatprep.subr.mxu0 0.0
    %2239 = vmatpush1.msra.mxu0 0.0
    %2240 = vmatprep.subr.mxu0 0.0
    %2241 = vmatpush1.msra.mxu0 0.0
    %2242 = vmatprep.subr.mxu0 0.0
    %2243 = vmatpush1.msra.mxu0 0.0
    %2244 = vmatprep.subr.mxu0 0.0
    %2245 = vmatpush1.msra.mxu0 0.0
    %2246 = vmatprep.subr.mxu0 0.0
    %2247 = vmatpush1.msra.mxu0 0.0
    %2248 = vmatprep.subr.mxu0 0.0
    %2249 = vmatpush1.msra.mxu0 0.0
    %2250 = vmatprep.subr.mxu0 0.0
    %2251 = vmatpush1.msra.mxu0 0.0
    %2252 = vmatprep.subr.mxu0 0.0
    %2253 = vmatpush1.msra.mxu0 0.0
    %2254 = vmatprep.subr.mxu0 0.0
    %2255 = vmatpush1.msra.mxu0 0.0
    %2256 = vmatprep.mubr.f32.mxu0 0.0
    %2257 = vmatmul.mubr.f32.gmra.mrb[0].mxu0 %v2190
    %v2258 = vpop.f32.mrb[0].mxu0
    %v2259 = vadd.f32 0.0, %v2258
    %v2260 = vpop.f32.mrb[0].mxu0
    %2261 = vdwg.mxu0
    %2262 = vmatprep.subr.mxu0 0.0
    %2263 = vmatpush1.msra.mxu0 %v63
    %2264 = vmatprep.subr.mxu0 0.0
    %2265 = vmatpush1.msra.mxu0 %v64
    %2266 = vmatprep.subr.mxu0 0.0
    %2267 = vmatpush1.msra.mxu0 %v65
    %2268 = vmatprep.subr.mxu0 0.0
    %2269 = vmatpush1.msra.mxu0 %v66
    %2270 = vmatprep.subr.mxu0 0.0
    %2271 = vmatpush1.msra.mxu0 0.0
    %2272 = vmatprep.subr.mxu0 0.0
    %2273 = vmatpush1.msra.mxu0 0.0
    %2274 = vmatprep.subr.mxu0 0.0
    %2275 = vmatpush1.msra.mxu0 0.0
    %2276 = vmatprep.subr.mxu0 0.0
    %2277 = vmatpush1.msra.mxu0 0.0
    %2278 = vmatprep.subr.mxu0 0.0
    %2279 = vmatpush1.msra.mxu0 0.0
    %2280 = vmatprep.subr.mxu0 0.0
    %2281 = vmatpush1.msra.mxu0 0.0
    %2282 = vmatprep.subr.mxu0 0.0
    %2283 = vmatpush1.msra.mxu0 0.0
    %2284 = vmatprep.subr.mxu0 0.0
    %2285 = vmatpush1.msra.mxu0 0.0
    %2286 = vmatprep.subr.mxu0 0.0
    %2287 = vmatpush1.msra.mxu0 0.0
    %2288 = vmatprep.subr.mxu0 0.0
    %2289 = vmatpush1.msra.mxu0 0.0
    %2290 = vmatprep.subr.mxu0 0.0
    %2291 = vmatpush1.msra.mxu0 0.0
    %2292 = vmatprep.subr.mxu0 0.0
    %2293 = vmatpush1.msra.mxu0 0.0
    %2294 = vmatprep.subr.mxu0 0.0
    %2295 = vmatpush1.msra.mxu0 0.0
    %2296 = vmatprep.subr.mxu0 0.0
    %2297 = vmatpush1.msra.mxu0 0.0
    %2298 = vmatprep.subr.mxu0 0.0
    %2299 = vmatpush1.msra.mxu0 0.0
    %2300 = vmatprep.subr.mxu0 0.0
    %2301 = vmatpush1.msra.mxu0 0.0
    %2302 = vmatprep.subr.mxu0 0.0
    %2303 = vmatpush1.msra.mxu0 0.0
    %2304 = vmatprep.subr.mxu0 0.0
    %2305 = vmatpush1.msra.mxu0 0.0
    %2306 = vmatprep.subr.mxu0 0.0
    %2307 = vmatpush1.msra.mxu0 0.0
    %2308 = vmatprep.subr.mxu0 0.0
    %2309 = vmatpush1.msra.mxu0 0.0
    %2310 = vmatprep.subr.mxu0 0.0
    %2311 = vmatpush1.msra.mxu0 0.0
    %2312 = vmatprep.subr.mxu0 0.0
    %2313 = vmatpush1.msra.mxu0 0.0
    %2314 = vmatprep.subr.mxu0 0.0
    %2315 = vmatpush1.msra.mxu0 0.0
    %2316 = vmatprep.subr.mxu0 0.0
    %2317 = vmatpush1.msra.mxu0 0.0
    %2318 = vmatprep.subr.mxu0 0.0
    %2319 = vmatpush1.msra.mxu0 0.0
    %2320 = vmatprep.subr.mxu0 0.0
    %2321 = vmatpush1.msra.mxu0 0.0
    %2322 = vmatprep.subr.mxu0 0.0
    %2323 = vmatpush1.msra.mxu0 0.0
    %2324 = vmatprep.subr.mxu0 0.0
    %2325 = vmatpush1.msra.mxu0 0.0
    %2326 = vmatprep.mubr.f32.mxu0 0.0
    %2327 = vmatmul.mubr.f32.gmra.mrb[0].mxu0 %v2020
    %v2328 = vpop.f32.mrb[0].mxu0
    %v2329 = vadd.f32 %v2259, %v2328
    %v2330 = vpop.f32.mrb[0].mxu0
    %2331 = vdwg.mxu0
    %v2332 = vadd.f32 %v2329, %v1010
    %v2333 = vxor.u32 %v2332, 2147483648
    %v2334 = vmul.f32 %v2333, 1.442695
    %v2335 = vpow.pop %v2334
    %v2336 = vadd.f32 %v2335, 1.0
    %v2337 = vrcp.pop %v2336
    %v2338 = vmul.f32 1.0, %v2337
    %v2339 = vtanh.pop %v2332
    %v2340 = vmul.f32 %v2338, %v1910
    %2342 = vrot.lane.b32.xlu0 %v2339, 32
    %v2343 = vpop.permute.xlu0 %2342
    %v2345 = vmul.f32 %v2338, %v2343
    %2347 = vrot.lane.b32.xlu0 %v2345, 32
    %v2348 = vpop.permute.xlu0 %2347
    %v2350 = vadd.f32 %v2340, %v2348
    %v2351 = vtanh.pop %v2350
    %2353 = vrot.lane.b32.xlu0 %v2351, 32
    %v2354 = vpop.permute.xlu0 %2353
    %v2356 = vmul.f32 %v2338, %v2354
    %2358 = vrot.lane.b32.xlu0 %v2016, 64
    %v2359 = vpop.permute.xlu0 %2358
    %v2360 = vsel %vm226, %v2359, 0
    %2362 = vmatprep.subr.mxu0 0.0
    %2363 = vmatpush1.msra.mxu0 %v67
    %2364 = vmatprep.subr.mxu0 0.0
    %2365 = vmatpush1.msra.mxu0 %v68
    %2366 = vmatprep.subr.mxu0 0.0
    %2367 = vmatpush1.msra.mxu0 %v69
    %2368 = vmatprep.subr.mxu0 0.0
    %2369 = vmatpush1.msra.mxu0 %v70
    %2370 = vmatprep.subr.mxu0 0.0
    %2371 = vmatpush1.msra.mxu0 0.0
    %2372 = vmatprep.subr.mxu0 0.0
    %2373 = vmatpush1.msra.mxu0 0.0
    %2374 = vmatprep.subr.mxu0 0.0
    %2375 = vmatpush1.msra.mxu0 0.0
    %2376 = vmatprep.subr.mxu0 0.0
    %2377 = vmatpush1.msra.mxu0 0.0
    %2378 = vmatprep.subr.mxu0 0.0
    %2379 = vmatpush1.msra.mxu0 0.0
    %2380 = vmatprep.subr.mxu0 0.0
    %2381 = vmatpush1.msra.mxu0 0.0
    %2382 = vmatprep.subr.mxu0 0.0
    %2383 = vmatpush1.msra.mxu0 0.0
    %2384 = vmatprep.subr.mxu0 0.0
    %2385 = vmatpush1.msra.mxu0 0.0
    %2386 = vmatprep.subr.mxu0 0.0
    %2387 = vmatpush1.msra.mxu0 0.0
    %2388 = vmatprep.subr.mxu0 0.0
    %2389 = vmatpush1.msra.mxu0 0.0
    %2390 = vmatprep.subr.mxu0 0.0
    %2391 = vmatpush1.msra.mxu0 0.0
    %2392 = vmatprep.subr.mxu0 0.0
    %2393 = vmatpush1.msra.mxu0 0.0
    %2394 = vmatprep.subr.mxu0 0.0
    %2395 = vmatpush1.msra.mxu0 0.0
    %2396 = vmatprep.subr.mxu0 0.0
    %2397 = vmatpush1.msra.mxu0 0.0
    %2398 = vmatprep.subr.mxu0 0.0
    %2399 = vmatpush1.msra.mxu0 0.0
    %2400 = vmatprep.subr.mxu0 0.0
    %2401 = vmatpush1.msra.mxu0 0.0
    %2402 = vmatprep.subr.mxu0 0.0
    %2403 = vmatpush1.msra.mxu0 0.0
    %2404 = vmatprep.subr.mxu0 0.0
    %2405 = vmatpush1.msra.mxu0 0.0
    %2406 = vmatprep.subr.mxu0 0.0
    %2407 = vmatpush1.msra.mxu0 0.0
    %2408 = vmatprep.subr.mxu0 0.0
    %2409 = vmatpush1.msra.mxu0 0.0
    %2410 = vmatprep.subr.mxu0 0.0
    %2411 = vmatpush1.msra.mxu0 0.0
    %2412 = vmatprep.subr.mxu0 0.0
    %2413 = vmatpush1.msra.mxu0 0.0
    %2414 = vmatprep.subr.mxu0 0.0
    %2415 = vmatpush1.msra.mxu0 0.0
    %2416 = vmatprep.subr.mxu0 0.0
    %2417 = vmatpush1.msra.mxu0 0.0
    %2418 = vmatprep.subr.mxu0 0.0
    %2419 = vmatpush1.msra.mxu0 0.0
    %2420 = vmatprep.subr.mxu0 0.0
    %2421 = vmatpush1.msra.mxu0 0.0
    %2422 = vmatprep.subr.mxu0 0.0
    %2423 = vmatpush1.msra.mxu0 0.0
    %2424 = vmatprep.subr.mxu0 0.0
    %2425 = vmatpush1.msra.mxu0 0.0
    %2426 = vmatprep.mubr.f32.mxu0 0.0
    %2427 = vmatmul.mubr.f32.gmra.mrb[0].mxu0 %v2360
    %v2428 = vpop.f32.mrb[0].mxu0
    %v2429 = vadd.f32 0.0, %v2428
    %v2430 = vpop.f32.mrb[0].mxu0
    %2431 = vdwg.mxu0
    %v2432 = vadd.f32 %v218, %v2429
    %v2433 = vxor.u32 %v2432, 2147483648
    %v2434 = vmul.f32 %v2433, 1.442695
    %v2435 = vpow.pop %v2434
    %v2436 = vadd.f32 %v2435, 1.0
    %v2437 = vrcp.pop %v2436
    %v2438 = vmul.f32 1.0, %v2437
    %v2439 = vtanh.pop %v2432
    %v2440 = vmul.f32 %v2438, %v2010
    %2442 = vrot.lane.b32.xlu0 %v2439, 32
    %v2443 = vpop.permute.xlu0 %2442
    %v2445 = vmul.f32 %v2438, %v2443
    %2447 = vrot.lane.b32.xlu0 %v2445, 32
    %v2448 = vpop.permute.xlu0 %2447
    %v2450 = vadd.f32 %v2440, %v2448
    %v2451 = vtanh.pop %v2450
    %2453 = vrot.lane.b32.xlu0 %v2451, 32
    %v2454 = vpop.permute.xlu0 %2453
    %v2456 = vmul.f32 %v2438, %v2454
    %2458 = vrot.lane.b32.xlu0 %v2186, 64
    %v2459 = vpop.permute.xlu0 %2458
    %v2460 = vsel %vm226, %v2459, 0
    %2462 = vmatprep.subr.mxu0 0.0
    %2463 = vmatpush1.msra.mxu0 %v71
    %2464 = vmatprep.subr.mxu0 0.0
    %2465 = vmatpush1.msra.mxu0 %v72
    %2466 = vmatprep.subr.mxu0 0.0
    %2467 = vmatpush1.msra.mxu0 %v73
    %2468 = vmatprep.subr.mxu0 0.0
    %2469 = vmatpush1.msra.mxu0 %v74
    %2470 = vmatprep.subr.mxu0 0.0
    %2471 = vmatpush1.msra.mxu0 0.0
    %2472 = vmatprep.subr.mxu0 0.0
    %2473 = vmatpush1.msra.mxu0 0.0
    %2474 = vmatprep.subr.mxu0 0.0
    %2475 = vmatpush1.msra.mxu0 0.0
    %2476 = vmatprep.subr.mxu0 0.0
    %2477 = vmatpush1.msra.mxu0 0.0
    %2478 = vmatprep.subr.mxu0 0.0
    %2479 = vmatpush1.msra.mxu0 0.0
    %2480 = vmatprep.subr.mxu0 0.0
    %2481 = vmatpush1.msra.mxu0 0.0
    %2482 = vmatprep.subr.mxu0 0.0
    %2483 = vmatpush1.msra.mxu0 0.0
    %2484 = vmatprep.subr.mxu0 0.0
    %2485 = vmatpush1.msra.mxu0 0.0
    %2486 = vmatprep.subr.mxu0 0.0
    %2487 = vmatpush1.msra.mxu0 0.0
    %2488 = vmatprep.subr.mxu0 0.0
    %2489 = vmatpush1.msra.mxu0 0.0
    %2490 = vmatprep.subr.mxu0 0.0
    %2491 = vmatpush1.msra.mxu0 0.0
    %2492 = vmatprep.subr.mxu0 0.0
    %2493 = vmatpush1.msra.mxu0 0.0
    %2494 = vmatprep.subr.mxu0 0.0
    %2495 = vmatpush1.msra.mxu0 0.0
    %2496 = vmatprep.subr.mxu0 0.0
    %2497 = vmatpush1.msra.mxu0 0.0
    %2498 = vmatprep.subr.mxu0 0.0
    %2499 = vmatpush1.msra.mxu0 0.0
    %2500 = vmatprep.subr.mxu0 0.0
    %2501 = vmatpush1.msra.mxu0 0.0
    %2502 = vmatprep.subr.mxu0 0.0
    %2503 = vmatpush1.msra.mxu0 0.0
    %2504 = vmatprep.subr.mxu0 0.0
    %2505 = vmatpush1.msra.mxu0 0.0
    %2506 = vmatprep.subr.mxu0 0.0
    %2507 = vmatpush1.msra.mxu0 0.0
    %2508 = vmatprep.subr.mxu0 0.0
    %2509 = vmatpush1.msra.mxu0 0.0
    %2510 = vmatprep.subr.mxu0 0.0
    %2511 = vmatpush1.msra.mxu0 0.0
    %2512 = vmatprep.subr.mxu0 0.0
    %2513 = vmatpush1.msra.mxu0 0.0
    %2514 = vmatprep.subr.mxu0 0.0
    %2515 = vmatpush1.msra.mxu0 0.0
    %2516 = vmatprep.subr.mxu0 0.0
    %2517 = vmatpush1.msra.mxu0 0.0
    %2518 = vmatprep.subr.mxu0 0.0
    %2519 = vmatpush1.msra.mxu0 0.0
    %2520 = vmatprep.subr.mxu0 0.0
    %2521 = vmatpush1.msra.mxu0 0.0
    %2522 = vmatprep.subr.mxu0 0.0
    %2523 = vmatpush1.msra.mxu0 0.0
    %2524 = vmatprep.subr.mxu0 0.0
    %2525 = vmatpush1.msra.mxu0 0.0
    %2526 = vmatprep.mubr.f32.mxu0 0.0
    %2527 = vmatmul.mubr.f32.gmra.mrb[0].mxu0 %v2460
    %v2528 = vpop.f32.mrb[0].mxu0
    %v2529 = vadd.f32 0.0, %v2528
    %v2530 = vpop.f32.mrb[0].mxu0
    %2531 = vdwg.mxu0
    %2532 = vmatprep.subr.mxu0 0.0
    %2533 = vmatpush1.msra.mxu0 %v59
    %2534 = vmatprep.subr.mxu0 0.0
    %2535 = vmatpush1.msra.mxu0 %v60
    %2536 = vmatprep.subr.mxu0 0.0
    %2537 = vmatpush1.msra.mxu0 %v61
    %2538 = vmatprep.subr.mxu0 0.0
    %2539 = vmatpush1.msra.mxu0 %v62
    %2540 = vmatprep.subr.mxu0 0.0
    %2541 = vmatpush1.msra.mxu0 0.0
    %2542 = vmatprep.subr.mxu0 0.0
    %2543 = vmatpush1.msra.mxu0 0.0
    %2544 = vmatprep.subr.mxu0 0.0
    %2545 = vmatpush1.msra.mxu0 0.0
    %2546 = vmatprep.subr.mxu0 0.0
    %2547 = vmatpush1.msra.mxu0 0.0
    %2548 = vmatprep.subr.mxu0 0.0
    %2549 = vmatpush1.msra.mxu0 0.0
    %2550 = vmatprep.subr.mxu0 0.0
    %2551 = vmatpush1.msra.mxu0 0.0
    %2552 = vmatprep.subr.mxu0 0.0
    %2553 = vmatpush1.msra.mxu0 0.0
    %2554 = vmatprep.subr.mxu0 0.0
    %2555 = vmatpush1.msra.mxu0 0.0
    %2556 = vmatprep.subr.mxu0 0.0
    %2557 = vmatpush1.msra.mxu0 0.0
    %2558 = vmatprep.subr.mxu0 0.0
    %2559 = vmatpush1.msra.mxu0 0.0
    %2560 = vmatprep.subr.mxu0 0.0
    %2561 = vmatpush1.msra.mxu0 0.0
    %2562 = vmatprep.subr.mxu0 0.0
    %2563 = vmatpush1.msra.mxu0 0.0
    %2564 = vmatprep.subr.mxu0 0.0
    %2565 = vmatpush1.msra.mxu0 0.0
    %2566 = vmatprep.subr.mxu0 0.0
    %2567 = vmatpush1.msra.mxu0 0.0
    %2568 = vmatprep.subr.mxu0 0.0
    %2569 = vmatpush1.msra.mxu0 0.0
    %2570 = vmatprep.subr.mxu0 0.0
    %2571 = vmatpush1.msra.mxu0 0.0
    %2572 = vmatprep.subr.mxu0 0.0
    %2573 = vmatpush1.msra.mxu0 0.0
    %2574 = vmatprep.subr.mxu0 0.0
    %2575 = vmatpush1.msra.mxu0 0.0
    %2576 = vmatprep.subr.mxu0 0.0
    %2577 = vmatpush1.msra.mxu0 0.0
    %2578 = vmatprep.subr.mxu0 0.0
    %2579 = vmatpush1.msra.mxu0 0.0
    %2580 = vmatprep.subr.mxu0 0.0
    %2581 = vmatpush1.msra.mxu0 0.0
    %2582 = vmatprep.subr.mxu0 0.0
    %2583 = vmatpush1.msra.mxu0 0.0
    %2584 = vmatprep.subr.mxu0 0.0
    %2585 = vmatpush1.msra.mxu0 0.0
    %2586 = vmatprep.subr.mxu0 0.0
    %2587 = vmatpush1.msra.mxu0 0.0
    %2588 = vmatprep.subr.mxu0 0.0
    %2589 = vmatpush1.msra.mxu0 0.0
    %2590 = vmatprep.subr.mxu0 0.0
    %2591 = vmatpush1.msra.mxu0 0.0
    %2592 = vmatprep.subr.mxu0 0.0
    %2593 = vmatpush1.msra.mxu0 0.0
    %2594 = vmatprep.subr.mxu0 0.0
    %2595 = vmatpush1.msra.mxu0 0.0
    %2596 = vmatprep.mubr.f32.mxu0 0.0
    %2597 = vmatmul.mubr.f32.gmra.mrb[0].mxu0 %v2360
    %v2598 = vpop.f32.mrb[0].mxu0
    %v2599 = vadd.f32 %v2529, %v2598
    %v2600 = vpop.f32.mrb[0].mxu0
    %2601 = vdwg.mxu0
    %v2602 = vadd.f32 %v2599, %v569
    %v2603 = vxor.u32 %v2602, 2147483648
    %v2604 = vmul.f32 %v2603, 1.442695
    %v2605 = vpow.pop %v2604
    %v2606 = vadd.f32 %v2605, 1.0
    %v2607 = vrcp.pop %v2606
    %v2608 = vmul.f32 1.0, %v2607
    %v2609 = vtanh.pop %v2602
    %v2610 = vmul.f32 %v2608, %v2180
    %2612 = vrot.lane.b32.xlu0 %v2609, 32
    %v2613 = vpop.permute.xlu0 %2612
    %v2615 = vmul.f32 %v2608, %v2613
    %2617 = vrot.lane.b32.xlu0 %v2615, 32
    %v2618 = vpop.permute.xlu0 %2617
    %v2620 = vadd.f32 %v2610, %v2618
    %v2621 = vtanh.pop %v2620
    %2623 = vrot.lane.b32.xlu0 %v2621, 32
    %v2624 = vpop.permute.xlu0 %2623
    %v2626 = vmul.f32 %v2608, %v2624
    %2628 = vrot.lane.b32.xlu0 %v2356, 64
    %v2629 = vpop.permute.xlu0 %2628
    %v2630 = vsel %vm226, %v2629, 0
    %2632 = vmatprep.subr.mxu0 0.0
    %2633 = vmatpush1.msra.mxu0 %v75
    %2634 = vmatprep.subr.mxu0 0.0
    %2635 = vmatpush1.msra.mxu0 %v76
    %2636 = vmatprep.subr.mxu0 0.0
    %2637 = vmatpush1.msra.mxu0 %v77
    %2638 = vmatprep.subr.mxu0 0.0
    %2639 = vmatpush1.msra.mxu0 %v78
    %2640 = vmatprep.subr.mxu0 0.0
    %2641 = vmatpush1.msra.mxu0 0.0
    %2642 = vmatprep.subr.mxu0 0.0
    %2643 = vmatpush1.msra.mxu0 0.0
    %2644 = vmatprep.subr.mxu0 0.0
    %2645 = vmatpush1.msra.mxu0 0.0
    %2646 = vmatprep.subr.mxu0 0.0
    %2647 = vmatpush1.msra.mxu0 0.0
    %2648 = vmatprep.subr.mxu0 0.0
    %2649 = vmatpush1.msra.mxu0 0.0
    %2650 = vmatprep.subr.mxu0 0.0
    %2651 = vmatpush1.msra.mxu0 0.0
    %2652 = vmatprep.subr.mxu0 0.0
    %2653 = vmatpush1.msra.mxu0 0.0
    %2654 = vmatprep.subr.mxu0 0.0
    %2655 = vmatpush1.msra.mxu0 0.0
    %2656 = vmatprep.subr.mxu0 0.0
    %2657 = vmatpush1.msra.mxu0 0.0
    %2658 = vmatprep.subr.mxu0 0.0
    %2659 = vmatpush1.msra.mxu0 0.0
    %2660 = vmatprep.subr.mxu0 0.0
    %2661 = vmatpush1.msra.mxu0 0.0
    %2662 = vmatprep.subr.mxu0 0.0
    %2663 = vmatpush1.msra.mxu0 0.0
    %2664 = vmatprep.subr.mxu0 0.0
    %2665 = vmatpush1.msra.mxu0 0.0
    %2666 = vmatprep.subr.mxu0 0.0
    %2667 = vmatpush1.msra.mxu0 0.0
    %2668 = vmatprep.subr.mxu0 0.0
    %2669 = vmatpush1.msra.mxu0 0.0
    %2670 = vmatprep.subr.mxu0 0.0
    %2671 = vmatpush1.msra.mxu0 0.0
    %2672 = vmatprep.subr.mxu0 0.0
    %2673 = vmatpush1.msra.mxu0 0.0
    %2674 = vmatprep.subr.mxu0 0.0
    %2675 = vmatpush1.msra.mxu0 0.0
    %2676 = vmatprep.subr.mxu0 0.0
    %2677 = vmatpush1.msra.mxu0 0.0
    %2678 = vmatprep.subr.mxu0 0.0
    %2679 = vmatpush1.msra.mxu0 0.0
    %2680 = vmatprep.subr.mxu0 0.0
    %2681 = vmatpush1.msra.mxu0 0.0
    %2682 = vmatprep.subr.mxu0 0.0
    %2683 = vmatpush1.msra.mxu0 0.0
    %2684 = vmatprep.subr.mxu0 0.0
    %2685 = vmatpush1.msra.mxu0 0.0
    %2686 = vmatprep.subr.mxu0 0.0
    %2687 = vmatpush1.msra.mxu0 0.0
    %2688 = vmatprep.subr.mxu0 0.0
    %2689 = vmatpush1.msra.mxu0 0.0
    %2690 = vmatprep.subr.mxu0 0.0
    %2691 = vmatpush1.msra.mxu0 0.0
    %2692 = vmatprep.subr.mxu0 0.0
    %2693 = vmatpush1.msra.mxu0 0.0
    %2694 = vmatprep.subr.mxu0 0.0
    %2695 = vmatpush1.msra.mxu0 0.0
    %2696 = vmatprep.mubr.f32.mxu0 0.0
    %2697 = vmatmul.mubr.f32.gmra.mrb[0].mxu0 %v2630
    %v2698 = vpop.f32.mrb[0].mxu0
    %v2699 = vadd.f32 0.0, %v2698
    %v2700 = vpop.f32.mrb[0].mxu0
    %2701 = vdwg.mxu0
    %2702 = vmatprep.subr.mxu0 0.0
    %2703 = vmatpush1.msra.mxu0 %v63
    %2704 = vmatprep.subr.mxu0 0.0
    %2705 = vmatpush1.msra.mxu0 %v64
    %2706 = vmatprep.subr.mxu0 0.0
    %2707 = vmatpush1.msra.mxu0 %v65
    %2708 = vmatprep.subr.mxu0 0.0
    %2709 = vmatpush1.msra.mxu0 %v66
    %2710 = vmatprep.subr.mxu0 0.0
    %2711 = vmatpush1.msra.mxu0 0.0
    %2712 = vmatprep.subr.mxu0 0.0
    %2713 = vmatpush1.msra.mxu0 0.0
    %2714 = vmatprep.subr.mxu0 0.0
    %2715 = vmatpush1.msra.mxu0 0.0
    %2716 = vmatprep.subr.mxu0 0.0
    %2717 = vmatpush1.msra.mxu0 0.0
    %2718 = vmatprep.subr.mxu0 0.0
    %2719 = vmatpush1.msra.mxu0 0.0
    %2720 = vmatprep.subr.mxu0 0.0
    %2721 = vmatpush1.msra.mxu0 0.0
    %2722 = vmatprep.subr.mxu0 0.0
    %2723 = vmatpush1.msra.mxu0 0.0
    %2724 = vmatprep.subr.mxu0 0.0
    %2725 = vmatpush1.msra.mxu0 0.0
    %2726 = vmatprep.subr.mxu0 0.0
    %2727 = vmatpush1.msra.mxu0 0.0
    %2728 = vmatprep.subr.mxu0 0.0
    %2729 = vmatpush1.msra.mxu0 0.0
    %2730 = vmatprep.subr.mxu0 0.0
    %2731 = vmatpush1.msra.mxu0 0.0
    %2732 = vmatprep.subr.mxu0 0.0
    %2733 = vmatpush1.msra.mxu0 0.0
    %2734 = vmatprep.subr.mxu0 0.0
    %2735 = vmatpush1.msra.mxu0 0.0
    %2736 = vmatprep.subr.mxu0 0.0
    %2737 = vmatpush1.msra.mxu0 0.0
    %2738 = vmatprep.subr.mxu0 0.0
    %2739 = vmatpush1.msra.mxu0 0.0
    %2740 = vmatprep.subr.mxu0 0.0
    %2741 = vmatpush1.msra.mxu0 0.0
    %2742 = vmatprep.subr.mxu0 0.0
    %2743 = vmatpush1.msra.mxu0 0.0
    %2744 = vmatprep.subr.mxu0 0.0
    %2745 = vmatpush1.msra.mxu0 0.0
    %2746 = vmatprep.subr.mxu0 0.0
    %2747 = vmatpush1.msra.mxu0 0.0
    %2748 = vmatprep.subr.mxu0 0.0
    %2749 = vmatpush1.msra.mxu0 0.0
    %2750 = vmatprep.subr.mxu0 0.0
    %2751 = vmatpush1.msra.mxu0 0.0
    %2752 = vmatprep.subr.mxu0 0.0
    %2753 = vmatpush1.msra.mxu0 0.0
    %2754 = vmatprep.subr.mxu0 0.0
    %2755 = vmatpush1.msra.mxu0 0.0
    %2756 = vmatprep.subr.mxu0 0.0
    %2757 = vmatpush1.msra.mxu0 0.0
    %2758 = vmatprep.subr.mxu0 0.0
    %2759 = vmatpush1.msra.mxu0 0.0
    %2760 = vmatprep.subr.mxu0 0.0
    %2761 = vmatpush1.msra.mxu0 0.0
    %2762 = vmatprep.subr.mxu0 0.0
    %2763 = vmatpush1.msra.mxu0 0.0
    %2764 = vmatprep.subr.mxu0 0.0
    %2765 = vmatpush1.msra.mxu0 0.0
    %2766 = vmatprep.mubr.f32.mxu0 0.0
    %2767 = vmatmul.mubr.f32.gmra.mrb[0].mxu0 %v2460
    %v2768 = vpop.f32.mrb[0].mxu0
    %v2769 = vadd.f32 %v2699, %v2768
    %v2770 = vpop.f32.mrb[0].mxu0
    %2771 = vdwg.mxu0
    %v2772 = vadd.f32 %v2769, %v1010
    %v2773 = vxor.u32 %v2772, 2147483648
    %v2774 = vmul.f32 %v2773, 1.442695
    %v2775 = vpow.pop %v2774
    %v2776 = vadd.f32 %v2775, 1.0
    %v2777 = vrcp.pop %v2776
    %v2778 = vmul.f32 1.0, %v2777
    %v2779 = vtanh.pop %v2772
    %v2780 = vmul.f32 %v2778, %v2350
    %2782 = vrot.lane.b32.xlu0 %v2779, 32
    %v2783 = vpop.permute.xlu0 %2782
    %v2785 = vmul.f32 %v2778, %v2783
    %2787 = vrot.lane.b32.xlu0 %v2785, 32
    %v2788 = vpop.permute.xlu0 %2787
    %v2790 = vadd.f32 %v2780, %v2788
    %v2791 = vtanh.pop %v2790
    %2793 = vrot.lane.b32.xlu0 %v2791, 32
    %v2794 = vpop.permute.xlu0 %2793
    %v2796 = vmul.f32 %v2778, %v2794
    %2798 = vrot.lane.b32.xlu0 %v2456, 64
    %v2799 = vpop.permute.xlu0 %2798
    %v2800 = vsel %vm226, %v2799, 0
    %2802 = vmatprep.subr.mxu0 0.0
    %2803 = vmatpush1.msra.mxu0 %v67
    %2804 = vmatprep.subr.mxu0 0.0
    %2805 = vmatpush1.msra.mxu0 %v68
    %2806 = vmatprep.subr.mxu0 0.0
    %2807 = vmatpush1.msra.mxu0 %v69
    %2808 = vmatprep.subr.mxu0 0.0
    %2809 = vmatpush1.msra.mxu0 %v70
    %2810 = vmatprep.subr.mxu0 0.0
    %2811 = vmatpush1.msra.mxu0 0.0
    %2812 = vmatprep.subr.mxu0 0.0
    %2813 = vmatpush1.msra.mxu0 0.0
    %2814 = vmatprep.subr.mxu0 0.0
    %2815 = vmatpush1.msra.mxu0 0.0
    %2816 = vmatprep.subr.mxu0 0.0
    %2817 = vmatpush1.msra.mxu0 0.0
    %2818 = vmatprep.subr.mxu0 0.0
    %2819 = vmatpush1.msra.mxu0 0.0
    %2820 = vmatprep.subr.mxu0 0.0
    %2821 = vmatpush1.msra.mxu0 0.0
    %2822 = vmatprep.subr.mxu0 0.0
    %2823 = vmatpush1.msra.mxu0 0.0
    %2824 = vmatprep.subr.mxu0 0.0
    %2825 = vmatpush1.msra.mxu0 0.0
    %2826 = vmatprep.subr.mxu0 0.0
    %2827 = vmatpush1.msra.mxu0 0.0
    %2828 = vmatprep.subr.mxu0 0.0
    %2829 = vmatpush1.msra.mxu0 0.0
    %2830 = vmatprep.subr.mxu0 0.0
    %2831 = vmatpush1.msra.mxu0 0.0
    %2832 = vmatprep.subr.mxu0 0.0
    %2833 = vmatpush1.msra.mxu0 0.0
    %2834 = vmatprep.subr.mxu0 0.0
    %2835 = vmatpush1.msra.mxu0 0.0
    %2836 = vmatprep.subr.mxu0 0.0
    %2837 = vmatpush1.msra.mxu0 0.0
    %2838 = vmatprep.subr.mxu0 0.0
    %2839 = vmatpush1.msra.mxu0 0.0
    %2840 = vmatprep.subr.mxu0 0.0
    %2841 = vmatpush1.msra.mxu0 0.0
    %2842 = vmatprep.subr.mxu0 0.0
    %2843 = vmatpush1.msra.mxu0 0.0
    %2844 = vmatprep.subr.mxu0 0.0
    %2845 = vmatpush1.msra.mxu0 0.0
    %2846 = vmatprep.subr.mxu0 0.0
    %2847 = vmatpush1.msra.mxu0 0.0
    %2848 = vmatprep.subr.mxu0 0.0
    %2849 = vmatpush1.msra.mxu0 0.0
    %2850 = vmatprep.subr.mxu0 0.0
    %2851 = vmatpush1.msra.mxu0 0.0
    %2852 = vmatprep.subr.mxu0 0.0
    %2853 = vmatpush1.msra.mxu0 0.0
    %2854 = vmatprep.subr.mxu0 0.0
    %2855 = vmatpush1.msra.mxu0 0.0
    %2856 = vmatprep.subr.mxu0 0.0
    %2857 = vmatpush1.msra.mxu0 0.0
    %2858 = vmatprep.subr.mxu0 0.0
    %2859 = vmatpush1.msra.mxu0 0.0
    %2860 = vmatprep.subr.mxu0 0.0
    %2861 = vmatpush1.msra.mxu0 0.0
    %2862 = vmatprep.subr.mxu0 0.0
    %2863 = vmatpush1.msra.mxu0 0.0
    %2864 = vmatprep.subr.mxu0 0.0
    %2865 = vmatpush1.msra.mxu0 0.0
    %2866 = vmatprep.mubr.f32.mxu0 0.0
    %2867 = vmatmul.mubr.f32.gmra.mrb[0].mxu0 %v2800
    %v2868 = vpop.f32.mrb[0].mxu0
    %v2869 = vadd.f32 0.0, %v2868
    %v2870 = vpop.f32.mrb[0].mxu0
    %2871 = vdwg.mxu0
    %v2872 = vadd.f32 %v223, %v2869
    %v2873 = vxor.u32 %v2872, 2147483648
    %v2874 = vmul.f32 %v2873, 1.442695
    %v2875 = vpow.pop %v2874
    %v2876 = vadd.f32 %v2875, 1.0
    %v2877 = vrcp.pop %v2876
    %v2878 = vmul.f32 1.0, %v2877
    %v2879 = vtanh.pop %v2872
    %v2880 = vmul.f32 %v2878, %v2450
    %2882 = vrot.lane.b32.xlu0 %v2879, 32
    %v2883 = vpop.permute.xlu0 %2882
    %v2885 = vmul.f32 %v2878, %v2883
    %2887 = vrot.lane.b32.xlu0 %v2885, 32
    %v2888 = vpop.permute.xlu0 %2887
    %v2890 = vadd.f32 %v2880, %v2888
    %v2891 = vtanh.pop %v2890
    %2893 = vrot.lane.b32.xlu0 %v2891, 32
    %v2894 = vpop.permute.xlu0 %2893
    %v2896 = vmul.f32 %v2878, %v2894
    %2898 = vrot.lane.b32.xlu0 %v2626, 64
    %v2899 = vpop.permute.xlu0 %2898
    %v2900 = vsel %vm226, %v2899, 0
    %2902 = vmatprep.subr.mxu0 0.0
    %2903 = vmatpush1.msra.mxu0 %v71
    %2904 = vmatprep.subr.mxu0 0.0
    %2905 = vmatpush1.msra.mxu0 %v72
    %2906 = vmatprep.subr.mxu0 0.0
    %2907 = vmatpush1.msra.mxu0 %v73
    %2908 = vmatprep.subr.mxu0 0.0
    %2909 = vmatpush1.msra.mxu0 %v74
    %2910 = vmatprep.subr.mxu0 0.0
    %2911 = vmatpush1.msra.mxu0 0.0
    %2912 = vmatprep.subr.mxu0 0.0
    %2913 = vmatpush1.msra.mxu0 0.0
    %2914 = vmatprep.subr.mxu0 0.0
    %2915 = vmatpush1.msra.mxu0 0.0
    %2916 = vmatprep.subr.mxu0 0.0
    %2917 = vmatpush1.msra.mxu0 0.0
    %2918 = vmatprep.subr.mxu0 0.0
    %2919 = vmatpush1.msra.mxu0 0.0
    %2920 = vmatprep.subr.mxu0 0.0
    %2921 = vmatpush1.msra.mxu0 0.0
    %2922 = vmatprep.subr.mxu0 0.0
    %2923 = vmatpush1.msra.mxu0 0.0
    %2924 = vmatprep.subr.mxu0 0.0
    %2925 = vmatpush1.msra.mxu0 0.0
    %2926 = vmatprep.subr.mxu0 0.0
    %2927 = vmatpush1.msra.mxu0 0.0
    %2928 = vmatprep.subr.mxu0 0.0
    %2929 = vmatpush1.msra.mxu0 0.0
    %2930 = vmatprep.subr.mxu0 0.0
    %2931 = vmatpush1.msra.mxu0 0.0
    %2932 = vmatprep.subr.mxu0 0.0
    %2933 = vmatpush1.msra.mxu0 0.0
    %2934 = vmatprep.subr.mxu0 0.0
    %2935 = vmatpush1.msra.mxu0 0.0
    %2936 = vmatprep.subr.mxu0 0.0
    %2937 = vmatpush1.msra.mxu0 0.0
    %2938 = vmatprep.subr.mxu0 0.0
    %2939 = vmatpush1.msra.mxu0 0.0
    %2940 = vmatprep.subr.mxu0 0.0
    %2941 = vmatpush1.msra.mxu0 0.0
    %2942 = vmatprep.subr.mxu0 0.0
    %2943 = vmatpush1.msra.mxu0 0.0
    %2944 = vmatprep.subr.mxu0 0.0
    %2945 = vmatpush1.msra.mxu0 0.0
    %2946 = vmatprep.subr.mxu0 0.0
    %2947 = vmatpush1.msra.mxu0 0.0
    %2948 = vmatprep.subr.mxu0 0.0
    %2949 = vmatpush1.msra.mxu0 0.0
    %2950 = vmatprep.subr.mxu0 0.0
    %2951 = vmatpush1.msra.mxu0 0.0
    %2952 = vmatprep.subr.mxu0 0.0
    %2953 = vmatpush1.msra.mxu0 0.0
    %2954 = vmatprep.subr.mxu0 0.0
    %2955 = vmatpush1.msra.mxu0 0.0
    %2956 = vmatprep.subr.mxu0 0.0
    %2957 = vmatpush1.msra.mxu0 0.0
    %2958 = vmatprep.subr.mxu0 0.0
    %2959 = vmatpush1.msra.mxu0 0.0
    %2960 = vmatprep.subr.mxu0 0.0
    %2961 = vmatpush1.msra.mxu0 0.0
    %2962 = vmatprep.subr.mxu0 0.0
    %2963 = vmatpush1.msra.mxu0 0.0
    %2964 = vmatprep.subr.mxu0 0.0
    %2965 = vmatpush1.msra.mxu0 0.0
    %2966 = vmatprep.mubr.f32.mxu0 0.0
    %2967 = vmatmul.mubr.f32.gmra.mrb[0].mxu0 %v2900
    %v2968 = vpop.f32.mrb[0].mxu0
    %v2969 = vadd.f32 0.0, %v2968
    %v2970 = vpop.f32.mrb[0].mxu0
    %2971 = vdwg.mxu0
    %2972 = vmatprep.subr.mxu0 0.0
    %2973 = vmatpush1.msra.mxu0 %v59
    %2974 = vmatprep.subr.mxu0 0.0
    %2975 = vmatpush1.msra.mxu0 %v60
    %2976 = vmatprep.subr.mxu0 0.0
    %2977 = vmatpush1.msra.mxu0 %v61
    %2978 = vmatprep.subr.mxu0 0.0
    %2979 = vmatpush1.msra.mxu0 %v62
    %2980 = vmatprep.subr.mxu0 0.0
    %2981 = vmatpush1.msra.mxu0 0.0
    %2982 = vmatprep.subr.mxu0 0.0
    %2983 = vmatpush1.msra.mxu0 0.0
    %2984 = vmatprep.subr.mxu0 0.0
    %2985 = vmatpush1.msra.mxu0 0.0
    %2986 = vmatprep.subr.mxu0 0.0
    %2987 = vmatpush1.msra.mxu0 0.0
    %2988 = vmatprep.subr.mxu0 0.0
    %2989 = vmatpush1.msra.mxu0 0.0
    %2990 = vmatprep.subr.mxu0 0.0
    %2991 = vmatpush1.msra.mxu0 0.0
    %2992 = vmatprep.subr.mxu0 0.0
    %2993 = vmatpush1.msra.mxu0 0.0
    %2994 = vmatprep.subr.mxu0 0.0
    %2995 = vmatpush1.msra.mxu0 0.0
    %2996 = vmatprep.subr.mxu0 0.0
    %2997 = vmatpush1.msra.mxu0 0.0
    %2998 = vmatprep.subr.mxu0 0.0
    %2999 = vmatpush1.msra.mxu0 0.0
    %3000 = vmatprep.subr.mxu0 0.0
    %3001 = vmatpush1.msra.mxu0 0.0
    %3002 = vmatprep.subr.mxu0 0.0
    %3003 = vmatpush1.msra.mxu0 0.0
    %3004 = vmatprep.subr.mxu0 0.0
    %3005 = vmatpush1.msra.mxu0 0.0
    %3006 = vmatprep.subr.mxu0 0.0
    %3007 = vmatpush1.msra.mxu0 0.0
    %3008 = vmatprep.subr.mxu0 0.0
    %3009 = vmatpush1.msra.mxu0 0.0
    %3010 = vmatprep.subr.mxu0 0.0
    %3011 = vmatpush1.msra.mxu0 0.0
    %3012 = vmatprep.subr.mxu0 0.0
    %3013 = vmatpush1.msra.mxu0 0.0
    %3014 = vmatprep.subr.mxu0 0.0
    %3015 = vmatpush1.msra.mxu0 0.0
    %3016 = vmatprep.subr.mxu0 0.0
    %3017 = vmatpush1.msra.mxu0 0.0
    %3018 = vmatprep.subr.mxu0 0.0
    %3019 = vmatpush1.msra.mxu0 0.0
    %3020 = vmatprep.subr.mxu0 0.0
    %3021 = vmatpush1.msra.mxu0 0.0
    %3022 = vmatprep.subr.mxu0 0.0
    %3023 = vmatpush1.msra.mxu0 0.0
    %3024 = vmatprep.subr.mxu0 0.0
    %3025 = vmatpush1.msra.mxu0 0.0
    %3026 = vmatprep.subr.mxu0 0.0
    %3027 = vmatpush1.msra.mxu0 0.0
    %3028 = vmatprep.subr.mxu0 0.0
    %3029 = vmatpush1.msra.mxu0 0.0
    %3030 = vmatprep.subr.mxu0 0.0
    %3031 = vmatpush1.msra.mxu0 0.0
    %3032 = vmatprep.subr.mxu0 0.0
    %3033 = vmatpush1.msra.mxu0 0.0
    %3034 = vmatprep.subr.mxu0 0.0
    %3035 = vmatpush1.msra.mxu0 0.0
    %3036 = vmatprep.mubr.f32.mxu0 0.0
    %3037 = vmatmul.mubr.f32.gmra.mrb[0].mxu0 %v2800
    %v3038 = vpop.f32.mrb[0].mxu0
    %v3039 = vadd.f32 %v2969, %v3038
    %v3040 = vpop.f32.mrb[0].mxu0
    %3041 = vdwg.mxu0
    %v3042 = vadd.f32 %v3039, %v569
    %v3043 = vxor.u32 %v3042, 2147483648
    %v3044 = vmul.f32 %v3043, 1.442695
    %v3045 = vpow.pop %v3044
    %v3046 = vadd.f32 %v3045, 1.0
    %v3047 = vrcp.pop %v3046
    %v3048 = vmul.f32 1.0, %v3047
    %v3049 = vtanh.pop %v3042
    %v3050 = vmul.f32 %v3048, %v2620
    %3052 = vrot.lane.b32.xlu0 %v3049, 32
    %v3053 = vpop.permute.xlu0 %3052
    %v3055 = vmul.f32 %v3048, %v3053
    %3057 = vrot.lane.b32.xlu0 %v3055, 32
    %v3058 = vpop.permute.xlu0 %3057
    %v3060 = vadd.f32 %v3050, %v3058
    %v3061 = vtanh.pop %v3060
    %3063 = vrot.lane.b32.xlu0 %v3061, 32
    %v3064 = vpop.permute.xlu0 %3063
    %v3066 = vmul.f32 %v3048, %v3064
    %3068 = vrot.lane.b32.xlu0 %v2796, 64
    %v3069 = vpop.permute.xlu0 %3068
    %v3070 = vsel %vm226, %v3069, 0
    %3072 = vmatprep.subr.mxu0 0.0
    %3073 = vmatpush1.msra.mxu0 %v75
    %3074 = vmatprep.subr.mxu0 0.0
    %3075 = vmatpush1.msra.mxu0 %v76
    %3076 = vmatprep.subr.mxu0 0.0
    %3077 = vmatpush1.msra.mxu0 %v77
    %3078 = vmatprep.subr.mxu0 0.0
    %3079 = vmatpush1.msra.mxu0 %v78
    %3080 = vmatprep.subr.mxu0 0.0
    %3081 = vmatpush1.msra.mxu0 0.0
    %3082 = vmatprep.subr.mxu0 0.0
    %3083 = vmatpush1.msra.mxu0 0.0
    %3084 = vmatprep.subr.mxu0 0.0
    %3085 = vmatpush1.msra.mxu0 0.0
    %3086 = vmatprep.subr.mxu0 0.0
    %3087 = vmatpush1.msra.mxu0 0.0
    %3088 = vmatprep.subr.mxu0 0.0
    %3089 = vmatpush1.msra.mxu0 0.0
    %3090 = vmatprep.subr.mxu0 0.0
    %3091 = vmatpush1.msra.mxu0 0.0
    %3092 = vmatprep.subr.mxu0 0.0
    %3093 = vmatpush1.msra.mxu0 0.0
    %3094 = vmatprep.subr.mxu0 0.0
    %3095 = vmatpush1.msra.mxu0 0.0
    %3096 = vmatprep.subr.mxu0 0.0
    %3097 = vmatpush1.msra.mxu0 0.0
    %3098 = vmatprep.subr.mxu0 0.0
    %3099 = vmatpush1.msra.mxu0 0.0
    %3100 = vmatprep.subr.mxu0 0.0
    %3101 = vmatpush1.msra.mxu0 0.0
    %3102 = vmatprep.subr.mxu0 0.0
    %3103 = vmatpush1.msra.mxu0 0.0
    %3104 = vmatprep.subr.mxu0 0.0
    %3105 = vmatpush1.msra.mxu0 0.0
    %3106 = vmatprep.subr.mxu0 0.0
    %3107 = vmatpush1.msra.mxu0 0.0
    %3108 = vmatprep.subr.mxu0 0.0
    %3109 = vmatpush1.msra.mxu0 0.0
    %3110 = vmatprep.subr.mxu0 0.0
    %3111 = vmatpush1.msra.mxu0 0.0
    %3112 = vmatprep.subr.mxu0 0.0
    %3113 = vmatpush1.msra.mxu0 0.0
    %3114 = vmatprep.subr.mxu0 0.0
    %3115 = vmatpush1.msra.mxu0 0.0
    %3116 = vmatprep.subr.mxu0 0.0
    %3117 = vmatpush1.msra.mxu0 0.0
    %3118 = vmatprep.subr.mxu0 0.0
    %3119 = vmatpush1.msra.mxu0 0.0
    %3120 = vmatprep.subr.mxu0 0.0
    %3121 = vmatpush1.msra.mxu0 0.0
    %3122 = vmatprep.subr.mxu0 0.0
    %3123 = vmatpush1.msra.mxu0 0.0
    %3124 = vmatprep.subr.mxu0 0.0
    %3125 = vmatpush1.msra.mxu0 0.0
    %3126 = vmatprep.subr.mxu0 0.0
    %3127 = vmatpush1.msra.mxu0 0.0
    %3128 = vmatprep.subr.mxu0 0.0
    %3129 = vmatpush1.msra.mxu0 0.0
    %3130 = vmatprep.subr.mxu0 0.0
    %3131 = vmatpush1.msra.mxu0 0.0
    %3132 = vmatprep.subr.mxu0 0.0
    %3133 = vmatpush1.msra.mxu0 0.0
    %3134 = vmatprep.subr.mxu0 0.0
    %3135 = vmatpush1.msra.mxu0 0.0
    %3136 = vmatprep.mubr.f32.mxu0 0.0
    %3137 = vmatmul.mubr.f32.gmra.mrb[0].mxu0 %v3070
    %v3138 = vpop.f32.mrb[0].mxu0
    %v3139 = vadd.f32 0.0, %v3138
    %v3140 = vpop.f32.mrb[0].mxu0
    %3141 = vdwg.mxu0
    %3142 = vmatprep.subr.mxu0 0.0
    %3143 = vmatpush1.msra.mxu0 %v63
    %3144 = vmatprep.subr.mxu0 0.0
    %3145 = vmatpush1.msra.mxu0 %v64
    %3146 = vmatprep.subr.mxu0 0.0
    %3147 = vmatpush1.msra.mxu0 %v65
    %3148 = vmatprep.subr.mxu0 0.0
    %3149 = vmatpush1.msra.mxu0 %v66
    %3150 = vmatprep.subr.mxu0 0.0
    %3151 = vmatpush1.msra.mxu0 0.0
    %3152 = vmatprep.subr.mxu0 0.0
    %3153 = vmatpush1.msra.mxu0 0.0
    %3154 = vmatprep.subr.mxu0 0.0
    %3155 = vmatpush1.msra.mxu0 0.0
    %3156 = vmatprep.subr.mxu0 0.0
    %3157 = vmatpush1.msra.mxu0 0.0
    %3158 = vmatprep.subr.mxu0 0.0
    %3159 = vmatpush1.msra.mxu0 0.0
    %3160 = vmatprep.subr.mxu0 0.0
    %3161 = vmatpush1.msra.mxu0 0.0
    %3162 = vmatprep.subr.mxu0 0.0
    %3163 = vmatpush1.msra.mxu0 0.0
    %3164 = vmatprep.subr.mxu0 0.0
    %3165 = vmatpush1.msra.mxu0 0.0
    %3166 = vmatprep.subr.mxu0 0.0
    %3167 = vmatpush1.msra.mxu0 0.0
    %3168 = vmatprep.subr.mxu0 0.0
    %3169 = vmatpush1.msra.mxu0 0.0
    %3170 = vmatprep.subr.mxu0 0.0
    %3171 = vmatpush1.msra.mxu0 0.0
    %3172 = vmatprep.subr.mxu0 0.0
    %3173 = vmatpush1.msra.mxu0 0.0
    %3174 = vmatprep.subr.mxu0 0.0
    %3175 = vmatpush1.msra.mxu0 0.0
    %3176 = vmatprep.subr.mxu0 0.0
    %3177 = vmatpush1.msra.mxu0 0.0
    %3178 = vmatprep.subr.mxu0 0.0
    %3179 = vmatpush1.msra.mxu0 0.0
    %3180 = vmatprep.subr.mxu0 0.0
    %3181 = vmatpush1.msra.mxu0 0.0
    %3182 = vmatprep.subr.mxu0 0.0
    %3183 = vmatpush1.msra.mxu0 0.0
    %3184 = vmatprep.subr.mxu0 0.0
    %3185 = vmatpush1.msra.mxu0 0.0
    %3186 = vmatprep.subr.mxu0 0.0
    %3187 = vmatpush1.msra.mxu0 0.0
    %3188 = vmatprep.subr.mxu0 0.0
    %3189 = vmatpush1.msra.mxu0 0.0
    %3190 = vmatprep.subr.mxu0 0.0
    %3191 = vmatpush1.msra.mxu0 0.0
    %3192 = vmatprep.subr.mxu0 0.0
    %3193 = vmatpush1.msra.mxu0 0.0
    %3194 = vmatprep.subr.mxu0 0.0
    %3195 = vmatpush1.msra.mxu0 0.0
    %3196 = vmatprep.subr.mxu0 0.0
    %3197 = vmatpush1.msra.mxu0 0.0
    %3198 = vmatprep.subr.mxu0 0.0
    %3199 = vmatpush1.msra.mxu0 0.0
    %3200 = vmatprep.subr.mxu0 0.0
    %3201 = vmatpush1.msra.mxu0 0.0
    %3202 = vmatprep.subr.mxu0 0.0
    %3203 = vmatpush1.msra.mxu0 0.0
    %3204 = vmatprep.subr.mxu0 0.0
    %3205 = vmatpush1.msra.mxu0 0.0
    %3206 = vmatprep.mubr.f32.mxu0 0.0
    %3207 = vmatmul.mubr.f32.gmra.mrb[0].mxu0 %v2900
    %v3208 = vpop.f32.mrb[0].mxu0
    %v3209 = vadd.f32 %v3139, %v3208
    %v3210 = vpop.f32.mrb[0].mxu0
    %3211 = vdwg.mxu0
    %v3212 = vadd.f32 %v3209, %v1010
    %v3213 = vxor.u32 %v3212, 2147483648
    %v3214 = vmul.f32 %v3213, 1.442695
    %v3215 = vpow.pop %v3214
    %v3216 = vadd.f32 %v3215, 1.0
    %v3217 = vrcp.pop %v3216
    %v3218 = vmul.f32 1.0, %v3217
    %v3219 = vtanh.pop %v3212
    %v3220 = vmul.f32 %v3218, %v2790
    %3222 = vrot.lane.b32.xlu0 %v3219, 32
    %v3223 = vpop.permute.xlu0 %3222
    %v3225 = vmul.f32 %v3218, %v3223
    %3227 = vrot.lane.b32.xlu0 %v3225, 32
    %v3228 = vpop.permute.xlu0 %3227
    %v3230 = vadd.f32 %v3220, %v3228
    %v3231 = vtanh.pop %v3230
    %3233 = vrot.lane.b32.xlu0 %v3231, 32
    %v3234 = vpop.permute.xlu0 %3233
    %v3236 = vmul.f32 %v3218, %v3234
    %3238 = vrot.lane.b32.xlu0 %v3066, 64
    %v3239 = vpop.permute.xlu0 %3238
    %v3240 = vsel %vm226, %v3239, 0
    %3242 = vmatprep.subr.mxu0 0.0
    %3243 = vmatpush1.msra.mxu0 %v71
    %3244 = vmatprep.subr.mxu0 0.0
    %3245 = vmatpush1.msra.mxu0 %v72
    %3246 = vmatprep.subr.mxu0 0.0
    %3247 = vmatpush1.msra.mxu0 %v73
    %3248 = vmatprep.subr.mxu0 0.0
    %3249 = vmatpush1.msra.mxu0 %v74
    %3250 = vmatprep.subr.mxu0 0.0
    %3251 = vmatpush1.msra.mxu0 0.0
    %3252 = vmatprep.subr.mxu0 0.0
    %3253 = vmatpush1.msra.mxu0 0.0
    %3254 = vmatprep.subr.mxu0 0.0
    %3255 = vmatpush1.msra.mxu0 0.0
    %3256 = vmatprep.subr.mxu0 0.0
    %3257 = vmatpush1.msra.mxu0 0.0
    %3258 = vmatprep.subr.mxu0 0.0
    %3259 = vmatpush1.msra.mxu0 0.0
    %3260 = vmatprep.subr.mxu0 0.0
    %3261 = vmatpush1.msra.mxu0 0.0
    %3262 = vmatprep.subr.mxu0 0.0
    %3263 = vmatpush1.msra.mxu0 0.0
    %3264 = vmatprep.subr.mxu0 0.0
    %3265 = vmatpush1.msra.mxu0 0.0
    %3266 = vmatprep.subr.mxu0 0.0
    %3267 = vmatpush1.msra.mxu0 0.0
    %3268 = vmatprep.subr.mxu0 0.0
    %3269 = vmatpush1.msra.mxu0 0.0
    %3270 = vmatprep.subr.mxu0 0.0
    %3271 = vmatpush1.msra.mxu0 0.0
    %3272 = vmatprep.subr.mxu0 0.0
    %3273 = vmatpush1.msra.mxu0 0.0
    %3274 = vmatprep.subr.mxu0 0.0
    %3275 = vmatpush1.msra.mxu0 0.0
    %3276 = vmatprep.subr.mxu0 0.0
    %3277 = vmatpush1.msra.mxu0 0.0
    %3278 = vmatprep.subr.mxu0 0.0
    %3279 = vmatpush1.msra.mxu0 0.0
    %3280 = vmatprep.subr.mxu0 0.0
    %3281 = vmatpush1.msra.mxu0 0.0
    %3282 = vmatprep.subr.mxu0 0.0
    %3283 = vmatpush1.msra.mxu0 0.0
    %3284 = vmatprep.subr.mxu0 0.0
    %3285 = vmatpush1.msra.mxu0 0.0
    %3286 = vmatprep.subr.mxu0 0.0
    %3287 = vmatpush1.msra.mxu0 0.0
    %3288 = vmatprep.subr.mxu0 0.0
    %3289 = vmatpush1.msra.mxu0 0.0
    %3290 = vmatprep.subr.mxu0 0.0
    %3291 = vmatpush1.msra.mxu0 0.0
    %3292 = vmatprep.subr.mxu0 0.0
    %3293 = vmatpush1.msra.mxu0 0.0
    %3294 = vmatprep.subr.mxu0 0.0
    %3295 = vmatpush1.msra.mxu0 0.0
    %3296 = vmatprep.subr.mxu0 0.0
    %3297 = vmatpush1.msra.mxu0 0.0
    %3298 = vmatprep.subr.mxu0 0.0
    %3299 = vmatpush1.msra.mxu0 0.0
    %3300 = vmatprep.subr.mxu0 0.0
    %3301 = vmatpush1.msra.mxu0 0.0
    %3302 = vmatprep.subr.mxu0 0.0
    %3303 = vmatpush1.msra.mxu0 0.0
    %3304 = vmatprep.subr.mxu0 0.0
    %3305 = vmatpush1.msra.mxu0 0.0
    %3306 = vmatprep.mubr.f32.mxu0 0.0
    %3307 = vmatmul.mubr.f32.gmra.mrb[0].mxu0 %v3240
    %v3308 = vpop.f32.mrb[0].mxu0
    %v3309 = vadd.f32 0.0, %v3308
    %v3310 = vpop.f32.mrb[0].mxu0
    %3311 = vdwg.mxu0
    %3313 = vrot.lane.b32.xlu0 %v2896, 64
    %v3314 = vpop.permute.xlu0 %3313
    %v3315 = vsel %vm226, %v3314, 0
    %3317 = vmatprep.subr.mxu0 0.0
    %3318 = vmatpush1.msra.mxu0 %v59
    %3319 = vmatprep.subr.mxu0 0.0
    %3320 = vmatpush1.msra.mxu0 %v60
    %3321 = vmatprep.subr.mxu0 0.0
    %3322 = vmatpush1.msra.mxu0 %v61
    %3323 = vmatprep.subr.mxu0 0.0
    %3324 = vmatpush1.msra.mxu0 %v62
    %3325 = vmatprep.subr.mxu0 0.0
    %3326 = vmatpush1.msra.mxu0 0.0
    %3327 = vmatprep.subr.mxu0 0.0
    %3328 = vmatpush1.msra.mxu0 0.0
    %3329 = vmatprep.subr.mxu0 0.0
    %3330 = vmatpush1.msra.mxu0 0.0
    %3331 = vmatprep.subr.mxu0 0.0
    %3332 = vmatpush1.msra.mxu0 0.0
    %3333 = vmatprep.subr.mxu0 0.0
    %3334 = vmatpush1.msra.mxu0 0.0
    %3335 = vmatprep.subr.mxu0 0.0
    %3336 = vmatpush1.msra.mxu0 0.0
    %3337 = vmatprep.subr.mxu0 0.0
    %3338 = vmatpush1.msra.mxu0 0.0
    %3339 = vmatprep.subr.mxu0 0.0
    %3340 = vmatpush1.msra.mxu0 0.0
    %3341 = vmatprep.subr.mxu0 0.0
    %3342 = vmatpush1.msra.mxu0 0.0
    %3343 = vmatprep.subr.mxu0 0.0
    %3344 = vmatpush1.msra.mxu0 0.0
    %3345 = vmatprep.subr.mxu0 0.0
    %3346 = vmatpush1.msra.mxu0 0.0
    %3347 = vmatprep.subr.mxu0 0.0
    %3348 = vmatpush1.msra.mxu0 0.0
    %3349 = vmatprep.subr.mxu0 0.0
    %3350 = vmatpush1.msra.mxu0 0.0
    %3351 = vmatprep.subr.mxu0 0.0
    %3352 = vmatpush1.msra.mxu0 0.0
    %3353 = vmatprep.subr.mxu0 0.0
    %3354 = vmatpush1.msra.mxu0 0.0
    %3355 = vmatprep.subr.mxu0 0.0
    %3356 = vmatpush1.msra.mxu0 0.0
    %3357 = vmatprep.subr.mxu0 0.0
    %3358 = vmatpush1.msra.mxu0 0.0
    %3359 = vmatprep.subr.mxu0 0.0
    %3360 = vmatpush1.msra.mxu0 0.0
    %3361 = vmatprep.subr.mxu0 0.0
    %3362 = vmatpush1.msra.mxu0 0.0
    %3363 = vmatprep.subr.mxu0 0.0
    %3364 = vmatpush1.msra.mxu0 0.0
    %3365 = vmatprep.subr.mxu0 0.0
    %3366 = vmatpush1.msra.mxu0 0.0
    %3367 = vmatprep.subr.mxu0 0.0
    %3368 = vmatpush1.msra.mxu0 0.0
    %3369 = vmatprep.subr.mxu0 0.0
    %3370 = vmatpush1.msra.mxu0 0.0
    %3371 = vmatprep.subr.mxu0 0.0
    %3372 = vmatpush1.msra.mxu0 0.0
    %3373 = vmatprep.subr.mxu0 0.0
    %3374 = vmatpush1.msra.mxu0 0.0
    %3375 = vmatprep.subr.mxu0 0.0
    %3376 = vmatpush1.msra.mxu0 0.0
    %3377 = vmatprep.subr.mxu0 0.0
    %3378 = vmatpush1.msra.mxu0 0.0
    %3379 = vmatprep.subr.mxu0 0.0
    %3380 = vmatpush1.msra.mxu0 0.0
    %3381 = vmatprep.mubr.f32.mxu0 0.0
    %3382 = vmatmul.mubr.f32.gmra.mrb[0].mxu0 %v3315
    %v3383 = vpop.f32.mrb[0].mxu0
    %v3384 = vadd.f32 %v3309, %v3383
    %v3385 = vpop.f32.mrb[0].mxu0
    %3386 = vdwg.mxu0
    %v3387 = vadd.f32 %v3384, %v569
    %v3388 = vxor.u32 %v3387, 2147483648
    %v3389 = vmul.f32 %v3388, 1.442695
    %v3390 = vpow.pop %v3389
    %v3391 = vadd.f32 %v3390, 1.0
    %v3392 = vrcp.pop %v3391
    %v3393 = vmul.f32 1.0, %v3392
    %v3394 = vtanh.pop %v3387
    %v3395 = vmul.f32 %v3393, %v3060
    %3397 = vrot.lane.b32.xlu0 %v3394, 32
    %v3398 = vpop.permute.xlu0 %3397
    %v3400 = vmul.f32 %v3393, %v3398
    %3402 = vrot.lane.b32.xlu0 %v3400, 32
    %v3403 = vpop.permute.xlu0 %3402
    %v3405 = vadd.f32 %v3395, %v3403
    %v3406 = vtanh.pop %v3405
    %3408 = vrot.lane.b32.xlu0 %v3406, 32
    %v3409 = vpop.permute.xlu0 %3408
    %v3411 = vmul.f32 %v3393, %v3409
    %3413 = vrot.lane.b32.xlu0 %v3236, 64
    %v3414 = vpop.permute.xlu0 %3413
    %v3415 = vsel %vm226, %v3414, 0
    %3417 = vmatprep.subr.mxu0 0.0
    %3418 = vmatpush1.msra.mxu0 %v75
    %3419 = vmatprep.subr.mxu0 0.0
    %3420 = vmatpush1.msra.mxu0 %v76
    %3421 = vmatprep.subr.mxu0 0.0
    %3422 = vmatpush1.msra.mxu0 %v77
    %3423 = vmatprep.subr.mxu0 0.0
    %3424 = vmatpush1.msra.mxu0 %v78
    %3425 = vmatprep.subr.mxu0 0.0
    %3426 = vmatpush1.msra.mxu0 0.0
    %3427 = vmatprep.subr.mxu0 0.0
    %3428 = vmatpush1.msra.mxu0 0.0
    %3429 = vmatprep.subr.mxu0 0.0
    %3430 = vmatpush1.msra.mxu0 0.0
    %3431 = vmatprep.subr.mxu0 0.0
    %3432 = vmatpush1.msra.mxu0 0.0
    %3433 = vmatprep.subr.mxu0 0.0
    %3434 = vmatpush1.msra.mxu0 0.0
    %3435 = vmatprep.subr.mxu0 0.0
    %3436 = vmatpush1.msra.mxu0 0.0
    %3437 = vmatprep.subr.mxu0 0.0
    %3438 = vmatpush1.msra.mxu0 0.0
    %3439 = vmatprep.subr.mxu0 0.0
    %3440 = vmatpush1.msra.mxu0 0.0
    %3441 = vmatprep.subr.mxu0 0.0
    %3442 = vmatpush1.msra.mxu0 0.0
    %3443 = vmatprep.subr.mxu0 0.0
    %3444 = vmatpush1.msra.mxu0 0.0
    %3445 = vmatprep.subr.mxu0 0.0
    %3446 = vmatpush1.msra.mxu0 0.0
    %3447 = vmatprep.subr.mxu0 0.0
    %3448 = vmatpush1.msra.mxu0 0.0
    %3449 = vmatprep.subr.mxu0 0.0
    %3450 = vmatpush1.msra.mxu0 0.0
    %3451 = vmatprep.subr.mxu0 0.0
    %3452 = vmatpush1.msra.mxu0 0.0
    %3453 = vmatprep.subr.mxu0 0.0
    %3454 = vmatpush1.msra.mxu0 0.0
    %3455 = vmatprep.subr.mxu0 0.0
    %3456 = vmatpush1.msra.mxu0 0.0
    %3457 = vmatprep.subr.mxu0 0.0
    %3458 = vmatpush1.msra.mxu0 0.0
    %3459 = vmatprep.subr.mxu0 0.0
    %3460 = vmatpush1.msra.mxu0 0.0
    %3461 = vmatprep.subr.mxu0 0.0
    %3462 = vmatpush1.msra.mxu0 0.0
    %3463 = vmatprep.subr.mxu0 0.0
    %3464 = vmatpush1.msra.mxu0 0.0
    %3465 = vmatprep.subr.mxu0 0.0
    %3466 = vmatpush1.msra.mxu0 0.0
    %3467 = vmatprep.subr.mxu0 0.0
    %3468 = vmatpush1.msra.mxu0 0.0
    %3469 = vmatprep.subr.mxu0 0.0
    %3470 = vmatpush1.msra.mxu0 0.0
    %3471 = vmatprep.subr.mxu0 0.0
    %3472 = vmatpush1.msra.mxu0 0.0
    %3473 = vmatprep.subr.mxu0 0.0
    %3474 = vmatpush1.msra.mxu0 0.0
    %3475 = vmatprep.subr.mxu0 0.0
    %3476 = vmatpush1.msra.mxu0 0.0
    %3477 = vmatprep.subr.mxu0 0.0
    %3478 = vmatpush1.msra.mxu0 0.0
    %3479 = vmatprep.subr.mxu0 0.0
    %3480 = vmatpush1.msra.mxu0 0.0
    %3481 = vmatprep.mubr.f32.mxu0 0.0
    %3482 = vmatmul.mubr.f32.gmra.mrb[0].mxu0 %v3415
    %v3483 = vpop.f32.mrb[0].mxu0
    %v3484 = vadd.f32 0.0, %v3483
    %v3485 = vpop.f32.mrb[0].mxu0
    %3486 = vdwg.mxu0
    %3487 = vmatprep.subr.mxu0 0.0
    %3488 = vmatpush1.msra.mxu0 %v63
    %3489 = vmatprep.subr.mxu0 0.0
    %3490 = vmatpush1.msra.mxu0 %v64
    %3491 = vmatprep.subr.mxu0 0.0
    %3492 = vmatpush1.msra.mxu0 %v65
    %3493 = vmatprep.subr.mxu0 0.0
    %3494 = vmatpush1.msra.mxu0 %v66
    %3495 = vmatprep.subr.mxu0 0.0
    %3496 = vmatpush1.msra.mxu0 0.0
    %3497 = vmatprep.subr.mxu0 0.0
    %3498 = vmatpush1.msra.mxu0 0.0
    %3499 = vmatprep.subr.mxu0 0.0
    %3500 = vmatpush1.msra.mxu0 0.0
    %3501 = vmatprep.subr.mxu0 0.0
    %3502 = vmatpush1.msra.mxu0 0.0
    %3503 = vmatprep.subr.mxu0 0.0
    %3504 = vmatpush1.msra.mxu0 0.0
    %3505 = vmatprep.subr.mxu0 0.0
    %3506 = vmatpush1.msra.mxu0 0.0
    %3507 = vmatprep.subr.mxu0 0.0
    %3508 = vmatpush1.msra.mxu0 0.0
    %3509 = vmatprep.subr.mxu0 0.0
    %3510 = vmatpush1.msra.mxu0 0.0
    %3511 = vmatprep.subr.mxu0 0.0
    %3512 = vmatpush1.msra.mxu0 0.0
    %3513 = vmatprep.subr.mxu0 0.0
    %3514 = vmatpush1.msra.mxu0 0.0
    %3515 = vmatprep.subr.mxu0 0.0
    %3516 = vmatpush1.msra.mxu0 0.0
    %3517 = vmatprep.subr.mxu0 0.0
    %3518 = vmatpush1.msra.mxu0 0.0
    %3519 = vmatprep.subr.mxu0 0.0
    %3520 = vmatpush1.msra.mxu0 0.0
    %3521 = vmatprep.subr.mxu0 0.0
    %3522 = vmatpush1.msra.mxu0 0.0
    %3523 = vmatprep.subr.mxu0 0.0
    %3524 = vmatpush1.msra.mxu0 0.0
    %3525 = vmatprep.subr.mxu0 0.0
    %3526 = vmatpush1.msra.mxu0 0.0
    %3527 = vmatprep.subr.mxu0 0.0
    %3528 = vmatpush1.msra.mxu0 0.0
    %3529 = vmatprep.subr.mxu0 0.0
    %3530 = vmatpush1.msra.mxu0 0.0
    %3531 = vmatprep.subr.mxu0 0.0
    %3532 = vmatpush1.msra.mxu0 0.0
    %3533 = vmatprep.subr.mxu0 0.0
    %3534 = vmatpush1.msra.mxu0 0.0
    %3535 = vmatprep.subr.mxu0 0.0
    %3536 = vmatpush1.msra.mxu0 0.0
    %3537 = vmatprep.subr.mxu0 0.0
    %3538 = vmatpush1.msra.mxu0 0.0
    %3539 = vmatprep.subr.mxu0 0.0
    %3540 = vmatpush1.msra.mxu0 0.0
    %3541 = vmatprep.subr.mxu0 0.0
    %3542 = vmatpush1.msra.mxu0 0.0
    %3543 = vmatprep.subr.mxu0 0.0
    %3544 = vmatpush1.msra.mxu0 0.0
    %3545 = vmatprep.subr.mxu0 0.0
    %3546 = vmatpush1.msra.mxu0 0.0
    %3547 = vmatprep.subr.mxu0 0.0
    %3548 = vmatpush1.msra.mxu0 0.0
    %3549 = vmatprep.subr.mxu0 0.0
    %3550 = vmatpush1.msra.mxu0 0.0
    %3551 = vmatprep.mubr.f32.mxu0 0.0
    %3552 = vmatmul.mubr.f32.gmra.mrb[0].mxu0 %v3240
    %v3553 = vpop.f32.mrb[0].mxu0
    %v3554 = vadd.f32 %v3484, %v3553
    %v3555 = vpop.f32.mrb[0].mxu0
    %3556 = vdwg.mxu0
    %v3557 = vadd.f32 %v3554, %v1010
    %v3558 = vxor.u32 %v3557, 2147483648
    %v3559 = vmul.f32 %v3558, 1.442695
    %v3560 = vpow.pop %v3559
    %v3561 = vadd.f32 %v3560, 1.0
    %v3562 = vrcp.pop %v3561
    %v3563 = vmul.f32 1.0, %v3562
    %v3564 = vtanh.pop %v3557
    %v3565 = vmul.f32 %v3563, %v3230
    %3567 = vrot.lane.b32.xlu0 %v3564, 32
    %v3568 = vpop.permute.xlu0 %3567
    %v3570 = vmul.f32 %v3563, %v3568
    %3572 = vrot.lane.b32.xlu0 %v3570, 32
    %v3573 = vpop.permute.xlu0 %3572
    %v3575 = vadd.f32 %v3565, %v3573
    %v3576 = vtanh.pop %v3575
    %3578 = vrot.lane.b32.xlu0 %v3576, 32
    %v3579 = vpop.permute.xlu0 %3578
    %v3581 = vmul.f32 %v3563, %v3579
    %3583 = vrot.lane.b32.xlu0 %v3581, 64
    %v3584 = vpop.permute.xlu0 %3583
    %v3585 = vsel %vm226, %v3584, 0
    %3587 = vmatprep.subr.mxu0 0.0
    %3588 = vmatpush1.msra.mxu0 %v75
    %3589 = vmatprep.subr.mxu0 0.0
    %3590 = vmatpush1.msra.mxu0 %v76
    %3591 = vmatprep.subr.mxu0 0.0
    %3592 = vmatpush1.msra.mxu0 %v77
    %3593 = vmatprep.subr.mxu0 0.0
    %3594 = vmatpush1.msra.mxu0 %v78
    %3595 = vmatprep.subr.mxu0 0.0
    %3596 = vmatpush1.msra.mxu0 0.0
    %3597 = vmatprep.subr.mxu0 0.0
    %3598 = vmatpush1.msra.mxu0 0.0
    %3599 = vmatprep.subr.mxu0 0.0
    %3600 = vmatpush1.msra.mxu0 0.0
    %3601 = vmatprep.subr.mxu0 0.0
    %3602 = vmatpush1.msra.mxu0 0.0
    %3603 = vmatprep.subr.mxu0 0.0
    %3604 = vmatpush1.msra.mxu0 0.0
    %3605 = vmatprep.subr.mxu0 0.0
    %3606 = vmatpush1.msra.mxu0 0.0
    %3607 = vmatprep.subr.mxu0 0.0
    %3608 = vmatpush1.msra.mxu0 0.0
    %3609 = vmatprep.subr.mxu0 0.0
    %3610 = vmatpush1.msra.mxu0 0.0
    %3611 = vmatprep.subr.mxu0 0.0
    %3612 = vmatpush1.msra.mxu0 0.0
    %3613 = vmatprep.subr.mxu0 0.0
    %3614 = vmatpush1.msra.mxu0 0.0
    %3615 = vmatprep.subr.mxu0 0.0
    %3616 = vmatpush1.msra.mxu0 0.0
    %3617 = vmatprep.subr.mxu0 0.0
    %3618 = vmatpush1.msra.mxu0 0.0
    %3619 = vmatprep.subr.mxu0 0.0
    %3620 = vmatpush1.msra.mxu0 0.0
    %3621 = vmatprep.subr.mxu0 0.0
    %3622 = vmatpush1.msra.mxu0 0.0
    %3623 = vmatprep.subr.mxu0 0.0
    %3624 = vmatpush1.msra.mxu0 0.0
    %3625 = vmatprep.subr.mxu0 0.0
    %3626 = vmatpush1.msra.mxu0 0.0
    %3627 = vmatprep.subr.mxu0 0.0
    %3628 = vmatpush1.msra.mxu0 0.0
    %3629 = vmatprep.subr.mxu0 0.0
    %3630 = vmatpush1.msra.mxu0 0.0
    %3631 = vmatprep.subr.mxu0 0.0
    %3632 = vmatpush1.msra.mxu0 0.0
    %3633 = vmatprep.subr.mxu0 0.0
    %3634 = vmatpush1.msra.mxu0 0.0
    %3635 = vmatprep.subr.mxu0 0.0
    %3636 = vmatpush1.msra.mxu0 0.0
    %3637 = vmatprep.subr.mxu0 0.0
    %3638 = vmatpush1.msra.mxu0 0.0
    %3639 = vmatprep.subr.mxu0 0.0
    %3640 = vmatpush1.msra.mxu0 0.0
    %3641 = vmatprep.subr.mxu0 0.0
    %3642 = vmatpush1.msra.mxu0 0.0
    %3643 = vmatprep.subr.mxu0 0.0
    %3644 = vmatpush1.msra.mxu0 0.0
    %3645 = vmatprep.subr.mxu0 0.0
    %3646 = vmatpush1.msra.mxu0 0.0
    %3647 = vmatprep.subr.mxu0 0.0
    %3648 = vmatpush1.msra.mxu0 0.0
    %3649 = vmatprep.subr.mxu0 0.0
    %3650 = vmatpush1.msra.mxu0 0.0
    %3651 = vmatprep.mubr.f32.mxu0 0.0
    %3652 = vmatmul.mubr.f32.gmra.mrb[0].mxu0 %v3585
    %v3653 = vpop.f32.mrb[0].mxu0
    %v3654 = vadd.f32 0.0, %v3653
    %v3655 = vpop.f32.mrb[0].mxu0
    %3656 = vdwg.mxu0
    %3658 = vrot.lane.b32.xlu0 %v3411, 64
    %v3659 = vpop.permute.xlu0 %3658
    %v3660 = vsel %vm226, %v3659, 0
    %3662 = vmatprep.subr.mxu0 0.0
    %3663 = vmatpush1.msra.mxu0 %v63
    %3664 = vmatprep.subr.mxu0 0.0
    %3665 = vmatpush1.msra.mxu0 %v64
    %3666 = vmatprep.subr.mxu0 0.0
    %3667 = vmatpush1.msra.mxu0 %v65
    %3668 = vmatprep.subr.mxu0 0.0
    %3669 = vmatpush1.msra.mxu0 %v66
    %3670 = vmatprep.subr.mxu0 0.0
    %3671 = vmatpush1.msra.mxu0 0.0
    %3672 = vmatprep.subr.mxu0 0.0
    %3673 = vmatpush1.msra.mxu0 0.0
    %3674 = vmatprep.subr.mxu0 0.0
    %3675 = vmatpush1.msra.mxu0 0.0
    %3676 = vmatprep.subr.mxu0 0.0
    %3677 = vmatpush1.msra.mxu0 0.0
    %3678 = vmatprep.subr.mxu0 0.0
    %3679 = vmatpush1.msra.mxu0 0.0
    %3680 = vmatprep.subr.mxu0 0.0
    %3681 = vmatpush1.msra.mxu0 0.0
    %3682 = vmatprep.subr.mxu0 0.0
    %3683 = vmatpush1.msra.mxu0 0.0
    %3684 = vmatprep.subr.mxu0 0.0
    %3685 = vmatpush1.msra.mxu0 0.0
    %3686 = vmatprep.subr.mxu0 0.0
    %3687 = vmatpush1.msra.mxu0 0.0
    %3688 = vmatprep.subr.mxu0 0.0
    %3689 = vmatpush1.msra.mxu0 0.0
    %3690 = vmatprep.subr.mxu0 0.0
    %3691 = vmatpush1.msra.mxu0 0.0
    %3692 = vmatprep.subr.mxu0 0.0
    %3693 = vmatpush1.msra.mxu0 0.0
    %3694 = vmatprep.subr.mxu0 0.0
    %3695 = vmatpush1.msra.mxu0 0.0
    %3696 = vmatprep.subr.mxu0 0.0
    %3697 = vmatpush1.msra.mxu0 0.0
    %3698 = vmatprep.subr.mxu0 0.0
    %3699 = vmatpush1.msra.mxu0 0.0
    %3700 = vmatprep.subr.mxu0 0.0
    %3701 = vmatpush1.msra.mxu0 0.0
    %3702 = vmatprep.subr.mxu0 0.0
    %3703 = vmatpush1.msra.mxu0 0.0
    %3704 = vmatprep.subr.mxu0 0.0
    %3705 = vmatpush1.msra.mxu0 0.0
    %3706 = vmatprep.subr.mxu0 0.0
    %3707 = vmatpush1.msra.mxu0 0.0
    %3708 = vmatprep.subr.mxu0 0.0
    %3709 = vmatpush1.msra.mxu0 0.0
    %3710 = vmatprep.subr.mxu0 0.0
    %3711 = vmatpush1.msra.mxu0 0.0
    %3712 = vmatprep.subr.mxu0 0.0
    %3713 = vmatpush1.msra.mxu0 0.0
    %3714 = vmatprep.subr.mxu0 0.0
    %3715 = vmatpush1.msra.mxu0 0.0
    %3716 = vmatprep.subr.mxu0 0.0
    %3717 = vmatpush1.msra.mxu0 0.0
    %3718 = vmatprep.subr.mxu0 0.0
    %3719 = vmatpush1.msra.mxu0 0.0
    %3720 = vmatprep.subr.mxu0 0.0
    %3721 = vmatpush1.msra.mxu0 0.0
    %3722 = vmatprep.subr.mxu0 0.0
    %3723 = vmatpush1.msra.mxu0 0.0
    %3724 = vmatprep.subr.mxu0 0.0
    %3725 = vmatpush1.msra.mxu0 0.0
    %3726 = vmatprep.mubr.f32.mxu0 0.0
    %3727 = vmatmul.mubr.f32.gmra.mrb[0].mxu0 %v3660
    %v3728 = vpop.f32.mrb[0].mxu0
    %v3729 = vadd.f32 %v3654, %v3728
    %v3730 = vpop.f32.mrb[0].mxu0
    %3731 = vdwg.mxu0
    %v3732 = vadd.f32 %v3729, %v1010
    %v3733 = vxor.u32 %v3732, 2147483648
    %v3734 = vmul.f32 %v3733, 1.442695
    %v3735 = vpow.pop %v3734
    %v3736 = vadd.f32 %v3735, 1.0
    %v3737 = vrcp.pop %v3736
    %v3738 = vmul.f32 1.0, %v3737
    %v3739 = vtanh.pop %v3732
    %v3740 = vmul.f32 %v3738, %v3575
    %3742 = vrot.lane.b32.xlu0 %v3739, 32
    %v3743 = vpop.permute.xlu0 %3742
    %v3745 = vmul.f32 %v3738, %v3743
    %3747 = vrot.lane.b32.xlu0 %v3745, 32
    %v3748 = vpop.permute.xlu0 %3747
    %v3750 = vadd.f32 %v3740, %v3748
    %v3751 = vtanh.pop %v3750
    %3753 = vrot.lane.b32.xlu0 %v3751, 32
    %v3754 = vpop.permute.xlu0 %3753
    %v3756 = vmul.f32 %v3738, %v3754
    %v3757 = vld [vmem:[%s10] sm:$0x1]
    %v3759 = vlaneseq
    %v3760 = vshrl.u32 %v3759, 7
    %v3761 = vsub.s32 0, %v3760
    %v3762 = vrot.slane %v3757, %v3761
    %3763 = vrot.lane.b32.xlu0 %v3762, 64
    %v3764 = vpop.permute.xlu0 %3763
    %v3766 = vmul.f32 %v3756, %v3764
    %3768 = vrot.lane.b32.xlu0 %v3766, 64
    %v3769 = vpop.permute.xlu0 %3768
    %v3771 = vsel %vm226, %v3769, 0.0
    %3772 = vadd.xlane.f32.xlu0 %v3771
    %v3773 = vpop.xlane.xlu0 %3772
    %v3774 = vld [vmem:[#allocation2] sm:$0x1]
    %v3776 = vlaneseq
    %v3777 = vshrl.u32 %v3776, 7
    %v3778 = vsub.s32 0, %v3777
    %v3779 = vrot.slane %v3774, %v3778
    %v3781 = vadd.f32 %v3773, %v3779
    %vm3782 = vcmask 7168
    %3783 = vst.msk [vmem:[%s12] sm:$0xff] %vm3782, %v3781
    // Predicated region
    $region54: #{lstm_model_forward.1} parent=1 // pred_check
      _
    $region55: #{lstm_model_forward.1} parent=1 // pred_check_branch
      %3785 = sbr.rel (0) target = $region57
    $region56: #{lstm_model_forward.1} parent=1 // pred_region
      _
    $region57: #{lstm_model_forward.1} parent=1 // pred_fallthru
      _
    // Predicated region
    $region58: #{lstm_model_forward.1} parent=1 // pred_check
      _
    $region59: #{lstm_model_forward.1} parent=1 // pred_check_branch
      %3787 = sbr.rel (0) target = $region61
    $region60: #{lstm_model_forward.1} parent=1 // pred_region
      _
    $region61: #{lstm_model_forward.1} parent=1 // pred_fallthru
      _
    %3788 = vsyncpa [#allocation4], 1

</llo_original>
